<compile_context>
chip_gen: v5e
topology: v5e:2x2
jax: 0.10.0
libtpu: 0.0.40
codegen_flags: <defaults>
</compile_context>

<pallas_src>
import functools

import jax
import jax.numpy as jnp
from jax import lax
from jax.experimental import pallas as pl
from jax.experimental.pallas import tpu as pltpu


def _round_up(x, m):
    return ((x + m - 1) // m) * m


def _vmem_block_bytes(shape, dtype):
    """Conservative VMEM footprint of one block ((sublane, lane) tile padding)."""
    shape = tuple(shape)
    if len(shape) < 2:
        shape = (1,) * (2 - len(shape)) + shape
    rows = _round_up(shape[-2], 16)
    lanes = _round_up(shape[-1], 128)
    lead = 1
    for d in shape[:-2]:
        lead *= int(d)
    return lead * rows * lanes * jnp.dtype(dtype).itemsize


# ----------------------------- Pallas kernel ------------------------------ #
def _conv_bn_act_kernel(*refs, n_phase, taps, tm, cin_p, n_m_tiles,
                        apply_relu, has_residual):
    """out = [relu]( im2col_vmem(x) @ W_fused * scale + bias [+ residual] )

    refs = (phase_0..phase_{n_phase-1}, w, scale, bias, [residual], out, [lhs])
      phase_i : (L_i, cin_p)          bf16  flattened (row-major) input phase
      w       : (T*cin_p, cout_p)     bf16  fused per-tap weights (K-concat)
      scale   : (1, cout_p)           f32   folded BN scale
      bias    : (1, cout_p)           f32   folded BN bias
      residual: (tm, cout_p)          f32/bf16 (optional)
      out     : (tm, cout_p)
      lhs     : (tm, T*cin_p)         bf16  VMEM im2col scratch (T > 1 only)
    taps: static tuple of (phase_index, row_offset), ordered like the fused W.
    """
    phase_refs = refs[:n_phase]
    w_ref = refs[n_phase]
    s_ref = refs[n_phase + 1]
    b_ref = refs[n_phase + 2]
    pos = n_phase + 3
    r_ref = None
    if has_residual:
        r_ref = refs[pos]
        pos += 1
    o_ref = refs[pos]
    pos += 1
    lhs_ref = refs[pos] if len(taps) > 1 else None

    if n_m_tiles > 1:
        row0 = pl.multiple_of(pl.program_id(1) * tm, 8)
    else:
        row0 = 0  # fully static slices for the single-tile case

    if len(taps) == 1:
        p_idx, off = taps[0]
        lhs = phase_refs[p_idx][pl.ds(row0 + off, tm), :]
        acc = jnp.dot(lhs, w_ref[...], preferred_element_type=jnp.float32)
    else:
        # VMEM-only im2col: each tap is a row-shifted slice of an already
        # resident phase; one wide-K MXU call replaces T tiny-K matmuls.
        for t, (p_idx, off) in enumerate(taps):
            lhs_ref[:, t * cin_p:(t + 1) * cin_p] = (
                phase_refs[p_idx][pl.ds(row0 + off, tm), :])
        acc = jnp.dot(lhs_ref[...], w_ref[...],
                      preferred_element_type=jnp.float32)

    out = acc * s_ref[...] + b_ref[...]
    if has_residual:
        out = out + r_ref[...].astype(jnp.float32)
    if apply_relu:
        out = jnp.maximum(out, 0.0)
    o_ref[...] = out.astype(o_ref.dtype)


# ------------------------------ JAX wrapper -------------------------------- #
def conv_bn_act(x_nhwc, w_hwio, scale, bias, *, stride, pad, residual=None,
                relu=True, out_dtype=jnp.bfloat16):
    """Fused conv(kxk, stride) + folded-BN (+residual) (+ReLU).

    x_nhwc  : (N, H, W, Cin)      (cast to bf16 internally)
    w_hwio  : (k, k, Cin_w, Cout) with Cin_w <= Cin (extra input chans are 0)
    residual: (N, Ho, Wo, Cr)     Cr <= padded Cout, added before the ReLU
    Returns (N, Ho, Wo, Cout_p) with Cout_p = Cout padded to a multiple of 16;
    the padded output channels are exactly zero.
    """
    n, h, w, cin = x_nhwc.shape
    kh, kw, cin_w, cout = w_hwio.shape
    assert kh == kw and cin_w <= cin
    k, s = kh, stride

    ho = (h + 2 * pad - k) // s + 1
    wo = (w + 2 * pad - k) // s + 1

    cin_p = _round_up(cin, 16)      # bf16 packs 16 sublanes per vreg
    cout_p = _round_up(cout, 16)    # store only (nearly) valid lanes: HBM bound

    # Flattened-output geometry: the kernel computes rows r = oy*wv + ox over a
    # "virtual" width wv >= wo; columns [wo, wv) are junk and cropped below.
    wp = _round_up(w + 2 * pad, s)            # padded width (multiple of stride)
    wv = wp // s                              # virtual output width = phase width
    m = ho * wv                               # valid flat output rows
    n_m_tiles = -(-m // 1024)
    tm = _round_up(-(-m // n_m_tiles), 8)
    m_pad = tm * n_m_tiles

    # Taps read phase rows up to r + amax*wv + bmax; size the phases so even
    # the last (possibly junk) output row stays in bounds.
    amax = (k - 1) // s
    bmax = (k - 1) // s
    rows_req = -(-(m_pad + amax * wv + bmax) // wv)
    hp = _round_up(max(h + 2 * pad, s * rows_req), s)   # padded height

    xp = jnp.pad(x_nhwc.astype(jnp.bfloat16),
                 ((0, 0), (pad, hp - h - pad), (pad, wp - w - pad),
                  (0, cin_p - cin)))

    # Polyphase decomposition: tap (ki, kj) lives in phase (ki % s, kj % s) at
    # intra-phase shift (ki // s, kj // s); a shift is just a row offset of the
    # flattened phase, so in-kernel taps are plain row slices (no HBM im2col).
    phases, phase_idx, taps = [], {}, []
    for ki in range(k):
        for kj in range(k):
            key = (ki % s, kj % s)
            if key not in phase_idx:
                ph = xp[:, key[0]::s, key[1]::s, :]
                phase_idx[key] = len(phases)
                phases.append(ph.reshape(n, -1, cin_p))
            taps.append((phase_idx[key], (ki // s) * wv + (kj // s)))

    # Fused weight: K axis is tap-major (matching the kernel's im2col layout).
    k_total = k * k * cin_p
    w_p = jnp.pad(w_hwio, ((0, 0), (0, 0), (0, cin_p - cin_w),
                           (0, cout_p - cout)))
    w_fused = w_p.reshape(k_total, cout_p).astype(jnp.bfloat16)
    s_p = jnp.pad(scale.astype(jnp.float32), (0, cout_p - cout)).reshape(1, cout_p)
    b_p = jnp.pad(bias.astype(jnp.float32), (0, cout_p - cout)).reshape(1, cout_p)

    args = list(phases) + [w_fused, s_p, b_p]
    in_specs = [pl.BlockSpec((None, ph.shape[1], cin_p), lambda i, j: (i, 0, 0))
                for ph in phases]
    in_specs += [
        pl.BlockSpec((k_total, cout_p), lambda i, j: (0, 0)),
        pl.BlockSpec((1, cout_p), lambda i, j: (0, 0)),
        pl.BlockSpec((1, cout_p), lambda i, j: (0, 0)),
    ]

    has_res = residual is not None
    res_dtype = None
    if has_res:
        r = residual
        assert r.shape[:3] == (n, ho, wo)
        res_dtype = r.dtype            # keep residual precision (no bf16 cast)
        r = jnp.pad(r, ((0, 0), (0, 0), (0, wv - wo),
                        (0, cout_p - r.shape[-1])))
        r = r.reshape(n, m, cout_p)
        r = jnp.pad(r, ((0, 0), (0, m_pad - m), (0, 0)))
        args.append(r)
        in_specs.append(pl.BlockSpec((None, tm, cout_p), lambda i, j: (i, j, 0)))

    scratch_shapes = []
    if len(taps) > 1:
        scratch_shapes.append(pltpu.VMEM((tm, k_total), jnp.bfloat16))

    # Generation-aware VMEM budget: size from what the kernel actually touches
    # (double-buffered inputs/outputs + scratch), capped by the core's capacity.
    need = 0
    for ph in phases:
        need += 2 * _vmem_block_bytes((ph.shape[1], cin_p), jnp.bfloat16)
    need += 2 * _vmem_block_bytes((k_total, cout_p), jnp.bfloat16)
    need += 4 * _vmem_block_bytes((1, cout_p), jnp.float32)
    if has_res:
        need += 2 * _vmem_block_bytes((tm, cout_p), res_dtype)
    need += 2 * _vmem_block_bytes((tm, cout_p), out_dtype)
    if len(taps) > 1:
        need += _vmem_block_bytes((tm, k_total), jnp.bfloat16)
    try:
        vmem_cap = int(pltpu.get_tpu_info().vmem_capacity_bytes)
    except Exception:  # fallback: assume the smallest (v7x per-core) capacity
        vmem_cap = 64 * 1024 * 1024
    vmem_limit = int(min(max(16 * 1024 * 1024, 2 * need + (2 << 20)),
                         int(0.6 * vmem_cap)))

    kernel = functools.partial(
        _conv_bn_act_kernel, n_phase=len(phases), taps=tuple(taps), tm=tm,
        cin_p=cin_p, n_m_tiles=n_m_tiles, apply_relu=relu, has_residual=has_res)

    out_flat = pl.pallas_call(
        kernel,
        out_shape=jax.ShapeDtypeStruct((n, m_pad, cout_p), out_dtype),
        grid=(n, n_m_tiles),
        in_specs=in_specs,
        out_specs=pl.BlockSpec((None, tm, cout_p), lambda i, j: (i, j, 0)),
        scratch_shapes=scratch_shapes,
        compiler_params=pltpu.CompilerParams(
            dimension_semantics=("parallel", "parallel"),
            vmem_limit_bytes=vmem_limit),
    )(*args)

    # drop junk rows / junk columns; keep channel padding for downstream convs
    out = out_flat[:, :m, :].reshape(n, ho, wv, cout_p)[:, :, :wo, :]
    return out


def _fold_bn(gamma, beta, mean, var, eps=1e-5):
    scale = gamma / jnp.sqrt(var + eps)
    bias = beta - mean * scale
    return scale.astype(jnp.float32), bias.astype(jnp.float32)


def init_basic_block_params(key, inplanes, planes, stride):
    """Deterministic synthetic parameters (shapes match the PyTorch module)."""
    ks = jax.random.split(key, 8)

    def conv_w(k, kh, kw, cin, cout):
        fan_in = kh * kw * cin
        return (jax.random.normal(k, (kh, kw, cin, cout), jnp.float32)
                * (1.0 / jnp.sqrt(fan_in)))

    def bn_params(k, c):
        k1, k2 = jax.random.split(k)
        gamma = 1.0 + 0.1 * jax.random.normal(k1, (c,), jnp.float32)
        beta = 0.1 * jax.random.normal(k2, (c,), jnp.float32)
        mean = 0.05 * jax.random.normal(jax.random.fold_in(k, 7), (c,), jnp.float32)
        var = jnp.abs(1.0 + 0.1 * jax.random.normal(jax.random.fold_in(k, 9),
                                                    (c,), jnp.float32))
        return _fold_bn(gamma, beta, mean, var)

    p = {}
    p["w1"] = conv_w(ks[0], 3, 3, inplanes, planes)
    p["s1"], p["b1"] = bn_params(ks[1], planes)
    p["w2"] = conv_w(ks[2], 3, 3, planes, planes)
    p["s2"], p["b2"] = bn_params(ks[3], planes)
    if stride != 1 or inplanes != planes:
        p["wd"] = conv_w(ks[4], 1, 1, inplanes, planes)
        p["sd"], p["bd"] = bn_params(ks[5], planes)
    return p


def basic_block_forward(x_nchw, params, *, inplanes, planes, stride):
    # NCHW (PyTorch interface) -> NHWC for the TPU kernels.
    x = jnp.transpose(x_nchw, (0, 2, 3, 1)).astype(jnp.float32)

    # conv1 (3x3, stride) + bn1 + relu  -> bf16, channel-padded to 16 lanes
    out = conv_bn_act(x, params["w1"], params["s1"], params["b1"],
                      stride=stride, pad=1, relu=True, out_dtype=jnp.bfloat16)

    # residual path: conv1x1+bn (downsample) or identity (kept in f32)
    if stride != 1 or inplanes != planes:
        residual = conv_bn_act(x, params["wd"], params["sd"], params["bd"],
                               stride=stride, pad=0, relu=False,
                               out_dtype=jnp.bfloat16)
    else:
        residual = x  # identity, f32; channel padding handled inside conv_bn_act

    # conv2 (3x3, stride 1) + bn2 + residual add + relu, fused in one kernel
    out = conv_bn_act(out, params["w2"], params["s2"], params["b2"],
                      stride=1, pad=1, residual=residual, relu=True,
                      out_dtype=jnp.float32)

    out = out[..., :planes]                      # drop channel padding
    return jnp.transpose(out, (0, 3, 1, 2))      # back to NCHW


def _reference_block(x_nchw, params, *, inplanes, planes, stride):
    """Plain-XLA f32 reference for a numerical sanity check."""
    x = jnp.transpose(x_nchw, (0, 2, 3, 1)).astype(jnp.float32)

    def conv(inp, w, st, pad):
        return lax.conv_general_dilated(
            inp, w, window_strides=(st, st), padding=[(pad, pad), (pad, pad)],
            dimension_numbers=("NHWC", "HWIO", "NHWC"),
            precision=lax.Precision.HIGHEST)

    out = conv(x, params["w1"], stride, 1) * params["s1"] + params["b1"]
    out = jnp.maximum(out, 0.0)
    out = conv(out, params["w2"], 1, 1) * params["s2"] + params["b2"]
    if stride != 1 or inplanes != planes:
        resid = conv(x, params["wd"], stride, 0) * params["sd"] + params["bd"]
    else:
        resid = x
    out = jnp.maximum(out + resid, 0.0)
    return jnp.transpose(out, (0, 3, 1, 2))


if __name__ == "__main__":
    key = jax.random.PRNGKey(0)
    kx, kp = jax.random.split(key)

    # Small shapes: batch=2, inplanes=4, spatial=16x16, planes=8, stride=2
    # (exercises the stride-2 polyphase path and the downsample branch).
    N, INPLANES, H, W = 2, 4, 16, 16
    PLANES, STRIDE = 8, 2

    x = jax.random.normal(kx, (N, INPLANES, H, W), jnp.float32)
    params = init_basic_block_params(kp, INPLANES, PLANES, STRIDE)

    fwd = jax.jit(functools.partial(basic_block_forward, inplanes=INPLANES,
                                    planes=PLANES, stride=STRIDE))
    out = jax.block_until_ready(fwd(x, params))

    assert out.shape == (N, PLANES, H // STRIDE, W // STRIDE), out.shape
    assert bool(jnp.all(out >= 0.0))  # final ReLU

    # Loose-tolerance check vs. an XLA reference (kernel feeds the MXU bf16).
    ref = _reference_block(x, params, inplanes=INPLANES, planes=PLANES,
                           stride=STRIDE)
    assert bool(jnp.allclose(out, ref, rtol=0.05, atol=0.05)), \
        float(jnp.max(jnp.abs(out - ref)))

    print("KERNEL_OK")
</pallas_src>

<mosaic_0001>
module attributes {stable_mosaic.version = 11 : i64} {
  func.func @_conv_bn_act_kernel(%arg0: i32, %arg1: i32, %arg2: memref<1x90x16xbf16, #tpu.memory_space<vmem>>, %arg3: memref<1x90x16xbf16, #tpu.memory_space<vmem>>, %arg4: memref<1x90x16xbf16, #tpu.memory_space<vmem>>, %arg5: memref<1x90x16xbf16, #tpu.memory_space<vmem>>, %arg6: memref<144x16xbf16, #tpu.memory_space<vmem>>, %arg7: memref<1x16xf32, #tpu.memory_space<vmem>>, %arg8: memref<1x16xf32, #tpu.memory_space<vmem>>, %arg9: memref<1x72x16xbf16, #tpu.memory_space<vmem>>, %arg10: memref<72x144xbf16, #tpu.memory_space<vmem>>) attributes {dimension_semantics = [#tpu.dimension_semantics<parallel>, #tpu.dimension_semantics<parallel>], iteration_bounds = array<i64: 2, 1>, scalar_prefetch = 0 : i64, scratch_operands = 1 : i64, tpu.core_type = #tpu.core_type<tc>, window_params = [{transform_indices = @transform_0, window_bounds = array<i64: 1, 90, 16>}, {transform_indices = @transform_1, window_bounds = array<i64: 1, 90, 16>}, {transform_indices = @transform_2, window_bounds = array<i64: 1, 90, 16>}, {transform_indices = @transform_3, window_bounds = array<i64: 1, 90, 16>}, {pipeline_mode = #tpu.pipeline_mode<synchronous>, transform_indices = @transform_4, window_bounds = array<i64: 144, 16>}, {pipeline_mode = #tpu.pipeline_mode<synchronous>, transform_indices = @transform_5, window_bounds = array<i64: 1, 16>}, {pipeline_mode = #tpu.pipeline_mode<synchronous>, transform_indices = @transform_6, window_bounds = array<i64: 1, 16>}, {transform_indices = @transform_7, window_bounds = array<i64: 1, 72, 16>}]} {
    %c0 = arith.constant 0 : index
    %c0_0 = arith.constant 0 : index
    %c0_1 = arith.constant 0 : index
    %0 = vector.load %arg2[%c0, %c0_0, %c0_1] : memref<1x90x16xbf16, #tpu.memory_space<vmem>>, vector<1x72x16xbf16>
    %1 = vector.shape_cast %0 : vector<1x72x16xbf16> to vector<72x16xbf16>
    %c0_2 = arith.constant 0 : index
    %c0_3 = arith.constant 0 : index
    %2 = vector.load %arg10[%c0_2, %c0_3] : memref<72x144xbf16, #tpu.memory_space<vmem>>, vector<72x16xbf16>
    tpu.vector_store %arg10[%c0_2, %c0_3], %1 {strides = array<i32>} : memref<72x144xbf16, #tpu.memory_space<vmem>>, vector<72x16xbf16>,
    %c0_4 = arith.constant 0 : index
    %c0_5 = arith.constant 0 : index
    %c0_6 = arith.constant 0 : index
    %3 = vector.load %arg3[%c0_4, %c0_5, %c0_6] : memref<1x90x16xbf16, #tpu.memory_space<vmem>>, vector<1x72x16xbf16>
    %4 = vector.shape_cast %3 : vector<1x72x16xbf16> to vector<72x16xbf16>
    %c0_7 = arith.constant 0 : index
    %c16 = arith.constant 16 : index
    %5 = vector.load %arg10[%c0_7, %c16] : memref<72x144xbf16, #tpu.memory_space<vmem>>, vector<72x16xbf16>
    tpu.vector_store %arg10[%c0_7, %c16], %4 {strides = array<i32>} : memref<72x144xbf16, #tpu.memory_space<vmem>>, vector<72x16xbf16>,
    %c0_8 = arith.constant 0 : index
    %c1 = arith.constant 1 : index
    %c0_9 = arith.constant 0 : index
    %6 = vector.load %arg2[%c0_8, %c1, %c0_9] : memref<1x90x16xbf16, #tpu.memory_space<vmem>>, vector<1x72x16xbf16>
    %7 = vector.shape_cast %6 : vector<1x72x16xbf16> to vector<72x16xbf16>
    %c0_10 = arith.constant 0 : index
    %c32 = arith.constant 32 : index
    %8 = vector.load %arg10[%c0_10, %c32] : memref<72x144xbf16, #tpu.memory_space<vmem>>, vector<72x16xbf16>
    tpu.vector_store %arg10[%c0_10, %c32], %7 {strides = array<i32>} : memref<72x144xbf16, #tpu.memory_space<vmem>>, vector<72x16xbf16>,
    %c0_11 = arith.constant 0 : index
    %c0_12 = arith.constant 0 : index
    %c0_13 = arith.constant 0 : index
    %9 = vector.load %arg4[%c0_11, %c0_12, %c0_13] : memref<1x90x16xbf16, #tpu.memory_space<vmem>>, vector<1x72x16xbf16>
    %10 = vector.shape_cast %9 : vector<1x72x16xbf16> to vector<72x16xbf16>
    %c0_14 = arith.constant 0 : index
    %c48 = arith.constant 48 : index
    %11 = vector.load %arg10[%c0_14, %c48] : memref<72x144xbf16, #tpu.memory_space<vmem>>, vector<72x16xbf16>
    tpu.vector_store %arg10[%c0_14, %c48], %10 {strides = array<i32>} : memref<72x144xbf16, #tpu.memory_space<vmem>>, vector<72x16xbf16>,
    %c0_15 = arith.constant 0 : index
    %c0_16 = arith.constant 0 : index
    %c0_17 = arith.constant 0 : index
    %12 = vector.load %arg5[%c0_15, %c0_16, %c0_17] : memref<1x90x16xbf16, #tpu.memory_space<vmem>>, vector<1x72x16xbf16>
    %13 = vector.shape_cast %12 : vector<1x72x16xbf16> to vector<72x16xbf16>
    %c0_18 = arith.constant 0 : index
    %c64 = arith.constant 64 : index
    %14 = vector.load %arg10[%c0_18, %c64] : memref<72x144xbf16, #tpu.memory_space<vmem>>, vector<72x16xbf16>
    tpu.vector_store %arg10[%c0_18, %c64], %13 {strides = array<i32>} : memref<72x144xbf16, #tpu.memory_space<vmem>>, vector<72x16xbf16>,
    %c0_19 = arith.constant 0 : index
    %c1_20 = arith.constant 1 : index
    %c0_21 = arith.constant 0 : index
    %15 = vector.load %arg4[%c0_19, %c1_20, %c0_21] : memref<1x90x16xbf16, #tpu.memory_space<vmem>>, vector<1x72x16xbf16>
    %16 = vector.shape_cast %15 : vector<1x72x16xbf16> to vector<72x16xbf16>
    %c0_22 = arith.constant 0 : index
    %c80 = arith.constant 80 : index
    %17 = vector.load %arg10[%c0_22, %c80] : memref<72x144xbf16, #tpu.memory_space<vmem>>, vector<72x16xbf16>
    tpu.vector_store %arg10[%c0_22, %c80], %16 {strides = array<i32>} : memref<72x144xbf16, #tpu.memory_space<vmem>>, vector<72x16xbf16>,
    %c0_23 = arith.constant 0 : index
    %c9 = arith.constant 9 : index
    %c0_24 = arith.constant 0 : index
    %18 = vector.load %arg2[%c0_23, %c9, %c0_24] : memref<1x90x16xbf16, #tpu.memory_space<vmem>>, vector<1x72x16xbf16>
    %19 = vector.shape_cast %18 : vector<1x72x16xbf16> to vector<72x16xbf16>
    %c0_25 = arith.constant 0 : index
    %c96 = arith.constant 96 : index
    %20 = vector.load %arg10[%c0_25, %c96] : memref<72x144xbf16, #tpu.memory_space<vmem>>, vector<72x16xbf16>
    tpu.vector_store %arg10[%c0_25, %c96], %19 {strides = array<i32>} : memref<72x144xbf16, #tpu.memory_space<vmem>>, vector<72x16xbf16>,
    %c0_26 = arith.constant 0 : index
    %c9_27 = arith.constant 9 : index
    %c0_28 = arith.constant 0 : index
    %21 = vector.load %arg3[%c0_26, %c9_27, %c0_28] : memref<1x90x16xbf16, #tpu.memory_space<vmem>>, vector<1x72x16xbf16>
    %22 = vector.shape_cast %21 : vector<1x72x16xbf16> to vector<72x16xbf16>
    %c0_29 = arith.constant 0 : index
    %c112 = arith.constant 112 : index
    %23 = vector.load %arg10[%c0_29, %c112] : memref<72x144xbf16, #tpu.memory_space<vmem>>, vector<72x16xbf16>
    tpu.vector_store %arg10[%c0_29, %c112], %22 {strides = array<i32>} : memref<72x144xbf16, #tpu.memory_space<vmem>>, vector<72x16xbf16>,
    %c0_30 = arith.constant 0 : index
    %c10 = arith.constant 10 : index
    %c0_31 = arith.constant 0 : index
    %24 = vector.load %arg2[%c0_30, %c10, %c0_31] : memref<1x90x16xbf16, #tpu.memory_space<vmem>>, vector<1x72x16xbf16>
    %25 = vector.shape_cast %24 : vector<1x72x16xbf16> to vector<72x16xbf16>
    %c0_32 = arith.constant 0 : index
    %c128 = arith.constant 128 : index
    %26 = vector.load %arg10[%c0_32, %c128] : memref<72x144xbf16, #tpu.memory_space<vmem>>, vector<72x16xbf16>
    tpu.vector_store %arg10[%c0_32, %c128], %25 {strides = array<i32>} : memref<72x144xbf16, #tpu.memory_space<vmem>>, vector<72x16xbf16>,
    %c0_33 = arith.constant 0 : index
    %c0_34 = arith.constant 0 : index
    %27 = vector.load %arg10[%c0_33, %c0_34] : memref<72x144xbf16, #tpu.memory_space<vmem>>, vector<72x144xbf16>
    %c0_35 = arith.constant 0 : index
    %c0_36 = arith.constant 0 : index
    %28 = vector.load %arg6[%c0_35, %c0_36] : memref<144x16xbf16, #tpu.memory_space<vmem>>, vector<144x16xbf16>
    %cst = arith.constant dense<0.000000e+00> : vector<72x16xf32>
    %29 = tpu.matmul %27, %28, %cst {dimension_numbers = #tpu.dot_dimension_numbers<[1], [0], [0], [1], [0, 0, 1, 1], [], []>} : vector<72x144xbf16>, vector<144x16xbf16>, vector<72x16xf32> -> vector<72x16xf32>
    %c0_37 = arith.constant 0 : index
    %c0_38 = arith.constant 0 : index
    %30 = vector.load %arg7[%c0_37, %c0_38] : memref<1x16xf32, #tpu.memory_space<vmem>>, vector<1x16xf32>
    %31 = vector.broadcast %30 : vector<1x16xf32> to vector<72x16xf32>
    %32 = arith.mulf %29, %31 : vector<72x16xf32>
    %c0_39 = arith.constant 0 : index
    %c0_40 = arith.constant 0 : index
    %33 = vector.load %arg8[%c0_39, %c0_40] : memref<1x16xf32, #tpu.memory_space<vmem>>, vector<1x16xf32>
    %34 = vector.broadcast %33 : vector<1x16xf32> to vector<72x16xf32>
    %35 = arith.addf %32, %34 : vector<72x16xf32>
    %cst_41 = arith.constant 0.000000e+00 : f32
    %36 = vector.broadcast %cst_41 : f32 to vector<72x16xf32>
    %37 = arith.maximumf %35, %36 : vector<72x16xf32>
    %38 = arith.truncf %37 : vector<72x16xf32> to vector<72x16xbf16>
    %c0_42 = arith.constant 0 : index
    %c0_43 = arith.constant 0 : index
    %c0_44 = arith.constant 0 : index
    %39 = vector.load %arg9[%c0_42, %c0_43, %c0_44] : memref<1x72x16xbf16, #tpu.memory_space<vmem>>, vector<1x72x16xbf16>
    %40 = vector.shape_cast %39 : vector<1x72x16xbf16> to vector<72x16xbf16>
    %41 = vector.shape_cast %38 : vector<72x16xbf16> to vector<1x72x16xbf16>
    tpu.vector_store %arg9[%c0_42, %c0_43, %c0_44], %41 {strides = array<i32>} : memref<1x72x16xbf16, #tpu.memory_space<vmem>>, vector<1x72x16xbf16>,
    return
  }
  func.func @transform_0(%arg0: i32, %arg1: i32) -> (i32, i32, i32) {
    %c0_i32 = arith.constant 0 : i32
    %c0_i32_0 = arith.constant 0 : i32
    %c0_i32_1 = arith.constant 0 : i32
    return %arg0, %c0_i32, %c0_i32_0 : i32, i32, i32
  }
  func.func @transform_1(%arg0: i32, %arg1: i32) -> (i32, i32, i32) {
    %c0_i32 = arith.constant 0 : i32
    %c0_i32_0 = arith.constant 0 : i32
    %c0_i32_1 = arith.constant 0 : i32
    return %arg0, %c0_i32, %c0_i32_0 : i32, i32, i32
  }
  func.func @transform_2(%arg0: i32, %arg1: i32) -> (i32, i32, i32) {
    %c0_i32 = arith.constant 0 : i32
    %c0_i32_0 = arith.constant 0 : i32
    %c0_i32_1 = arith.constant 0 : i32
    return %arg0, %c0_i32, %c0_i32_0 : i32, i32, i32
  }
  func.func @transform_3(%arg0: i32, %arg1: i32) -> (i32, i32, i32) {
    %c0_i32 = arith.constant 0 : i32
    %c0_i32_0 = arith.constant 0 : i32
    %c0_i32_1 = arith.constant 0 : i32
    return %arg0, %c0_i32, %c0_i32_0 : i32, i32, i32
  }
  func.func @transform_4(%arg0: i32, %arg1: i32) -> (i32, i32) {
    %c0_i32 = arith.constant 0 : i32
    %c0_i32_0 = arith.constant 0 : i32
    %c0_i32_1 = arith.constant 0 : i32
    return %c0_i32, %c0_i32_0 : i32, i32
  }
  func.func @transform_5(%arg0: i32, %arg1: i32) -> (i32, i32) {
    %c0_i32 = arith.constant 0 : i32
    %c0_i32_0 = arith.constant 0 : i32
    %c0_i32_1 = arith.constant 0 : i32
    return %c0_i32, %c0_i32_0 : i32, i32
  }
  func.func @transform_6(%arg0: i32, %arg1: i32) -> (i32, i32) {
    %c0_i32 = arith.constant 0 : i32
    %c0_i32_0 = arith.constant 0 : i32
    %c0_i32_1 = arith.constant 0 : i32
    return %c0_i32, %c0_i32_0 : i32, i32
  }
  func.func @transform_7(%arg0: i32, %arg1: i32) -> (i32, i32, i32) {
    %c0_i32 = arith.constant 0 : i32
    %c0_i32_0 = arith.constant 0 : i32
    return %arg0, %arg1, %c0_i32 : i32, i32, i32
  }
}

module attributes {stable_mosaic.version = 11 : i64} {
  func.func @_conv_bn_act_kernel(%arg0: i32, %arg1: i32, %arg2: memref<1x64x16xbf16, #tpu.memory_space<vmem>>, %arg3: memref<16x16xbf16, #tpu.memory_space<vmem>>, %arg4: memref<1x16xf32, #tpu.memory_space<vmem>>, %arg5: memref<1x16xf32, #tpu.memory_space<vmem>>, %arg6: memref<1x64x16xbf16, #tpu.memory_space<vmem>>) attributes {dimension_semantics = [#tpu.dimension_semantics<parallel>, #tpu.dimension_semantics<parallel>], iteration_bounds = array<i64: 2, 1>, scalar_prefetch = 0 : i64, scratch_operands = 0 : i64, tpu.core_type = #tpu.core_type<tc>, window_params = [{transform_indices = @transform_0, window_bounds = array<i64: 1, 64, 16>}, {pipeline_mode = #tpu.pipeline_mode<synchronous>, transform_indices = @transform_1, window_bounds = array<i64: 16, 16>}, {pipeline_mode = #tpu.pipeline_mode<synchronous>, transform_indices = @transform_2, window_bounds = array<i64: 1, 16>}, {pipeline_mode = #tpu.pipeline_mode<synchronous>, transform_indices = @transform_3, window_bounds = array<i64: 1, 16>}, {transform_indices = @transform_4, window_bounds = array<i64: 1, 64, 16>}]} {
    %c0 = arith.constant 0 : index
    %c0_0 = arith.constant 0 : index
    %c0_1 = arith.constant 0 : index
    %0 = vector.load %arg2[%c0, %c0_0, %c0_1] : memref<1x64x16xbf16, #tpu.memory_space<vmem>>, vector<1x64x16xbf16>
    %1 = vector.shape_cast %0 : vector<1x64x16xbf16> to vector<64x16xbf16>
    %c0_2 = arith.constant 0 : index
    %c0_3 = arith.constant 0 : index
    %2 = vector.load %arg3[%c0_2, %c0_3] : memref<16x16xbf16, #tpu.memory_space<vmem>>, vector<16x16xbf16>
    %cst = arith.constant dense<0.000000e+00> : vector<64x16xf32>
    %3 = tpu.matmul %1, %2, %cst {dimension_numbers = #tpu.dot_dimension_numbers<[1], [0], [0], [1], [0, 0, 1, 1], [], []>} : vector<64x16xbf16>, vector<16x16xbf16>, vector<64x16xf32> -> vector<64x16xf32>
    %c0_4 = arith.constant 0 : index
    %c0_5 = arith.constant 0 : index
    %4 = vector.load %arg4[%c0_4, %c0_5] : memref<1x16xf32, #tpu.memory_space<vmem>>, vector<1x16xf32>
    %5 = vector.broadcast %4 : vector<1x16xf32> to vector<64x16xf32>
    %6 = arith.mulf %3, %5 : vector<64x16xf32>
    %c0_6 = arith.constant 0 : index
    %c0_7 = arith.constant 0 : index
    %7 = vector.load %arg5[%c0_6, %c0_7] : memref<1x16xf32, #tpu.memory_space<vmem>>, vector<1x16xf32>
    %8 = vector.broadcast %7 : vector<1x16xf32> to vector<64x16xf32>
    %9 = arith.addf %6, %8 : vector<64x16xf32>
    %10 = arith.truncf %9 : vector<64x16xf32> to vector<64x16xbf16>
    %c0_8 = arith.constant 0 : index
    %c0_9 = arith.constant 0 : index
    %c0_10 = arith.constant 0 : index
    %11 = vector.load %arg6[%c0_8, %c0_9, %c0_10] : memref<1x64x16xbf16, #tpu.memory_space<vmem>>, vector<1x64x16xbf16>
    %12 = vector.shape_cast %11 : vector<1x64x16xbf16> to vector<64x16xbf16>
    %13 = vector.shape_cast %10 : vector<64x16xbf16> to vector<1x64x16xbf16>
    tpu.vector_store %arg6[%c0_8, %c0_9, %c0_10], %13 {strides = array<i32>} : memref<1x64x16xbf16, #tpu.memory_space<vmem>>, vector<1x64x16xbf16>,
    return
  }
  func.func @transform_0(%arg0: i32, %arg1: i32) -> (i32, i32, i32) {
    %c0_i32 = arith.constant 0 : i32
    %c0_i32_0 = arith.constant 0 : i32
    %c0_i32_1 = arith.constant 0 : i32
    return %arg0, %c0_i32, %c0_i32_0 : i32, i32, i32
  }
  func.func @transform_1(%arg0: i32, %arg1: i32) -> (i32, i32) {
    %c0_i32 = arith.constant 0 : i32
    %c0_i32_0 = arith.constant 0 : i32
    %c0_i32_1 = arith.constant 0 : i32
    return %c0_i32, %c0_i32_0 : i32, i32
  }
  func.func @transform_2(%arg0: i32, %arg1: i32) -> (i32, i32) {
    %c0_i32 = arith.constant 0 : i32
    %c0_i32_0 = arith.constant 0 : i32
    %c0_i32_1 = arith.constant 0 : i32
    return %c0_i32, %c0_i32_0 : i32, i32
  }
  func.func @transform_3(%arg0: i32, %arg1: i32) -> (i32, i32) {
    %c0_i32 = arith.constant 0 : i32
    %c0_i32_0 = arith.constant 0 : i32
    %c0_i32_1 = arith.constant 0 : i32
    return %c0_i32, %c0_i32_0 : i32, i32
  }
  func.func @transform_4(%arg0: i32, %arg1: i32) -> (i32, i32, i32) {
    %c0_i32 = arith.constant 0 : i32
    %c0_i32_0 = arith.constant 0 : i32
    return %arg0, %arg1, %c0_i32 : i32, i32, i32
  }
}

module attributes {stable_mosaic.version = 11 : i64} {
  func.func @_conv_bn_act_kernel(%arg0: i32, %arg1: i32, %arg2: memref<1x110x16xbf16, #tpu.memory_space<vmem>>, %arg3: memref<144x16xbf16, #tpu.memory_space<vmem>>, %arg4: memref<1x16xf32, #tpu.memory_space<vmem>>, %arg5: memref<1x16xf32, #tpu.memory_space<vmem>>, %arg6: memref<1x80x16xbf16, #tpu.memory_space<vmem>>, %arg7: memref<1x80x16xf32, #tpu.memory_space<vmem>>, %arg8: memref<80x144xbf16, #tpu.memory_space<vmem>>) attributes {dimension_semantics = [#tpu.dimension_semantics<parallel>, #tpu.dimension_semantics<parallel>], iteration_bounds = array<i64: 2, 1>, scalar_prefetch = 0 : i64, scratch_operands = 1 : i64, tpu.core_type = #tpu.core_type<tc>, window_params = [{transform_indices = @transform_0, window_bounds = array<i64: 1, 110, 16>}, {pipeline_mode = #tpu.pipeline_mode<synchronous>, transform_indices = @transform_1, window_bounds = array<i64: 144, 16>}, {pipeline_mode = #tpu.pipeline_mode<synchronous>, transform_indices = @transform_2, window_bounds = array<i64: 1, 16>}, {pipeline_mode = #tpu.pipeline_mode<synchronous>, transform_indices = @transform_3, window_bounds = array<i64: 1, 16>}, {transform_indices = @transform_4, window_bounds = array<i64: 1, 80, 16>}, {transform_indices = @transform_5, window_bounds = array<i64: 1, 80, 16>}]} {
    %c0 = arith.constant 0 : index
    %c0_0 = arith.constant 0 : index
    %c0_1 = arith.constant 0 : index
    %0 = vector.load %arg2[%c0, %c0_0, %c0_1] : memref<1x110x16xbf16, #tpu.memory_space<vmem>>, vector<1x80x16xbf16>
    %1 = vector.shape_cast %0 : vector<1x80x16xbf16> to vector<80x16xbf16>
    %c0_2 = arith.constant 0 : index
    %c0_3 = arith.constant 0 : index
    %2 = vector.load %arg8[%c0_2, %c0_3] : memref<80x144xbf16, #tpu.memory_space<vmem>>, vector<80x16xbf16>
    tpu.vector_store %arg8[%c0_2, %c0_3], %1 {strides = array<i32>} : memref<80x144xbf16, #tpu.memory_space<vmem>>, vector<80x16xbf16>,
    %c0_4 = arith.constant 0 : index
    %c1 = arith.constant 1 : index
    %c0_5 = arith.constant 0 : index
    %3 = vector.load %arg2[%c0_4, %c1, %c0_5] : memref<1x110x16xbf16, #tpu.memory_space<vmem>>, vector<1x80x16xbf16>
    %4 = vector.shape_cast %3 : vector<1x80x16xbf16> to vector<80x16xbf16>
    %c0_6 = arith.constant 0 : index
    %c16 = arith.constant 16 : index
    %5 = vector.load %arg8[%c0_6, %c16] : memref<80x144xbf16, #tpu.memory_space<vmem>>, vector<80x16xbf16>
    tpu.vector_store %arg8[%c0_6, %c16], %4 {strides = array<i32>} : memref<80x144xbf16, #tpu.memory_space<vmem>>, vector<80x16xbf16>,
    %c0_7 = arith.constant 0 : index
    %c2 = arith.constant 2 : index
    %c0_8 = arith.constant 0 : index
    %6 = vector.load %arg2[%c0_7, %c2, %c0_8] : memref<1x110x16xbf16, #tpu.memory_space<vmem>>, vector<1x80x16xbf16>
    %7 = vector.shape_cast %6 : vector<1x80x16xbf16> to vector<80x16xbf16>
    %c0_9 = arith.constant 0 : index
    %c32 = arith.constant 32 : index
    %8 = vector.load %arg8[%c0_9, %c32] : memref<80x144xbf16, #tpu.memory_space<vmem>>, vector<80x16xbf16>
    tpu.vector_store %arg8[%c0_9, %c32], %7 {strides = array<i32>} : memref<80x144xbf16, #tpu.memory_space<vmem>>, vector<80x16xbf16>,
    %c0_10 = arith.constant 0 : index
    %c10 = arith.constant 10 : index
    %c0_11 = arith.constant 0 : index
    %9 = vector.load %arg2[%c0_10, %c10, %c0_11] : memref<1x110x16xbf16, #tpu.memory_space<vmem>>, vector<1x80x16xbf16>
    %10 = vector.shape_cast %9 : vector<1x80x16xbf16> to vector<80x16xbf16>
    %c0_12 = arith.constant 0 : index
    %c48 = arith.constant 48 : index
    %11 = vector.load %arg8[%c0_12, %c48] : memref<80x144xbf16, #tpu.memory_space<vmem>>, vector<80x16xbf16>
    tpu.vector_store %arg8[%c0_12, %c48], %10 {strides = array<i32>} : memref<80x144xbf16, #tpu.memory_space<vmem>>, vector<80x16xbf16>,
    %c0_13 = arith.constant 0 : index
    %c11 = arith.constant 11 : index
    %c0_14 = arith.constant 0 : index
    %12 = vector.load %arg2[%c0_13, %c11, %c0_14] : memref<1x110x16xbf16, #tpu.memory_space<vmem>>, vector<1x80x16xbf16>
    %13 = vector.shape_cast %12 : vector<1x80x16xbf16> to vector<80x16xbf16>
    %c0_15 = arith.constant 0 : index
    %c64 = arith.constant 64 : index
    %14 = vector.load %arg8[%c0_15, %c64] : memref<80x144xbf16, #tpu.memory_space<vmem>>, vector<80x16xbf16>
    tpu.vector_store %arg8[%c0_15, %c64], %13 {strides = array<i32>} : memref<80x144xbf16, #tpu.memory_space<vmem>>, vector<80x16xbf16>,
    %c0_16 = arith.constant 0 : index
    %c12 = arith.constant 12 : index
    %c0_17 = arith.constant 0 : index
    %15 = vector.load %arg2[%c0_16, %c12, %c0_17] : memref<1x110x16xbf16, #tpu.memory_space<vmem>>, vector<1x80x16xbf16>
    %16 = vector.shape_cast %15 : vector<1x80x16xbf16> to vector<80x16xbf16>
    %c0_18 = arith.constant 0 : index
    %c80 = arith.constant 80 : index
    %17 = vector.load %arg8[%c0_18, %c80] : memref<80x144xbf16, #tpu.memory_space<vmem>>, vector<80x16xbf16>
    tpu.vector_store %arg8[%c0_18, %c80], %16 {strides = array<i32>} : memref<80x144xbf16, #tpu.memory_space<vmem>>, vector<80x16xbf16>,
    %c0_19 = arith.constant 0 : index
    %c20 = arith.constant 20 : index
    %c0_20 = arith.constant 0 : index
    %18 = vector.load %arg2[%c0_19, %c20, %c0_20] : memref<1x110x16xbf16, #tpu.memory_space<vmem>>, vector<1x80x16xbf16>
    %19 = vector.shape_cast %18 : vector<1x80x16xbf16> to vector<80x16xbf16>
    %c0_21 = arith.constant 0 : index
    %c96 = arith.constant 96 : index
    %20 = vector.load %arg8[%c0_21, %c96] : memref<80x144xbf16, #tpu.memory_space<vmem>>, vector<80x16xbf16>
    tpu.vector_store %arg8[%c0_21, %c96], %19 {strides = array<i32>} : memref<80x144xbf16, #tpu.memory_space<vmem>>, vector<80x16xbf16>,
    %c0_22 = arith.constant 0 : index
    %c21 = arith.constant 21 : index
    %c0_23 = arith.constant 0 : index
    %21 = vector.load %arg2[%c0_22, %c21, %c0_23] : memref<1x110x16xbf16, #tpu.memory_space<vmem>>, vector<1x80x16xbf16>
    %22 = vector.shape_cast %21 : vector<1x80x16xbf16> to vector<80x16xbf16>
    %c0_24 = arith.constant 0 : index
    %c112 = arith.constant 112 : index
    %23 = vector.load %arg8[%c0_24, %c112] : memref<80x144xbf16, #tpu.memory_space<vmem>>, vector<80x16xbf16>
    tpu.vector_store %arg8[%c0_24, %c112], %22 {strides = array<i32>} : memref<80x144xbf16, #tpu.memory_space<vmem>>, vector<80x16xbf16>,
    %c0_25 = arith.constant 0 : index
    %c22 = arith.constant 22 : index
    %c0_26 = arith.constant 0 : index
    %24 = vector.load %arg2[%c0_25, %c22, %c0_26] : memref<1x110x16xbf16, #tpu.memory_space<vmem>>, vector<1x80x16xbf16>
    %25 = vector.shape_cast %24 : vector<1x80x16xbf16> to vector<80x16xbf16>
    %c0_27 = arith.constant 0 : index
    %c128 = arith.constant 128 : index
    %26 = vector.load %arg8[%c0_27, %c128] : memref<80x144xbf16, #tpu.memory_space<vmem>>, vector<80x16xbf16>
    tpu.vector_store %arg8[%c0_27, %c128], %25 {strides = array<i32>} : memref<80x144xbf16, #tpu.memory_space<vmem>>, vector<80x16xbf16>,
    %c0_28 = arith.constant 0 : index
    %c0_29 = arith.constant 0 : index
    %27 = vector.load %arg8[%c0_28, %c0_29] : memref<80x144xbf16, #tpu.memory_space<vmem>>, vector<80x144xbf16>
    %c0_30 = arith.constant 0 : index
    %c0_31 = arith.constant 0 : index
    %28 = vector.load %arg3[%c0_30, %c0_31] : memref<144x16xbf16, #tpu.memory_space<vmem>>, vector<144x16xbf16>
    %cst = arith.constant dense<0.000000e+00> : vector<80x16xf32>
    %29 = tpu.matmul %27, %28, %cst {dimension_numbers = #tpu.dot_dimension_numbers<[1], [0], [0], [1], [0, 0, 1, 1], [], []>} : vector<80x144xbf16>, vector<144x16xbf16>, vector<80x16xf32> -> vector<80x16xf32>
    %c0_32 = arith.constant 0 : index
    %c0_33 = arith.constant 0 : index
    %30 = vector.load %arg4[%c0_32, %c0_33] : memref<1x16xf32, #tpu.memory_space<vmem>>, vector<1x16xf32>
    %31 = vector.broadcast %30 : vector<1x16xf32> to vector<80x16xf32>
    %32 = arith.mulf %29, %31 : vector<80x16xf32>
    %c0_34 = arith.constant 0 : index
    %c0_35 = arith.constant 0 : index
    %33 = vector.load %arg5[%c0_34, %c0_35] : memref<1x16xf32, #tpu.memory_space<vmem>>, vector<1x16xf32>
    %34 = vector.broadcast %33 : vector<1x16xf32> to vector<80x16xf32>
    %35 = arith.addf %32, %34 : vector<80x16xf32>
    %c0_36 = arith.constant 0 : index
    %c0_37 = arith.constant 0 : index
    %c0_38 = arith.constant 0 : index
    %36 = vector.load %arg6[%c0_36, %c0_37, %c0_38] : memref<1x80x16xbf16, #tpu.memory_space<vmem>>, vector<1x80x16xbf16>
    %37 = vector.shape_cast %36 : vector<1x80x16xbf16> to vector<80x16xbf16>
    %38 = arith.extf %37 : vector<80x16xbf16> to vector<80x16xf32>
    %39 = arith.addf %35, %38 : vector<80x16xf32>
    %cst_39 = arith.constant 0.000000e+00 : f32
    %40 = vector.broadcast %cst_39 : f32 to vector<80x16xf32>
    %41 = arith.maximumf %39, %40 : vector<80x16xf32>
    %c0_40 = arith.constant 0 : index
    %c0_41 = arith.constant 0 : index
    %c0_42 = arith.constant 0 : index
    %42 = vector.load %arg7[%c0_40, %c0_41, %c0_42] : memref<1x80x16xf32, #tpu.memory_space<vmem>>, vector<1x80x16xf32>
    %43 = vector.shape_cast %42 : vector<1x80x16xf32> to vector<80x16xf32>
    %44 = vector.shape_cast %41 : vector<80x16xf32> to vector<1x80x16xf32>
    tpu.vector_store %arg7[%c0_40, %c0_41, %c0_42], %44 {strides = array<i32>} : memref<1x80x16xf32, #tpu.memory_space<vmem>>, vector<1x80x16xf32>,
    return
  }
  func.func @transform_0(%arg0: i32, %arg1: i32) -> (i32, i32, i32) {
    %c0_i32 = arith.constant 0 : i32
    %c0_i32_0 = arith.constant 0 : i32
    %c0_i32_1 = arith.constant 0 : i32
    return %arg0, %c0_i32, %c0_i32_0 : i32, i32, i32
  }
  func.func @transform_1(%arg0: i32, %arg1: i32) -> (i32, i32) {
    %c0_i32 = arith.constant 0 : i32
    %c0_i32_0 = arith.constant 0 : i32
    %c0_i32_1 = arith.constant 0 : i32
    return %c0_i32, %c0_i32_0 : i32, i32
  }
  func.func @transform_2(%arg0: i32, %arg1: i32) -> (i32, i32) {
    %c0_i32 = arith.constant 0 : i32
    %c0_i32_0 = arith.constant 0 : i32
    %c0_i32_1 = arith.constant 0 : i32
    return %c0_i32, %c0_i32_0 : i32, i32
  }
  func.func @transform_3(%arg0: i32, %arg1: i32) -> (i32, i32) {
    %c0_i32 = arith.constant 0 : i32
    %c0_i32_0 = arith.constant 0 : i32
    %c0_i32_1 = arith.constant 0 : i32
    return %c0_i32, %c0_i32_0 : i32, i32
  }
  func.func @transform_4(%arg0: i32, %arg1: i32) -> (i32, i32, i32) {
    %c0_i32 = arith.constant 0 : i32
    %c0_i32_0 = arith.constant 0 : i32
    return %arg0, %arg1, %c0_i32 : i32, i32, i32
  }
  func.func @transform_5(%arg0: i32, %arg1: i32) -> (i32, i32, i32) {
    %c0_i32 = arith.constant 0 : i32
    %c0_i32_0 = arith.constant 0 : i32
    return %arg0, %arg1, %c0_i32 : i32, i32, i32
  }
}

</mosaic_0001>

<llo_original>
// kernel: basic_block_forward.4
$region0: #{basic_block_forward.4}
  #allocation0 [shape = 'u32[]', space=smem, size = 0x4, offset = 0x4, fixed_abs, tag = 'smem constant byte address 0x4 - core index']
  #allocation1 [shape = 'u32[72,128]{1,0:T(1,128)}', space=vmem, size = 0x9000, scoped, tag = 'internal scratch']
  %s0 = inlined_call_operand.vmem [shape: bf16[2,64,16], index: 0, kind: input, shape index: {}]
  %s1 = inlined_call_operand.vmem [shape: bf16[16,16], index: 1, kind: input, shape index: {}]
  %s2 = inlined_call_operand.vmem [shape: f32[1,16], index: 2, kind: input, shape index: {}]
  %s3 = inlined_call_operand.vmem [shape: f32[1,16], index: 3, kind: input, shape index: {}]
  %s4 = inlined_call_operand.vmem [shape: bf16[2,64,16], index: 4, kind: output, shape index: {}]
  %s5 = sld [smem:[#allocation0]]
  $region49: #{basic_block_forward.4} parent=0
    _
  %s7 = ssub.s32 1, %s5
  %s8 = scalar_select 0, %s7, %s5
  loop: start=0, step=1, limit=4
  $region2: #{basic_block_forward.4} parent=0 // loop_pre_header
    _
  $region3: #{basic_block_forward.4} parent=0 // loop_header
    %s10 = sphi 0, %s14
    %p11 = scmp.ge.s32.totalorder %s10, 4
    %s17 = sphi 0, %s29
    %s18 = sphi 0, %s25
    %s19 = sphi 0, %s17
    %s20 = sphi 0, %s18
    %s21 = sphi 0, %s19
    %s22 = sphi 0, %s20
    %s32 = sphi 0, %s34
    %s35 = sphi 0, %s32
    %s36 = sphi 0, %s35
    %s52 = sphi 0, %s36
    %s56 = sphi 0, %s56
    %s58 = sphi 0, %s56
    %s59 = sphi 0, %s58
    %s73 = sphi 0, %s59
    %s77 = sphi 0, %s77
    %s79 = sphi 0, %s77
    %s80 = sphi 0, %s79
    %s94 = sphi 0, %s80
    %s98 = sphi 0, %s98
    %s100 = sphi 0, %s98
    %s101 = sphi 0, %s100
    %s115 = sphi 0, %s101
    %s123 = sphi 0, %s125
    %s126 = sphi 0, %s123
    %s127 = sphi 0, %s126
    %s143 = sphi 0, %s127
  $region4: #{basic_block_forward.4} parent=0 // loop_header_branch
    %13 = sbr.rel (%p11) target = $region8
  $region5: #{basic_block_forward.4} parent=0 // loop_body
    %s15 = ssub.s32 %s10, 1
    %s16 = ssub.s32 %s10, 2
    %s23 = sadd.s32 1, %s18
    %p24 = scmp.ge.s32.totalorder %s23, 1
    %s25 = scalar_select %p24, 0, %s23
    %s26 = sadd.s32 1, %s17
    %s27 = scalar_select %p24, %s26, %s17
    %p28 = scmp.ge.s32.totalorder %s27, 2
    %s29 = scalar_select %p28, 0, %s27
    %s30 = ssub.s32 %s17, %s29
    %p31 = scmp.eq.s32.totalorder %s30, 0
    %s33 = sadd.s32 %s32, 1
    %s34 = scalar_select %p31, %s32, %s33
    %p37 = pneg %p31
    %p38 = scmp.eq.s32.totalorder %s10, 1
    %p39 = por %p37, %p38
    %p40 = scmp.ne.s32.totalorder %s32, %s35
    %p41 = scmp.eq.s32.totalorder %s10, 0
    %p42 = por %p40, %p41
    %p43 = scmp.ne.s32.totalorder %s32, %s35
    %p44 = scmp.eq.s32.totalorder %s15, 1
    %p45 = por %p43, %p44
    %p46 = scmp.ne.s32.totalorder %s35, %s36
    %p47 = scmp.eq.s32.totalorder %s15, 0
    %p48 = por %p46, %p47
    %p49 = scmp.ne.s32.totalorder %s35, %s36
    %p50 = scmp.eq.s32.totalorder %s16, 1
    %p51 = por %p49, %p50
    %p53 = scmp.ne.s32.totalorder %s36, %s52
    %p54 = scmp.eq.s32.totalorder %s16, 0
    %p55 = por %p53, %p54
    %s57 = sadd.s32 %s56, 1
    %p60 = scmp.eq.s32.totalorder %s10, 1
    %p61 = scmp.ne.s32.totalorder %s56, %s58
    %p62 = scmp.eq.s32.totalorder %s10, 0
    %p63 = por %p61, %p62
    %p64 = scmp.ne.s32.totalorder %s56, %s58
    %p65 = scmp.eq.s32.totalorder %s15, 1
    %p66 = por %p64, %p65
    %p67 = scmp.ne.s32.totalorder %s58, %s59
    %p68 = scmp.eq.s32.totalorder %s15, 0
    %p69 = por %p67, %p68
    %p70 = scmp.ne.s32.totalorder %s58, %s59
    %p71 = scmp.eq.s32.totalorder %s16, 1
    %p72 = por %p70, %p71
    %p74 = scmp.ne.s32.totalorder %s59, %s73
    %p75 = scmp.eq.s32.totalorder %s16, 0
    %p76 = por %p74, %p75
    %s78 = sadd.s32 %s77, 1
    %p81 = scmp.eq.s32.totalorder %s10, 1
    %p82 = scmp.ne.s32.totalorder %s77, %s79
    %p83 = scmp.eq.s32.totalorder %s10, 0
    %p84 = por %p82, %p83
    %p85 = scmp.ne.s32.totalorder %s77, %s79
    %p86 = scmp.eq.s32.totalorder %s15, 1
    %p87 = por %p85, %p86
    %p88 = scmp.ne.s32.totalorder %s79, %s80
    %p89 = scmp.eq.s32.totalorder %s15, 0
    %p90 = por %p88, %p89
    %p91 = scmp.ne.s32.totalorder %s79, %s80
    %p92 = scmp.eq.s32.totalorder %s16, 1
    %p93 = por %p91, %p92
    %p95 = scmp.ne.s32.totalorder %s80, %s94
    %p96 = scmp.eq.s32.totalorder %s16, 0
    %p97 = por %p95, %p96
    %s99 = sadd.s32 %s98, 1
    %p102 = scmp.eq.s32.totalorder %s10, 1
    %p103 = scmp.ne.s32.totalorder %s98, %s100
    %p104 = scmp.eq.s32.totalorder %s10, 0
    %p105 = por %p103, %p104
    %p106 = scmp.ne.s32.totalorder %s98, %s100
    %p107 = scmp.eq.s32.totalorder %s15, 1
    %p108 = por %p106, %p107
    %p109 = scmp.ne.s32.totalorder %s100, %s101
    %p110 = scmp.eq.s32.totalorder %s15, 0
    %p111 = por %p109, %p110
    %p112 = scmp.ne.s32.totalorder %s100, %s101
    %p113 = scmp.eq.s32.totalorder %s16, 1
    %p114 = por %p112, %p113
    %p116 = scmp.ne.s32.totalorder %s101, %s115
    %p117 = scmp.eq.s32.totalorder %s16, 0
    %p118 = por %p116, %p117
    %s119 = ssub.s32 %s17, %s29
    %s120 = ssub.s32 %s18, %s25
    %s121 = sor.u32 %s119, %s120
    %p122 = scmp.eq.s32.totalorder %s121, 0
    %s124 = sadd.s32 %s123, 1
    %s125 = scalar_select %p122, %s123, %s124
    %p128 = pneg %p122
    %p129 = scmp.eq.s32.totalorder %s10, 1
    %p130 = por %p128, %p129
    %p131 = scmp.ne.s32.totalorder %s123, %s126
    %p132 = scmp.eq.s32.totalorder %s10, 0
    %p133 = por %p131, %p132
    %p134 = scmp.ne.s32.totalorder %s123, %s126
    %p135 = scmp.eq.s32.totalorder %s15, 1
    %p136 = por %p134, %p135
    %p137 = scmp.ne.s32.totalorder %s126, %s127
    %p138 = scmp.eq.s32.totalorder %s15, 0
    %p139 = por %p137, %p138
    %p140 = scmp.ne.s32.totalorder %s126, %s127
    %p141 = scmp.eq.s32.totalorder %s16, 1
    %p142 = por %p140, %p141
    %p144 = scmp.ne.s32.totalorder %s127, %s143
    %p145 = scmp.eq.s32.totalorder %s16, 0
    %p146 = por %p144, %p145
    %p147 = scmp.le.s32.totalorder 1, %s10
    %p148 = scmp.lt.s32.totalorder %s10, 3
    %p149 = pnand %p147, %p148
    %p150 = pneg %p149
    // Predicated region
    $region9: #{basic_block_forward.4} parent=5 // pred_check
      _
    $region10: #{basic_block_forward.4} parent=5 // pred_check_branch
      %152 = sbr.rel (%p149) target = $region12
    $region11: #{basic_block_forward.4} parent=5 // pred_region
      %s153 = ssub.s32 %s10, 1
      // Predicated region
      $region13: #{basic_block_forward.4} parent=11 // pred_check
        %p154 = pneg %p69
      $region14: #{basic_block_forward.4} parent=11 // pred_check_branch
        %156 = sbr.rel (%p154) target = $region16
      $region15: #{basic_block_forward.4} parent=11 // pred_region
        _
      $region16: #{basic_block_forward.4} parent=11 // pred_fallthru
        _
      // Predicated region
      $region17: #{basic_block_forward.4} parent=11 // pred_check
        %p157 = pneg %p90
      $region18: #{basic_block_forward.4} parent=11 // pred_check_branch
        %159 = sbr.rel (%p157) target = $region20
      $region19: #{basic_block_forward.4} parent=11 // pred_region
        _
      $region20: #{basic_block_forward.4} parent=11 // pred_fallthru
        _
      // Predicated region
      $region21: #{basic_block_forward.4} parent=11 // pred_check
        %p160 = pneg %p111
      $region22: #{basic_block_forward.4} parent=11 // pred_check_branch
        %162 = sbr.rel (%p160) target = $region24
      $region23: #{basic_block_forward.4} parent=11 // pred_region
        _
      $region24: #{basic_block_forward.4} parent=11 // pred_fallthru
        _
    $region12: #{basic_block_forward.4} parent=5 // pred_fallthru
      _
    %p163 = scmp.lt.s32.totalorder %s10, 2
    // Predicated region
    $region25: #{basic_block_forward.4} parent=5 // pred_check
      %p164 = pneg %p163
    $region26: #{basic_block_forward.4} parent=5 // pred_check_branch
      %166 = sbr.rel (%p164) target = $region28
    $region27: #{basic_block_forward.4} parent=5 // pred_region
      // Predicated region
      $region29: #{basic_block_forward.4} parent=27 // pred_check
        %p167 = pneg %p42
      $region30: #{basic_block_forward.4} parent=27 // pred_check_branch
        %169 = sbr.rel (%p167) target = $region32
      $region31: #{basic_block_forward.4} parent=27 // pred_region
        %p170 = scmp.lt.s32.totalorder %s17, 1
        %s171 = scalar_select %p170, %s17, 1
        %s172 = smul.addr %s171, 8
        %s173 = smul.addr %s172, 4
        %s174 = scalar_lea.vmem %s0, %s173
      $region32: #{basic_block_forward.4} parent=27 // pred_fallthru
        _
    $region28: #{basic_block_forward.4} parent=5 // pred_fallthru
      _
    %p175 = scmp.le.s32.totalorder 1, %s10
    %p176 = scmp.lt.s32.totalorder %s10, 3
    %p177 = pnand %p175, %p176
    %p178 = pneg %p177
    // Predicated region
    $region33: #{basic_block_forward.4} parent=5 // pred_check
      _
    $region34: #{basic_block_forward.4} parent=5 // pred_check_branch
      %180 = sbr.rel (%p177) target = $region36
    $region35: #{basic_block_forward.4} parent=5 // pred_region
      %s181 = ssub.s32 %s10, 1
      %p182 = scmp.lt.s32.totalorder %s19, 1
      %s183 = scalar_select %p182, %s19, 1
      %s184 = smul.addr %s183, 8
      %s185 = smul.addr %s184, 4
      %s186 = scalar_lea.vmem %s0, %s185
      %p187 = pneg %p48
      %p188 = pneg %p45
      %p189 = pneg %p69
      %p190 = pneg %p66
      %p191 = pneg %p90
      %p192 = pneg %p87
      %p193 = pneg %p111
      %p194 = pneg %p108
      %p195 = pneg %p139
      %p196 = pneg %p136
      %s197 = smul.u32 8, %s20
      %p198 = scmp.lt.s32.totalorder %s19, 1
      %s199 = scalar_select %p198, %s19, 1
      %p200 = scmp.lt.s32.totalorder %s197, 7
      %s201 = scalar_select %p200, %s197, 7
      %s202 = smul.addr %s199, 8
      %s203 = sadd.s32 %s201, %s202
      %s204 = smul.addr %s203, 4
      %s205 = scalar_lea.vmem %s4, %s204
      %p206 = scmp.lt.s32.totalorder %s19, 1
      %s207 = scalar_select %p206, %s19, 1
      %s208 = smul.addr %s207, 8
      %s209 = smul.addr %s208, 4
      %s210 = scalar_lea.vmem %s0, %s209
      %s211 = smul.u32 8, %s20
      %p212 = scmp.lt.s32.totalorder %s19, 1
      %s213 = scalar_select %p212, %s19, 1
      %p214 = scmp.lt.s32.totalorder %s211, 7
      %s215 = scalar_select %p214, %s211, 7
      %s216 = smul.addr %s213, 8
      %s217 = sadd.s32 %s215, %s216
      %s218 = smul.addr %s217, 4
      %s219 = scalar_lea.vmem %s4, %s218
      %s220 = smul.u32 8, %s20
      %v222 = vld [vmem:[%s210] sm:$0xf]
      %v223 = vld [vmem:[%s210 + $0x4] sm:$0xf]
      %v224 = vld [vmem:[%s210 + $0x8] sm:$0xf]
      %v225 = vld [vmem:[%s210 + $0xc] sm:$0xf]
      %v226 = vld [vmem:[%s210 + $0x10] sm:$0xf]
      %v227 = vld [vmem:[%s210 + $0x14] sm:$0xf]
      %v228 = vld [vmem:[%s210 + $0x18] sm:$0xf]
      %v229 = vld [vmem:[%s210 + $0x1c] sm:$0xf]
      %v230 = vld [vmem:[%s1] sm:$0xf]
      %v231 = vld [vmem:[%s1 + $0x4] sm:$0xf]
      %v240 = vunpack.c.l.b16 %v222
      %v241 = vunpack.c.l.b16 %v223
      %v242 = vunpack.c.l.b16 %v224
      %v243 = vunpack.c.l.b16 %v225
      %v244 = vunpack.c.l.b16 %v226
      %v245 = vunpack.c.l.b16 %v227
      %v246 = vunpack.c.l.b16 %v228
      %v247 = vunpack.c.l.b16 %v229
      %v248 = vpack.c.b16 %v241, %v240
      %v249 = vpack.c.b16 %v243, %v242
      %v250 = vpack.c.b16 %v245, %v244
      %v251 = vpack.c.b16 %v247, %v246
      %v254 = vunpack.c.l.b16 %v230
      %v255 = vunpack.c.l.b16 %v231
      %v256 = vpack.c.b16 %v255, %v254
      %vm258 = vcmask 130048
      %v260 = vsel %vm258, %v248, 0
      %v263 = vsel %vm258, %v249, 0
      %v266 = vsel %vm258, %v250, 0
      %v269 = vsel %vm258, %v251, 0
      %271 = vmatpush.bf16.msra.mxu0 0
      %272 = vmatpush.bf16.msra.mxu0 0
      %273 = vmatpush.bf16.msra.mxu0 0
      %274 = vmatpush.bf16.msra.mxu0 0
      %275 = vmatpush.bf16.msra.mxu0 0
      %276 = vmatpush.bf16.msra.mxu0 0
      %277 = vmatpush.bf16.msra.mxu0 0
      %278 = vmatpush.bf16.msra.mxu0 %v256
      %279 = vmatmul.bf16.gmra.mxu0 %v260
      %v280 = vpop.f32.mrf.mxu0
      %v281 = vadd.f32 0.0, %v280
      %v282 = vpop.f32.mrf.mxu0
      %v283 = vadd.f32 0.0, %v282
      %284 = vmatmul.bf16.gmra.mxu0 %v263
      %v285 = vpop.f32.mrf.mxu0
      %v286 = vadd.f32 0.0, %v285
      %v287 = vpop.f32.mrf.mxu0
      %v288 = vadd.f32 0.0, %v287
      %289 = vmatmul.bf16.gmra.mxu0 %v266
      %v290 = vpop.f32.mrf.mxu0
      %v291 = vadd.f32 0.0, %v290
      %v292 = vpop.f32.mrf.mxu0
      %v293 = vadd.f32 0.0, %v292
      %294 = vmatmul.bf16.gmra.mxu0 %v269
      %v295 = vpop.f32.mrf.mxu0
      %v296 = vadd.f32 0.0, %v295
      %v297 = vpop.f32.mrf.mxu0
      %v298 = vadd.f32 0.0, %v297
      %299 = vdwg.mxu0
      %v300 = vld [vmem:[%s2] sm:$0x1]
      %v302 = vperm.slane %v300, 0
      %v304 = vmul.f32 %v281, %v302
      %v305 = vmul.f32 %v283, %v302
      %v306 = vmul.f32 %v286, %v302
      %v307 = vmul.f32 %v288, %v302
      %v308 = vmul.f32 %v291, %v302
      %v309 = vmul.f32 %v293, %v302
      %v310 = vmul.f32 %v296, %v302
      %v311 = vmul.f32 %v298, %v302
      %v312 = vld [vmem:[%s3] sm:$0x1]
      %v314 = vperm.slane %v312, 0
      %v316 = vadd.f32 %v304, %v314
      %v317 = vadd.f32 %v305, %v314
      %v318 = vadd.f32 %v306, %v314
      %v319 = vadd.f32 %v307, %v314
      %v320 = vadd.f32 %v308, %v314
      %v321 = vadd.f32 %v309, %v314
      %v322 = vadd.f32 %v310, %v314
      %v323 = vadd.f32 %v311, %v314
      %v324 = vpack.c.bf16 %v316, %v316
      %v325 = vpack.c.bf16 %v317, %v317
      %v326 = vpack.c.bf16 %v318, %v318
      %v327 = vpack.c.bf16 %v319, %v319
      %v328 = vpack.c.bf16 %v320, %v320
      %v329 = vpack.c.bf16 %v321, %v321
      %v330 = vpack.c.bf16 %v322, %v322
      %v331 = vpack.c.bf16 %v323, %v323
      %vm332 = vcmask 125952
      %333 = vst.msk [vmem:[%s219] sm:$0xf] %vm332, %v324
      %334 = vst.msk [vmem:[%s219 + $0x4] sm:$0xf] %vm332, %v325
      %335 = vst.msk [vmem:[%s219 + $0x8] sm:$0xf] %vm332, %v326
      %336 = vst.msk [vmem:[%s219 + $0xc] sm:$0xf] %vm332, %v327
      %337 = vst.msk [vmem:[%s219 + $0x10] sm:$0xf] %vm332, %v328
      %338 = vst.msk [vmem:[%s219 + $0x14] sm:$0xf] %vm332, %v329
      %339 = vst.msk [vmem:[%s219 + $0x18] sm:$0xf] %vm332, %v330
      %340 = vst.msk [vmem:[%s219 + $0x1c] sm:$0xf] %vm332, %v331
      %s341 = smul.u32 8, %s20
      %p342 = scmp.lt.s32.totalorder %s19, 1
      %s343 = scalar_select %p342, %s19, 1
      %p344 = scmp.lt.s32.totalorder %s341, 7
      %s345 = scalar_select %p344, %s341, 7
      %s346 = smul.addr %s343, 8
      %s347 = sadd.s32 %s345, %s346
      %s348 = smul.addr %s347, 4
      %s349 = scalar_lea.vmem %s4, %s348
      // Predicated region
      $region37: #{basic_block_forward.4} parent=35 // pred_check
        %p350 = pneg %p136
      $region38: #{basic_block_forward.4} parent=35 // pred_check_branch
        %352 = sbr.rel (%p350) target = $region40
      $region39: #{basic_block_forward.4} parent=35 // pred_region
        %s353 = smul.u32 8, %s20
      $region40: #{basic_block_forward.4} parent=35 // pred_fallthru
        _
    $region36: #{basic_block_forward.4} parent=5 // pred_fallthru
      _
    %p354 = scmp.le.s32.totalorder 2, %s10
    // Predicated region
    $region41: #{basic_block_forward.4} parent=5 // pred_check
      %p355 = pneg %p354
    $region42: #{basic_block_forward.4} parent=5 // pred_check_branch
      %357 = sbr.rel (%p355) target = $region44
    $region43: #{basic_block_forward.4} parent=5 // pred_region
      %s358 = ssub.s32 %s10, 2
      // Predicated region
      $region45: #{basic_block_forward.4} parent=43 // pred_check
        %p359 = pneg %p142
      $region46: #{basic_block_forward.4} parent=43 // pred_check_branch
        %361 = sbr.rel (%p359) target = $region48
      $region47: #{basic_block_forward.4} parent=43 // pred_region
        %s362 = smul.u32 8, %s22
        %p363 = scmp.lt.s32.totalorder %s21, 1
        %s364 = scalar_select %p363, %s21, 1
        %p365 = scmp.lt.s32.totalorder %s362, 7
        %s366 = scalar_select %p365, %s362, 7
        %s367 = smul.addr %s364, 8
        %s368 = sadd.s32 %s366, %s367
        %s369 = smul.addr %s368, 4
        %s370 = scalar_lea.vmem %s4, %s369
      $region48: #{basic_block_forward.4} parent=43 // pred_fallthru
        _
    $region44: #{basic_block_forward.4} parent=5 // pred_fallthru
      _
  $region6: #{basic_block_forward.4} parent=0 // loop_footer
    %s14 = sadd.s32 1, %s10
  $region7: #{basic_block_forward.4} parent=0 // loop_footer_branch
    %9 = sbr.rel target = $region3
  $region8: #{basic_block_forward.4} parent=0 // loop_exit
    _

// kernel: basic_block_forward.3
$region0: #{basic_block_forward.3}
  #allocation0 [shape = 'u32[]', space=smem, size = 0x4, offset = 0x4, fixed_abs, tag = 'smem constant byte address 0x4 - core index']
  #allocation1 [shape = 'u32[72,128]{1,0:T(1,128)}', space=vmem, size = 0x9000, scoped, tag = 'internal scratch']
  #allocation2 [shape = 'bf16[72,144]{1,0:T(8,128)(2,1)}', space=vmem, size = 0x9000, scoped, tag = 'scratch operand']
  %s0 = inlined_call_operand.vmem [shape: bf16[2,90,16], index: 0, kind: input, shape index: {}]
  %s1 = inlined_call_operand.vmem [shape: bf16[2,90,16], index: 1, kind: input, shape index: {}]
  %s2 = inlined_call_operand.vmem [shape: bf16[2,90,16], index: 2, kind: input, shape index: {}]
  %s3 = inlined_call_operand.vmem [shape: bf16[2,90,16], index: 3, kind: input, shape index: {}]
  %s4 = inlined_call_operand.vmem [shape: bf16[144,16], index: 4, kind: input, shape index: {}]
  %s5 = inlined_call_operand.vmem [shape: f32[1,16], index: 5, kind: input, shape index: {}]
  %s6 = inlined_call_operand.vmem [shape: f32[1,16], index: 6, kind: input, shape index: {}]
  %s7 = inlined_call_operand.vmem [shape: bf16[2,72,16], index: 7, kind: output, shape index: {}]
  %s8 = sld [smem:[#allocation0]]
  $region61: #{basic_block_forward.3} parent=0
    _
  %s10 = ssub.s32 1, %s8
  %s11 = scalar_select 0, %s10, %s8
  loop: start=0, step=1, limit=4
  $region2: #{basic_block_forward.3} parent=0 // loop_pre_header
    _
  $region3: #{basic_block_forward.3} parent=0 // loop_header
    %s13 = sphi 0, %s17
    %p14 = scmp.ge.s32.totalorder %s13, 4
    %s20 = sphi 0, %s32
    %s21 = sphi 0, %s28
    %s22 = sphi 0, %s20
    %s23 = sphi 0, %s21
    %s24 = sphi 0, %s22
    %s25 = sphi 0, %s23
    %s35 = sphi 0, %s37
    %s38 = sphi 0, %s35
    %s39 = sphi 0, %s38
    %s55 = sphi 0, %s39
    %s61 = sphi 0, %s63
    %s64 = sphi 0, %s61
    %s65 = sphi 0, %s64
    %s81 = sphi 0, %s65
    %s87 = sphi 0, %s89
    %s90 = sphi 0, %s87
    %s91 = sphi 0, %s90
    %s107 = sphi 0, %s91
    %s113 = sphi 0, %s115
    %s116 = sphi 0, %s113
    %s117 = sphi 0, %s116
    %s133 = sphi 0, %s117
    %s137 = sphi 0, %s137
    %s139 = sphi 0, %s137
    %s140 = sphi 0, %s139
    %s154 = sphi 0, %s140
    %s158 = sphi 0, %s158
    %s160 = sphi 0, %s158
    %s161 = sphi 0, %s160
    %s175 = sphi 0, %s161
    %s179 = sphi 0, %s179
    %s181 = sphi 0, %s179
    %s182 = sphi 0, %s181
    %s196 = sphi 0, %s182
    %s204 = sphi 0, %s206
    %s207 = sphi 0, %s204
    %s208 = sphi 0, %s207
    %s224 = sphi 0, %s208
  $region4: #{basic_block_forward.3} parent=0 // loop_header_branch
    %16 = sbr.rel (%p14) target = $region8
  $region5: #{basic_block_forward.3} parent=0 // loop_body
    %s18 = ssub.s32 %s13, 1
    %s19 = ssub.s32 %s13, 2
    %s26 = sadd.s32 1, %s21
    %p27 = scmp.ge.s32.totalorder %s26, 1
    %s28 = scalar_select %p27, 0, %s26
    %s29 = sadd.s32 1, %s20
    %s30 = scalar_select %p27, %s29, %s20
    %p31 = scmp.ge.s32.totalorder %s30, 2
    %s32 = scalar_select %p31, 0, %s30
    %s33 = ssub.s32 %s20, %s32
    %p34 = scmp.eq.s32.totalorder %s33, 0
    %s36 = sadd.s32 %s35, 1
    %s37 = scalar_select %p34, %s35, %s36
    %p40 = pneg %p34
    %p41 = scmp.eq.s32.totalorder %s13, 1
    %p42 = por %p40, %p41
    %p43 = scmp.ne.s32.totalorder %s35, %s38
    %p44 = scmp.eq.s32.totalorder %s13, 0
    %p45 = por %p43, %p44
    %p46 = scmp.ne.s32.totalorder %s35, %s38
    %p47 = scmp.eq.s32.totalorder %s18, 1
    %p48 = por %p46, %p47
    %p49 = scmp.ne.s32.totalorder %s38, %s39
    %p50 = scmp.eq.s32.totalorder %s18, 0
    %p51 = por %p49, %p50
    %p52 = scmp.ne.s32.totalorder %s38, %s39
    %p53 = scmp.eq.s32.totalorder %s19, 1
    %p54 = por %p52, %p53
    %p56 = scmp.ne.s32.totalorder %s39, %s55
    %p57 = scmp.eq.s32.totalorder %s19, 0
    %p58 = por %p56, %p57
    %s59 = ssub.s32 %s20, %s32
    %p60 = scmp.eq.s32.totalorder %s59, 0
    %s62 = sadd.s32 %s61, 1
    %s63 = scalar_select %p60, %s61, %s62
    %p66 = pneg %p60
    %p67 = scmp.eq.s32.totalorder %s13, 1
    %p68 = por %p66, %p67
    %p69 = scmp.ne.s32.totalorder %s61, %s64
    %p70 = scmp.eq.s32.totalorder %s13, 0
    %p71 = por %p69, %p70
    %p72 = scmp.ne.s32.totalorder %s61, %s64
    %p73 = scmp.eq.s32.totalorder %s18, 1
    %p74 = por %p72, %p73
    %p75 = scmp.ne.s32.totalorder %s64, %s65
    %p76 = scmp.eq.s32.totalorder %s18, 0
    %p77 = por %p75, %p76
    %p78 = scmp.ne.s32.totalorder %s64, %s65
    %p79 = scmp.eq.s32.totalorder %s19, 1
    %p80 = por %p78, %p79
    %p82 = scmp.ne.s32.totalorder %s65, %s81
    %p83 = scmp.eq.s32.totalorder %s19, 0
    %p84 = por %p82, %p83
    %s85 = ssub.s32 %s20, %s32
    %p86 = scmp.eq.s32.totalorder %s85, 0
    %s88 = sadd.s32 %s87, 1
    %s89 = scalar_select %p86, %s87, %s88
    %p92 = pneg %p86
    %p93 = scmp.eq.s32.totalorder %s13, 1
    %p94 = por %p92, %p93
    %p95 = scmp.ne.s32.totalorder %s87, %s90
    %p96 = scmp.eq.s32.totalorder %s13, 0
    %p97 = por %p95, %p96
    %p98 = scmp.ne.s32.totalorder %s87, %s90
    %p99 = scmp.eq.s32.totalorder %s18, 1
    %p100 = por %p98, %p99
    %p101 = scmp.ne.s32.totalorder %s90, %s91
    %p102 = scmp.eq.s32.totalorder %s18, 0
    %p103 = por %p101, %p102
    %p104 = scmp.ne.s32.totalorder %s90, %s91
    %p105 = scmp.eq.s32.totalorder %s19, 1
    %p106 = por %p104, %p105
    %p108 = scmp.ne.s32.totalorder %s91, %s107
    %p109 = scmp.eq.s32.totalorder %s19, 0
    %p110 = por %p108, %p109
    %s111 = ssub.s32 %s20, %s32
    %p112 = scmp.eq.s32.totalorder %s111, 0
    %s114 = sadd.s32 %s113, 1
    %s115 = scalar_select %p112, %s113, %s114
    %p118 = pneg %p112
    %p119 = scmp.eq.s32.totalorder %s13, 1
    %p120 = por %p118, %p119
    %p121 = scmp.ne.s32.totalorder %s113, %s116
    %p122 = scmp.eq.s32.totalorder %s13, 0
    %p123 = por %p121, %p122
    %p124 = scmp.ne.s32.totalorder %s113, %s116
    %p125 = scmp.eq.s32.totalorder %s18, 1
    %p126 = por %p124, %p125
    %p127 = scmp.ne.s32.totalorder %s116, %s117
    %p128 = scmp.eq.s32.totalorder %s18, 0
    %p129 = por %p127, %p128
    %p130 = scmp.ne.s32.totalorder %s116, %s117
    %p131 = scmp.eq.s32.totalorder %s19, 1
    %p132 = por %p130, %p131
    %p134 = scmp.ne.s32.totalorder %s117, %s133
    %p135 = scmp.eq.s32.totalorder %s19, 0
    %p136 = por %p134, %p135
    %s138 = sadd.s32 %s137, 1
    %p141 = scmp.eq.s32.totalorder %s13, 1
    %p142 = scmp.ne.s32.totalorder %s137, %s139
    %p143 = scmp.eq.s32.totalorder %s13, 0
    %p144 = por %p142, %p143
    %p145 = scmp.ne.s32.totalorder %s137, %s139
    %p146 = scmp.eq.s32.totalorder %s18, 1
    %p147 = por %p145, %p146
    %p148 = scmp.ne.s32.totalorder %s139, %s140
    %p149 = scmp.eq.s32.totalorder %s18, 0
    %p150 = por %p148, %p149
    %p151 = scmp.ne.s32.totalorder %s139, %s140
    %p152 = scmp.eq.s32.totalorder %s19, 1
    %p153 = por %p151, %p152
    %p155 = scmp.ne.s32.totalorder %s140, %s154
    %p156 = scmp.eq.s32.totalorder %s19, 0
    %p157 = por %p155, %p156
    %s159 = sadd.s32 %s158, 1
    %p162 = scmp.eq.s32.totalorder %s13, 1
    %p163 = scmp.ne.s32.totalorder %s158, %s160
    %p164 = scmp.eq.s32.totalorder %s13, 0
    %p165 = por %p163, %p164
    %p166 = scmp.ne.s32.totalorder %s158, %s160
    %p167 = scmp.eq.s32.totalorder %s18, 1
    %p168 = por %p166, %p167
    %p169 = scmp.ne.s32.totalorder %s160, %s161
    %p170 = scmp.eq.s32.totalorder %s18, 0
    %p171 = por %p169, %p170
    %p172 = scmp.ne.s32.totalorder %s160, %s161
    %p173 = scmp.eq.s32.totalorder %s19, 1
    %p174 = por %p172, %p173
    %p176 = scmp.ne.s32.totalorder %s161, %s175
    %p177 = scmp.eq.s32.totalorder %s19, 0
    %p178 = por %p176, %p177
    %s180 = sadd.s32 %s179, 1
    %p183 = scmp.eq.s32.totalorder %s13, 1
    %p184 = scmp.ne.s32.totalorder %s179, %s181
    %p185 = scmp.eq.s32.totalorder %s13, 0
    %p186 = por %p184, %p185
    %p187 = scmp.ne.s32.totalorder %s179, %s181
    %p188 = scmp.eq.s32.totalorder %s18, 1
    %p189 = por %p187, %p188
    %p190 = scmp.ne.s32.totalorder %s181, %s182
    %p191 = scmp.eq.s32.totalorder %s18, 0
    %p192 = por %p190, %p191
    %p193 = scmp.ne.s32.totalorder %s181, %s182
    %p194 = scmp.eq.s32.totalorder %s19, 1
    %p195 = por %p193, %p194
    %p197 = scmp.ne.s32.totalorder %s182, %s196
    %p198 = scmp.eq.s32.totalorder %s19, 0
    %p199 = por %p197, %p198
    %s200 = ssub.s32 %s20, %s32
    %s201 = ssub.s32 %s21, %s28
    %s202 = sor.u32 %s200, %s201
    %p203 = scmp.eq.s32.totalorder %s202, 0
    %s205 = sadd.s32 %s204, 1
    %s206 = scalar_select %p203, %s204, %s205
    %p209 = pneg %p203
    %p210 = scmp.eq.s32.totalorder %s13, 1
    %p211 = por %p209, %p210
    %p212 = scmp.ne.s32.totalorder %s204, %s207
    %p213 = scmp.eq.s32.totalorder %s13, 0
    %p214 = por %p212, %p213
    %p215 = scmp.ne.s32.totalorder %s204, %s207
    %p216 = scmp.eq.s32.totalorder %s18, 1
    %p217 = por %p215, %p216
    %p218 = scmp.ne.s32.totalorder %s207, %s208
    %p219 = scmp.eq.s32.totalorder %s18, 0
    %p220 = por %p218, %p219
    %p221 = scmp.ne.s32.totalorder %s207, %s208
    %p222 = scmp.eq.s32.totalorder %s19, 1
    %p223 = por %p221, %p222
    %p225 = scmp.ne.s32.totalorder %s208, %s224
    %p226 = scmp.eq.s32.totalorder %s19, 0
    %p227 = por %p225, %p226
    %p228 = scmp.le.s32.totalorder 1, %s13
    %p229 = scmp.lt.s32.totalorder %s13, 3
    %p230 = pnand %p228, %p229
    %p231 = pneg %p230
    // Predicated region
    $region9: #{basic_block_forward.3} parent=5 // pred_check
      _
    $region10: #{basic_block_forward.3} parent=5 // pred_check_branch
      %233 = sbr.rel (%p230) target = $region12
    $region11: #{basic_block_forward.3} parent=5 // pred_region
      %s234 = ssub.s32 %s13, 1
      // Predicated region
      $region13: #{basic_block_forward.3} parent=11 // pred_check
        %p235 = pneg %p150
      $region14: #{basic_block_forward.3} parent=11 // pred_check_branch
        %237 = sbr.rel (%p235) target = $region16
      $region15: #{basic_block_forward.3} parent=11 // pred_region
        _
      $region16: #{basic_block_forward.3} parent=11 // pred_fallthru
        _
      // Predicated region
      $region17: #{basic_block_forward.3} parent=11 // pred_check
        %p238 = pneg %p171
      $region18: #{basic_block_forward.3} parent=11 // pred_check_branch
        %240 = sbr.rel (%p238) target = $region20
      $region19: #{basic_block_forward.3} parent=11 // pred_region
        _
      $region20: #{basic_block_forward.3} parent=11 // pred_fallthru
        _
      // Predicated region
      $region21: #{basic_block_forward.3} parent=11 // pred_check
        %p241 = pneg %p192
      $region22: #{basic_block_forward.3} parent=11 // pred_check_branch
        %243 = sbr.rel (%p241) target = $region24
      $region23: #{basic_block_forward.3} parent=11 // pred_region
        _
      $region24: #{basic_block_forward.3} parent=11 // pred_fallthru
        _
    $region12: #{basic_block_forward.3} parent=5 // pred_fallthru
      _
    %p244 = scmp.lt.s32.totalorder %s13, 2
    // Predicated region
    $region25: #{basic_block_forward.3} parent=5 // pred_check
      %p245 = pneg %p244
    $region26: #{basic_block_forward.3} parent=5 // pred_check_branch
      %247 = sbr.rel (%p245) target = $region28
    $region27: #{basic_block_forward.3} parent=5 // pred_region
      // Predicated region
      $region29: #{basic_block_forward.3} parent=27 // pred_check
        %p248 = pneg %p45
      $region30: #{basic_block_forward.3} parent=27 // pred_check_branch
        %250 = sbr.rel (%p248) target = $region32
      $region31: #{basic_block_forward.3} parent=27 // pred_region
        %p251 = scmp.lt.s32.totalorder %s20, 1
        %s252 = scalar_select %p251, %s20, 1
        %s253 = smul.addr %s252, 12
        %s254 = smul.addr %s253, 4
        %s255 = scalar_lea.vmem %s0, %s254
      $region32: #{basic_block_forward.3} parent=27 // pred_fallthru
        _
      // Predicated region
      $region33: #{basic_block_forward.3} parent=27 // pred_check
        %p256 = pneg %p71
      $region34: #{basic_block_forward.3} parent=27 // pred_check_branch
        %258 = sbr.rel (%p256) target = $region36
      $region35: #{basic_block_forward.3} parent=27 // pred_region
        %p259 = scmp.lt.s32.totalorder %s20, 1
        %s260 = scalar_select %p259, %s20, 1
        %s261 = smul.addr %s260, 12
        %s262 = smul.addr %s261, 4
        %s263 = scalar_lea.vmem %s1, %s262
      $region36: #{basic_block_forward.3} parent=27 // pred_fallthru
        _
      // Predicated region
      $region37: #{basic_block_forward.3} parent=27 // pred_check
        %p264 = pneg %p97
      $region38: #{basic_block_forward.3} parent=27 // pred_check_branch
        %266 = sbr.rel (%p264) target = $region40
      $region39: #{basic_block_forward.3} parent=27 // pred_region
        %p267 = scmp.lt.s32.totalorder %s20, 1
        %s268 = scalar_select %p267, %s20, 1
        %s269 = smul.addr %s268, 12
        %s270 = smul.addr %s269, 4
        %s271 = scalar_lea.vmem %s2, %s270
      $region40: #{basic_block_forward.3} parent=27 // pred_fallthru
        _
      // Predicated region
      $region41: #{basic_block_forward.3} parent=27 // pred_check
        %p272 = pneg %p123
      $region42: #{basic_block_forward.3} parent=27 // pred_check_branch
        %274 = sbr.rel (%p272) target = $region44
      $region43: #{basic_block_forward.3} parent=27 // pred_region
        %p275 = scmp.lt.s32.totalorder %s20, 1
        %s276 = scalar_select %p275, %s20, 1
        %s277 = smul.addr %s276, 12
        %s278 = smul.addr %s277, 4
        %s279 = scalar_lea.vmem %s3, %s278
      $region44: #{basic_block_forward.3} parent=27 // pred_fallthru
        _
    $region28: #{basic_block_forward.3} parent=5 // pred_fallthru
      _
    %p280 = scmp.le.s32.totalorder 1, %s13
    %p281 = scmp.lt.s32.totalorder %s13, 3
    %p282 = pnand %p280, %p281
    %p283 = pneg %p282
    // Predicated region
    $region45: #{basic_block_forward.3} parent=5 // pred_check
      _
    $region46: #{basic_block_forward.3} parent=5 // pred_check_branch
      %285 = sbr.rel (%p282) target = $region48
    $region47: #{basic_block_forward.3} parent=5 // pred_region
      %s286 = ssub.s32 %s13, 1
      %p287 = scmp.lt.s32.totalorder %s22, 1
      %s288 = scalar_select %p287, %s22, 1
      %s289 = smul.addr %s288, 12
      %s290 = smul.addr %s289, 4
      %s291 = scalar_lea.vmem %s0, %s290
      %p292 = pneg %p51
      %p293 = pneg %p48
      %p294 = scmp.lt.s32.totalorder %s22, 1
      %s295 = scalar_select %p294, %s22, 1
      %s296 = smul.addr %s295, 12
      %s297 = smul.addr %s296, 4
      %s298 = scalar_lea.vmem %s1, %s297
      %p299 = pneg %p77
      %p300 = pneg %p74
      %p301 = scmp.lt.s32.totalorder %s22, 1
      %s302 = scalar_select %p301, %s22, 1
      %s303 = smul.addr %s302, 12
      %s304 = smul.addr %s303, 4
      %s305 = scalar_lea.vmem %s2, %s304
      %p306 = pneg %p103
      %p307 = pneg %p100
      %p308 = scmp.lt.s32.totalorder %s22, 1
      %s309 = scalar_select %p308, %s22, 1
      %s310 = smul.addr %s309, 12
      %s311 = smul.addr %s310, 4
      %s312 = scalar_lea.vmem %s3, %s311
      %p313 = pneg %p129
      %p314 = pneg %p126
      %p315 = pneg %p150
      %p316 = pneg %p147
      %p317 = pneg %p171
      %p318 = pneg %p168
      %p319 = pneg %p192
      %p320 = pneg %p189
      %p321 = pneg %p220
      %p322 = pneg %p217
      %s323 = smul.u32 9, %s23
      %p324 = scmp.lt.s32.totalorder %s22, 1
      %s325 = scalar_select %p324, %s22, 1
      %p326 = scmp.lt.s32.totalorder %s323, 8
      %s327 = scalar_select %p326, %s323, 8
      %s328 = smul.addr %s325, 9
      %s329 = sadd.s32 %s327, %s328
      %s330 = smul.addr %s329, 4
      %s331 = scalar_lea.vmem %s7, %s330
      %p332 = scmp.lt.s32.totalorder %s22, 1
      %s333 = scalar_select %p332, %s22, 1
      %s334 = smul.addr %s333, 12
      %s335 = smul.addr %s334, 4
      %s336 = scalar_lea.vmem %s0, %s335
      %p337 = scmp.lt.s32.totalorder %s22, 1
      %s338 = scalar_select %p337, %s22, 1
      %s339 = smul.addr %s338, 12
      %s340 = smul.addr %s339, 4
      %s341 = scalar_lea.vmem %s1, %s340
      %p342 = scmp.lt.s32.totalorder %s22, 1
      %s343 = scalar_select %p342, %s22, 1
      %s344 = smul.addr %s343, 12
      %s345 = smul.addr %s344, 4
      %s346 = scalar_lea.vmem %s2, %s345
      %p347 = scmp.lt.s32.totalorder %s22, 1
      %s348 = scalar_select %p347, %s22, 1
      %s349 = smul.addr %s348, 12
      %s350 = smul.addr %s349, 4
      %s351 = scalar_lea.vmem %s3, %s350
      %s352 = smul.u32 9, %s23
      %p353 = scmp.lt.s32.totalorder %s22, 1
      %s354 = scalar_select %p353, %s22, 1
      %p355 = scmp.lt.s32.totalorder %s352, 8
      %s356 = scalar_select %p355, %s352, 8
      %s357 = smul.addr %s354, 9
      %s358 = sadd.s32 %s356, %s357
      %s359 = smul.addr %s358, 4
      %s360 = scalar_lea.vmem %s7, %s359
      %s361 = smul.u32 9, %s23
      %v363 = vld [vmem:[%s336] sm:$0xf]
      %v364 = vld [vmem:[%s336 + $0x4] sm:$0xf]
      %v365 = vld [vmem:[%s336 + $0x8] sm:$0xf]
      %v366 = vld [vmem:[%s336 + $0xc] sm:$0xf]
      %v367 = vld [vmem:[%s336 + $0x10] sm:$0xf]
      %v368 = vld [vmem:[%s336 + $0x14] sm:$0xf]
      %v369 = vld [vmem:[%s336 + $0x18] sm:$0xf]
      %v370 = vld [vmem:[%s336 + $0x1c] sm:$0xf]
      %v371 = vld [vmem:[%s336 + $0x20] sm:$0xf]
      %vm372 = vcmask 125952
      %373 = vst.msk [vmem:[#allocation2] sm:$0xf] %vm372, %v363
      %374 = vst.msk [vmem:[#allocation2 + $0x8] sm:$0xf] %vm372, %v364
      %375 = vst.msk [vmem:[#allocation2 + $0x10] sm:$0xf] %vm372, %v365
      %376 = vst.msk [vmem:[#allocation2 + $0x18] sm:$0xf] %vm372, %v366
      %377 = vst.msk [vmem:[#allocation2 + $0x20] sm:$0xf] %vm372, %v367
      %378 = vst.msk [vmem:[#allocation2 + $0x28] sm:$0xf] %vm372, %v368
      %379 = vst.msk [vmem:[#allocation2 + $0x30] sm:$0xf] %vm372, %v369
      %380 = vst.msk [vmem:[#allocation2 + $0x38] sm:$0xf] %vm372, %v370
      %381 = vst.msk [vmem:[#allocation2 + $0x40] sm:$0xf] %vm372, %v371
      %v382 = vld [vmem:[%s341] sm:$0xf]
      %v383 = vld [vmem:[%s341 + $0x4] sm:$0xf]
      %v384 = vld [vmem:[%s341 + $0x8] sm:$0xf]
      %v385 = vld [vmem:[%s341 + $0xc] sm:$0xf]
      %v386 = vld [vmem:[%s341 + $0x10] sm:$0xf]
      %v387 = vld [vmem:[%s341 + $0x14] sm:$0xf]
      %v388 = vld [vmem:[%s341 + $0x18] sm:$0xf]
      %v389 = vld [vmem:[%s341 + $0x1c] sm:$0xf]
      %v390 = vld [vmem:[%s341 + $0x20] sm:$0xf]
      %400 = vrot.lane.b32.xlu0 %v382, 16
      %v401 = vpop.permute.xlu0 %400
      %402 = vrot.lane.b32.xlu0 %v383, 16
      %v403 = vpop.permute.xlu0 %402
      %404 = vrot.lane.b32.xlu0 %v384, 16
      %v405 = vpop.permute.xlu0 %404
      %406 = vrot.lane.b32.xlu0 %v385, 16
      %v407 = vpop.permute.xlu0 %406
      %408 = vrot.lane.b32.xlu0 %v386, 16
      %v409 = vpop.permute.xlu0 %408
      %410 = vrot.lane.b32.xlu0 %v387, 16
      %v411 = vpop.permute.xlu0 %410
      %412 = vrot.lane.b32.xlu0 %v388, 16
      %v413 = vpop.permute.xlu0 %412
      %414 = vrot.lane.b32.xlu0 %v389, 16
      %v415 = vpop.permute.xlu0 %414
      %416 = vrot.lane.b32.xlu0 %v390, 16
      %v417 = vpop.permute.xlu0 %416
      %vm427 = vcmask 257152
      %428 = vst.msk [vmem:[#allocation2] sm:$0xf] %vm427, %v401
      %429 = vst.msk [vmem:[#allocation2 + $0x8] sm:$0xf] %vm427, %v403
      %430 = vst.msk [vmem:[#allocation2 + $0x10] sm:$0xf] %vm427, %v405
      %431 = vst.msk [vmem:[#allocation2 + $0x18] sm:$0xf] %vm427, %v407
      %432 = vst.msk [vmem:[#allocation2 + $0x20] sm:$0xf] %vm427, %v409
      %433 = vst.msk [vmem:[#allocation2 + $0x28] sm:$0xf] %vm427, %v411
      %434 = vst.msk [vmem:[#allocation2 + $0x30] sm:$0xf] %vm427, %v413
      %435 = vst.msk [vmem:[#allocation2 + $0x38] sm:$0xf] %vm427, %v415
      %436 = vst.msk [vmem:[#allocation2 + $0x40] sm:$0xf] %vm427, %v417
      %v437 = vld [vmem:[%s336] sm:$0xf]
      %v438 = vld [vmem:[%s336 + $0x4] sm:$0xf]
      %v439 = vld [vmem:[%s336 + $0x8] sm:$0xf]
      %v440 = vld [vmem:[%s336 + $0xc] sm:$0xf]
      %v441 = vld [vmem:[%s336 + $0x10] sm:$0xf]
      %v442 = vld [vmem:[%s336 + $0x14] sm:$0xf]
      %v443 = vld [vmem:[%s336 + $0x18] sm:$0xf]
      %v444 = vld [vmem:[%s336 + $0x1c] sm:$0xf]
      %v445 = vld [vmem:[%s336 + $0x20] sm:$0xf]
      %v446 = vld [vmem:[%s336 + $0x24] sm:$0x1]
      %vm447 = vsmask.f32 3328
      %vm448 = vsmask.f32 7440
      %vm449 = vmor %vm447, %vm448
      %v451 = vshrl.u32 %v437, 16
      %v453 = vrot.slane %v451, 4
      %v454 = vshll.u32 %v437, 16
      %v456 = vrot.slane %v454, 5
      %v457 = vor.u32 %v453, %v456
      %v458 = vrot.slane %v457, 4
      %v460 = vshll.u32 %v438, 16
      %v462 = vrot.slane %v460, 5
      %v463 = vsel %vm449, %v458, %v462
      %v464 = vshrl.u32 %v438, 16
      %v466 = vrot.slane %v464, 4
      %v467 = vor.u32 %v466, %v462
      %v468 = vrot.slane %v467, 4
      %v470 = vshll.u32 %v439, 16
      %v472 = vrot.slane %v470, 5
      %v473 = vsel %vm449, %v468, %v472
      %v474 = vshrl.u32 %v439, 16
      %v476 = vrot.slane %v474, 4
      %v477 = vor.u32 %v476, %v472
      %v478 = vrot.slane %v477, 4
      %v480 = vshll.u32 %v440, 16
      %v482 = vrot.slane %v480, 5
      %v483 = vsel %vm449, %v478, %v482
      %v484 = vshrl.u32 %v440, 16
      %v486 = vrot.slane %v484, 4
      %v487 = vor.u32 %v486, %v482
      %v488 = vrot.slane %v487, 4
      %v490 = vshll.u32 %v441, 16
      %v492 = vrot.slane %v490, 5
      %v493 = vsel %vm449, %v488, %v492
      %v494 = vshrl.u32 %v441, 16
      %v496 = vrot.slane %v494, 4
      %v497 = vor.u32 %v496, %v492
      %v498 = vrot.slane %v497, 4
      %v500 = vshll.u32 %v442, 16
      %v502 = vrot.slane %v500, 5
      %v503 = vsel %vm449, %v498, %v502
      %v504 = vshrl.u32 %v442, 16
      %v506 = vrot.slane %v504, 4
      %v507 = vor.u32 %v506, %v502
      %v508 = vrot.slane %v507, 4
      %v510 = vshll.u32 %v443, 16
      %v512 = vrot.slane %v510, 5
      %v513 = vsel %vm449, %v508, %v512
      %v514 = vshrl.u32 %v443, 16
      %v516 = vrot.slane %v514, 4
      %v517 = vor.u32 %v516, %v512
      %v518 = vrot.slane %v517, 4
      %v520 = vshll.u32 %v444, 16
      %v522 = vrot.slane %v520, 5
      %v523 = vsel %vm449, %v518, %v522
      %v524 = vshrl.u32 %v444, 16
      %v526 = vrot.slane %v524, 4
      %v527 = vor.u32 %v526, %v522
      %v528 = vrot.slane %v527, 4
      %v530 = vshll.u32 %v445, 16
      %v532 = vrot.slane %v530, 5
      %v533 = vsel %vm449, %v528, %v532
      %v534 = vshrl.u32 %v445, 16
      %v536 = vrot.slane %v534, 4
      %v537 = vor.u32 %v536, %v532
      %v538 = vrot.slane %v537, 4
      %v540 = vshll.u32 %v446, 16
      %v542 = vrot.slane %v540, 5
      %v543 = vsel %vm449, %v538, %v542
      %544 = vrot.lane.b32.xlu0 %v463, 32
      %v545 = vpop.permute.xlu0 %544
      %546 = vrot.lane.b32.xlu0 %v473, 32
      %v547 = vpop.permute.xlu0 %546
      %548 = vrot.lane.b32.xlu0 %v483, 32
      %v549 = vpop.permute.xlu0 %548
      %550 = vrot.lane.b32.xlu0 %v493, 32
      %v551 = vpop.permute.xlu0 %550
      %552 = vrot.lane.b32.xlu0 %v503, 32
      %v553 = vpop.permute.xlu0 %552
      %554 = vrot.lane.b32.xlu0 %v513, 32
      %v555 = vpop.permute.xlu0 %554
      %556 = vrot.lane.b32.xlu0 %v523, 32
      %v557 = vpop.permute.xlu0 %556
      %558 = vrot.lane.b32.xlu0 %v533, 32
      %v559 = vpop.permute.xlu0 %558
      %560 = vrot.lane.b32.xlu0 %v543, 32
      %v561 = vpop.permute.xlu0 %560
      %vm571 = vcmask 388352
      %572 = vst.msk [vmem:[#allocation2] sm:$0xf] %vm571, %v545
      %573 = vst.msk [vmem:[#allocation2 + $0x8] sm:$0xf] %vm571, %v547
      %574 = vst.msk [vmem:[#allocation2 + $0x10] sm:$0xf] %vm571, %v549
      %575 = vst.msk [vmem:[#allocation2 + $0x18] sm:$0xf] %vm571, %v551
      %576 = vst.msk [vmem:[#allocation2 + $0x20] sm:$0xf] %vm571, %v553
      %577 = vst.msk [vmem:[#allocation2 + $0x28] sm:$0xf] %vm571, %v555
      %578 = vst.msk [vmem:[#allocation2 + $0x30] sm:$0xf] %vm571, %v557
      %579 = vst.msk [vmem:[#allocation2 + $0x38] sm:$0xf] %vm571, %v559
      %580 = vst.msk [vmem:[#allocation2 + $0x40] sm:$0xf] %vm571, %v561
      %v581 = vld [vmem:[%s346] sm:$0xf]
      %v582 = vld [vmem:[%s346 + $0x4] sm:$0xf]
      %v583 = vld [vmem:[%s346 + $0x8] sm:$0xf]
      %v584 = vld [vmem:[%s346 + $0xc] sm:$0xf]
      %v585 = vld [vmem:[%s346 + $0x10] sm:$0xf]
      %v586 = vld [vmem:[%s346 + $0x14] sm:$0xf]
      %v587 = vld [vmem:[%s346 + $0x18] sm:$0xf]
      %v588 = vld [vmem:[%s346 + $0x1c] sm:$0xf]
      %v589 = vld [vmem:[%s346 + $0x20] sm:$0xf]
      %599 = vrot.lane.b32.xlu0 %v581, 48
      %v600 = vpop.permute.xlu0 %599
      %601 = vrot.lane.b32.xlu0 %v582, 48
      %v602 = vpop.permute.xlu0 %601
      %603 = vrot.lane.b32.xlu0 %v583, 48
      %v604 = vpop.permute.xlu0 %603
      %605 = vrot.lane.b32.xlu0 %v584, 48
      %v606 = vpop.permute.xlu0 %605
      %607 = vrot.lane.b32.xlu0 %v585, 48
      %v608 = vpop.permute.xlu0 %607
      %609 = vrot.lane.b32.xlu0 %v586, 48
      %v610 = vpop.permute.xlu0 %609
      %611 = vrot.lane.b32.xlu0 %v587, 48
      %v612 = vpop.permute.xlu0 %611
      %613 = vrot.lane.b32.xlu0 %v588, 48
      %v614 = vpop.permute.xlu0 %613
      %615 = vrot.lane.b32.xlu0 %v589, 48
      %v616 = vpop.permute.xlu0 %615
      %vm626 = vcmask 519552
      %627 = vst.msk [vmem:[#allocation2] sm:$0xf] %vm626, %v600
      %628 = vst.msk [vmem:[#allocation2 + $0x8] sm:$0xf] %vm626, %v602
      %629 = vst.msk [vmem:[#allocation2 + $0x10] sm:$0xf] %vm626, %v604
      %630 = vst.msk [vmem:[#allocation2 + $0x18] sm:$0xf] %vm626, %v606
      %631 = vst.msk [vmem:[#allocation2 + $0x20] sm:$0xf] %vm626, %v608
      %632 = vst.msk [vmem:[#allocation2 + $0x28] sm:$0xf] %vm626, %v610
      %633 = vst.msk [vmem:[#allocation2 + $0x30] sm:$0xf] %vm626, %v612
      %634 = vst.msk [vmem:[#allocation2 + $0x38] sm:$0xf] %vm626, %v614
      %635 = vst.msk [vmem:[#allocation2 + $0x40] sm:$0xf] %vm626, %v616
      %v636 = vld [vmem:[%s351] sm:$0xf]
      %v637 = vld [vmem:[%s351 + $0x4] sm:$0xf]
      %v638 = vld [vmem:[%s351 + $0x8] sm:$0xf]
      %v639 = vld [vmem:[%s351 + $0xc] sm:$0xf]
      %v640 = vld [vmem:[%s351 + $0x10] sm:$0xf]
      %v641 = vld [vmem:[%s351 + $0x14] sm:$0xf]
      %v642 = vld [vmem:[%s351 + $0x18] sm:$0xf]
      %v643 = vld [vmem:[%s351 + $0x1c] sm:$0xf]
      %v644 = vld [vmem:[%s351 + $0x20] sm:$0xf]
      %654 = vrot.lane.b32.xlu0 %v636, 64
      %v655 = vpop.permute.xlu0 %654
      %656 = vrot.lane.b32.xlu0 %v637, 64
      %v657 = vpop.permute.xlu0 %656
      %658 = vrot.lane.b32.xlu0 %v638, 64
      %v659 = vpop.permute.xlu0 %658
      %660 = vrot.lane.b32.xlu0 %v639, 64
      %v661 = vpop.permute.xlu0 %660
      %662 = vrot.lane.b32.xlu0 %v640, 64
      %v663 = vpop.permute.xlu0 %662
      %664 = vrot.lane.b32.xlu0 %v641, 64
      %v665 = vpop.permute.xlu0 %664
      %666 = vrot.lane.b32.xlu0 %v642, 64
      %v667 = vpop.permute.xlu0 %666
      %668 = vrot.lane.b32.xlu0 %v643, 64
      %v669 = vpop.permute.xlu0 %668
      %670 = vrot.lane.b32.xlu0 %v644, 64
      %v671 = vpop.permute.xlu0 %670
      %vm681 = vcmask 650752
      %682 = vst.msk [vmem:[#allocation2] sm:$0xf] %vm681, %v655
      %683 = vst.msk [vmem:[#allocation2 + $0x8] sm:$0xf] %vm681, %v657
      %684 = vst.msk [vmem:[#allocation2 + $0x10] sm:$0xf] %vm681, %v659
      %685 = vst.msk [vmem:[#allocation2 + $0x18] sm:$0xf] %vm681, %v661
      %686 = vst.msk [vmem:[#allocation2 + $0x20] sm:$0xf] %vm681, %v663
      %687 = vst.msk [vmem:[#allocation2 + $0x28] sm:$0xf] %vm681, %v665
      %688 = vst.msk [vmem:[#allocation2 + $0x30] sm:$0xf] %vm681, %v667
      %689 = vst.msk [vmem:[#allocation2 + $0x38] sm:$0xf] %vm681, %v669
      %690 = vst.msk [vmem:[#allocation2 + $0x40] sm:$0xf] %vm681, %v671
      %v691 = vld [vmem:[%s346] sm:$0xf]
      %v692 = vld [vmem:[%s346 + $0x4] sm:$0xf]
      %v693 = vld [vmem:[%s346 + $0x8] sm:$0xf]
      %v694 = vld [vmem:[%s346 + $0xc] sm:$0xf]
      %v695 = vld [vmem:[%s346 + $0x10] sm:$0xf]
      %v696 = vld [vmem:[%s346 + $0x14] sm:$0xf]
      %v697 = vld [vmem:[%s346 + $0x18] sm:$0xf]
      %v698 = vld [vmem:[%s346 + $0x1c] sm:$0xf]
      %v699 = vld [vmem:[%s346 + $0x20] sm:$0xf]
      %v700 = vld [vmem:[%s346 + $0x24] sm:$0x1]
      %v702 = vshrl.u32 %v691, 16
      %v704 = vrot.slane %v702, 4
      %v705 = vshll.u32 %v691, 16
      %v707 = vrot.slane %v705, 5
      %v708 = vor.u32 %v704, %v707
      %v709 = vrot.slane %v708, 4
      %v711 = vshll.u32 %v692, 16
      %v713 = vrot.slane %v711, 5
      %v714 = vsel %vm449, %v709, %v713
      %v715 = vshrl.u32 %v692, 16
      %v717 = vrot.slane %v715, 4
      %v718 = vor.u32 %v717, %v713
      %v719 = vrot.slane %v718, 4
      %v721 = vshll.u32 %v693, 16
      %v723 = vrot.slane %v721, 5
      %v724 = vsel %vm449, %v719, %v723
      %v725 = vshrl.u32 %v693, 16
      %v727 = vrot.slane %v725, 4
      %v728 = vor.u32 %v727, %v723
      %v729 = vrot.slane %v728, 4
      %v731 = vshll.u32 %v694, 16
      %v733 = vrot.slane %v731, 5
      %v734 = vsel %vm449, %v729, %v733
      %v735 = vshrl.u32 %v694, 16
      %v737 = vrot.slane %v735, 4
      %v738 = vor.u32 %v737, %v733
      %v739 = vrot.slane %v738, 4
      %v741 = vshll.u32 %v695, 16
      %v743 = vrot.slane %v741, 5
      %v744 = vsel %vm449, %v739, %v743
      %v745 = vshrl.u32 %v695, 16
      %v747 = vrot.slane %v745, 4
      %v748 = vor.u32 %v747, %v743
      %v749 = vrot.slane %v748, 4
      %v751 = vshll.u32 %v696, 16
      %v753 = vrot.slane %v751, 5
      %v754 = vsel %vm449, %v749, %v753
      %v755 = vshrl.u32 %v696, 16
      %v757 = vrot.slane %v755, 4
      %v758 = vor.u32 %v757, %v753
      %v759 = vrot.slane %v758, 4
      %v761 = vshll.u32 %v697, 16
      %v763 = vrot.slane %v761, 5
      %v764 = vsel %vm449, %v759, %v763
      %v765 = vshrl.u32 %v697, 16
      %v767 = vrot.slane %v765, 4
      %v768 = vor.u32 %v767, %v763
      %v769 = vrot.slane %v768, 4
      %v771 = vshll.u32 %v698, 16
      %v773 = vrot.slane %v771, 5
      %v774 = vsel %vm449, %v769, %v773
      %v775 = vshrl.u32 %v698, 16
      %v777 = vrot.slane %v775, 4
      %v778 = vor.u32 %v777, %v773
      %v779 = vrot.slane %v778, 4
      %v781 = vshll.u32 %v699, 16
      %v783 = vrot.slane %v781, 5
      %v784 = vsel %vm449, %v779, %v783
      %v785 = vshrl.u32 %v699, 16
      %v787 = vrot.slane %v785, 4
      %v788 = vor.u32 %v787, %v783
      %v789 = vrot.slane %v788, 4
      %v791 = vshll.u32 %v700, 16
      %v793 = vrot.slane %v791, 5
      %v794 = vsel %vm449, %v789, %v793
      %795 = vrot.lane.b32.xlu0 %v714, 80
      %v796 = vpop.permute.xlu0 %795
      %797 = vrot.lane.b32.xlu0 %v724, 80
      %v798 = vpop.permute.xlu0 %797
      %799 = vrot.lane.b32.xlu0 %v734, 80
      %v800 = vpop.permute.xlu0 %799
      %801 = vrot.lane.b32.xlu0 %v744, 80
      %v802 = vpop.permute.xlu0 %801
      %803 = vrot.lane.b32.xlu0 %v754, 80
      %v804 = vpop.permute.xlu0 %803
      %805 = vrot.lane.b32.xlu0 %v764, 80
      %v806 = vpop.permute.xlu0 %805
      %807 = vrot.lane.b32.xlu0 %v774, 80
      %v808 = vpop.permute.xlu0 %807
      %809 = vrot.lane.b32.xlu0 %v784, 80
      %v810 = vpop.permute.xlu0 %809
      %811 = vrot.lane.b32.xlu0 %v794, 80
      %v812 = vpop.permute.xlu0 %811
      %vm822 = vcmask 781952
      %823 = vst.msk [vmem:[#allocation2] sm:$0xf] %vm822, %v796
      %824 = vst.msk [vmem:[#allocation2 + $0x8] sm:$0xf] %vm822, %v798
      %825 = vst.msk [vmem:[#allocation2 + $0x10] sm:$0xf] %vm822, %v800
      %826 = vst.msk [vmem:[#allocation2 + $0x18] sm:$0xf] %vm822, %v802
      %827 = vst.msk [vmem:[#allocation2 + $0x20] sm:$0xf] %vm822, %v804
      %828 = vst.msk [vmem:[#allocation2 + $0x28] sm:$0xf] %vm822, %v806
      %829 = vst.msk [vmem:[#allocation2 + $0x30] sm:$0xf] %vm822, %v808
      %830 = vst.msk [vmem:[#allocation2 + $0x38] sm:$0xf] %vm822, %v810
      %831 = vst.msk [vmem:[#allocation2 + $0x40] sm:$0xf] %vm822, %v812
      %v832 = vld [vmem:[%s336 + $0x4] sm:$0xf]
      %v833 = vld [vmem:[%s336 + $0x8] sm:$0xf]
      %v834 = vld [vmem:[%s336 + $0xc] sm:$0xf]
      %v835 = vld [vmem:[%s336 + $0x10] sm:$0xf]
      %v836 = vld [vmem:[%s336 + $0x14] sm:$0xf]
      %v837 = vld [vmem:[%s336 + $0x18] sm:$0xf]
      %v838 = vld [vmem:[%s336 + $0x1c] sm:$0xf]
      %v839 = vld [vmem:[%s336 + $0x20] sm:$0xf]
      %v840 = vld [vmem:[%s336 + $0x24] sm:$0xf]
      %v841 = vld [vmem:[%s336 + $0x28] sm:$0x1]
      %v843 = vshrl.u32 %v832, 16
      %v845 = vrot.slane %v843, 4
      %v846 = vshll.u32 %v832, 16
      %v848 = vrot.slane %v846, 5
      %v849 = vor.u32 %v845, %v848
      %v850 = vrot.slane %v849, 4
      %v852 = vshll.u32 %v833, 16
      %v854 = vrot.slane %v852, 5
      %v855 = vsel %vm449, %v850, %v854
      %v856 = vshrl.u32 %v833, 16
      %v858 = vrot.slane %v856, 4
      %v859 = vor.u32 %v858, %v854
      %v860 = vrot.slane %v859, 4
      %v862 = vshll.u32 %v834, 16
      %v864 = vrot.slane %v862, 5
      %v865 = vsel %vm449, %v860, %v864
      %v866 = vshrl.u32 %v834, 16
      %v868 = vrot.slane %v866, 4
      %v869 = vor.u32 %v868, %v864
      %v870 = vrot.slane %v869, 4
      %v872 = vshll.u32 %v835, 16
      %v874 = vrot.slane %v872, 5
      %v875 = vsel %vm449, %v870, %v874
      %v876 = vshrl.u32 %v835, 16
      %v878 = vrot.slane %v876, 4
      %v879 = vor.u32 %v878, %v874
      %v880 = vrot.slane %v879, 4
      %v882 = vshll.u32 %v836, 16
      %v884 = vrot.slane %v882, 5
      %v885 = vsel %vm449, %v880, %v884
      %v886 = vshrl.u32 %v836, 16
      %v888 = vrot.slane %v886, 4
      %v889 = vor.u32 %v888, %v884
      %v890 = vrot.slane %v889, 4
      %v892 = vshll.u32 %v837, 16
      %v894 = vrot.slane %v892, 5
      %v895 = vsel %vm449, %v890, %v894
      %v896 = vshrl.u32 %v837, 16
      %v898 = vrot.slane %v896, 4
      %v899 = vor.u32 %v898, %v894
      %v900 = vrot.slane %v899, 4
      %v902 = vshll.u32 %v838, 16
      %v904 = vrot.slane %v902, 5
      %v905 = vsel %vm449, %v900, %v904
      %v906 = vshrl.u32 %v838, 16
      %v908 = vrot.slane %v906, 4
      %v909 = vor.u32 %v908, %v904
      %v910 = vrot.slane %v909, 4
      %v912 = vshll.u32 %v839, 16
      %v914 = vrot.slane %v912, 5
      %v915 = vsel %vm449, %v910, %v914
      %v916 = vshrl.u32 %v839, 16
      %v918 = vrot.slane %v916, 4
      %v919 = vor.u32 %v918, %v914
      %v920 = vrot.slane %v919, 4
      %v922 = vshll.u32 %v840, 16
      %v924 = vrot.slane %v922, 5
      %v925 = vsel %vm449, %v920, %v924
      %v926 = vshrl.u32 %v840, 16
      %v928 = vrot.slane %v926, 4
      %v929 = vor.u32 %v928, %v924
      %v930 = vrot.slane %v929, 4
      %v932 = vshll.u32 %v841, 16
      %v934 = vrot.slane %v932, 5
      %v935 = vsel %vm449, %v930, %v934
      %936 = vrot.lane.b32.xlu0 %v855, 96
      %v937 = vpop.permute.xlu0 %936
      %938 = vrot.lane.b32.xlu0 %v865, 96
      %v939 = vpop.permute.xlu0 %938
      %940 = vrot.lane.b32.xlu0 %v875, 96
      %v941 = vpop.permute.xlu0 %940
      %942 = vrot.lane.b32.xlu0 %v885, 96
      %v943 = vpop.permute.xlu0 %942
      %944 = vrot.lane.b32.xlu0 %v895, 96
      %v945 = vpop.permute.xlu0 %944
      %946 = vrot.lane.b32.xlu0 %v905, 96
      %v947 = vpop.permute.xlu0 %946
      %948 = vrot.lane.b32.xlu0 %v915, 96
      %v949 = vpop.permute.xlu0 %948
      %950 = vrot.lane.b32.xlu0 %v925, 96
      %v951 = vpop.permute.xlu0 %950
      %952 = vrot.lane.b32.xlu0 %v935, 96
      %v953 = vpop.permute.xlu0 %952
      %vm963 = vcmask 913152
      %964 = vst.msk [vmem:[#allocation2] sm:$0xf] %vm963, %v937
      %965 = vst.msk [vmem:[#allocation2 + $0x8] sm:$0xf] %vm963, %v939
      %966 = vst.msk [vmem:[#allocation2 + $0x10] sm:$0xf] %vm963, %v941
      %967 = vst.msk [vmem:[#allocation2 + $0x18] sm:$0xf] %vm963, %v943
      %968 = vst.msk [vmem:[#allocation2 + $0x20] sm:$0xf] %vm963, %v945
      %969 = vst.msk [vmem:[#allocation2 + $0x28] sm:$0xf] %vm963, %v947
      %970 = vst.msk [vmem:[#allocation2 + $0x30] sm:$0xf] %vm963, %v949
      %971 = vst.msk [vmem:[#allocation2 + $0x38] sm:$0xf] %vm963, %v951
      %972 = vst.msk [vmem:[#allocation2 + $0x40] sm:$0xf] %vm963, %v953
      %v973 = vld [vmem:[%s341 + $0x4] sm:$0xf]
      %v974 = vld [vmem:[%s341 + $0x8] sm:$0xf]
      %v975 = vld [vmem:[%s341 + $0xc] sm:$0xf]
      %v976 = vld [vmem:[%s341 + $0x10] sm:$0xf]
      %v977 = vld [vmem:[%s341 + $0x14] sm:$0xf]
      %v978 = vld [vmem:[%s341 + $0x18] sm:$0xf]
      %v979 = vld [vmem:[%s341 + $0x1c] sm:$0xf]
      %v980 = vld [vmem:[%s341 + $0x20] sm:$0xf]
      %v981 = vld [vmem:[%s341 + $0x24] sm:$0xf]
      %v982 = vld [vmem:[%s341 + $0x28] sm:$0x1]
      %v984 = vshrl.u32 %v973, 16
      %v986 = vrot.slane %v984, 4
      %v987 = vshll.u32 %v973, 16
      %v989 = vrot.slane %v987, 5
      %v990 = vor.u32 %v986, %v989
      %v991 = vrot.slane %v990, 4
      %v993 = vshll.u32 %v974, 16
      %v995 = vrot.slane %v993, 5
      %v996 = vsel %vm449, %v991, %v995
      %v997 = vshrl.u32 %v974, 16
      %v999 = vrot.slane %v997, 4
      %v1000 = vor.u32 %v999, %v995
      %v1001 = vrot.slane %v1000, 4
      %v1003 = vshll.u32 %v975, 16
      %v1005 = vrot.slane %v1003, 5
      %v1006 = vsel %vm449, %v1001, %v1005
      %v1007 = vshrl.u32 %v975, 16
      %v1009 = vrot.slane %v1007, 4
      %v1010 = vor.u32 %v1009, %v1005
      %v1011 = vrot.slane %v1010, 4
      %v1013 = vshll.u32 %v976, 16
      %v1015 = vrot.slane %v1013, 5
      %v1016 = vsel %vm449, %v1011, %v1015
      %v1017 = vshrl.u32 %v976, 16
      %v1019 = vrot.slane %v1017, 4
      %v1020 = vor.u32 %v1019, %v1015
      %v1021 = vrot.slane %v1020, 4
      %v1023 = vshll.u32 %v977, 16
      %v1025 = vrot.slane %v1023, 5
      %v1026 = vsel %vm449, %v1021, %v1025
      %v1027 = vshrl.u32 %v977, 16
      %v1029 = vrot.slane %v1027, 4
      %v1030 = vor.u32 %v1029, %v1025
      %v1031 = vrot.slane %v1030, 4
      %v1033 = vshll.u32 %v978, 16
      %v1035 = vrot.slane %v1033, 5
      %v1036 = vsel %vm449, %v1031, %v1035
      %v1037 = vshrl.u32 %v978, 16
      %v1039 = vrot.slane %v1037, 4
      %v1040 = vor.u32 %v1039, %v1035
      %v1041 = vrot.slane %v1040, 4
      %v1043 = vshll.u32 %v979, 16
      %v1045 = vrot.slane %v1043, 5
      %v1046 = vsel %vm449, %v1041, %v1045
      %v1047 = vshrl.u32 %v979, 16
      %v1049 = vrot.slane %v1047, 4
      %v1050 = vor.u32 %v1049, %v1045
      %v1051 = vrot.slane %v1050, 4
      %v1053 = vshll.u32 %v980, 16
      %v1055 = vrot.slane %v1053, 5
      %v1056 = vsel %vm449, %v1051, %v1055
      %v1057 = vshrl.u32 %v980, 16
      %v1059 = vrot.slane %v1057, 4
      %v1060 = vor.u32 %v1059, %v1055
      %v1061 = vrot.slane %v1060, 4
      %v1063 = vshll.u32 %v981, 16
      %v1065 = vrot.slane %v1063, 5
      %v1066 = vsel %vm449, %v1061, %v1065
      %v1067 = vshrl.u32 %v981, 16
      %v1069 = vrot.slane %v1067, 4
      %v1070 = vor.u32 %v1069, %v1065
      %v1071 = vrot.slane %v1070, 4
      %v1073 = vshll.u32 %v982, 16
      %v1075 = vrot.slane %v1073, 5
      %v1076 = vsel %vm449, %v1071, %v1075
      %1077 = vrot.lane.b32.xlu0 %v996, 112
      %v1078 = vpop.permute.xlu0 %1077
      %1079 = vrot.lane.b32.xlu0 %v1006, 112
      %v1080 = vpop.permute.xlu0 %1079
      %1081 = vrot.lane.b32.xlu0 %v1016, 112
      %v1082 = vpop.permute.xlu0 %1081
      %1083 = vrot.lane.b32.xlu0 %v1026, 112
      %v1084 = vpop.permute.xlu0 %1083
      %1085 = vrot.lane.b32.xlu0 %v1036, 112
      %v1086 = vpop.permute.xlu0 %1085
      %1087 = vrot.lane.b32.xlu0 %v1046, 112
      %v1088 = vpop.permute.xlu0 %1087
      %1089 = vrot.lane.b32.xlu0 %v1056, 112
      %v1090 = vpop.permute.xlu0 %1089
      %1091 = vrot.lane.b32.xlu0 %v1066, 112
      %v1092 = vpop.permute.xlu0 %1091
      %1093 = vrot.lane.b32.xlu0 %v1076, 112
      %v1094 = vpop.permute.xlu0 %1093
      %vm1104 = vcmask 1044352
      %1105 = vst.msk [vmem:[#allocation2] sm:$0xf] %vm1104, %v1078
      %1106 = vst.msk [vmem:[#allocation2 + $0x8] sm:$0xf] %vm1104, %v1080
      %1107 = vst.msk [vmem:[#allocation2 + $0x10] sm:$0xf] %vm1104, %v1082
      %1108 = vst.msk [vmem:[#allocation2 + $0x18] sm:$0xf] %vm1104, %v1084
      %1109 = vst.msk [vmem:[#allocation2 + $0x20] sm:$0xf] %vm1104, %v1086
      %1110 = vst.msk [vmem:[#allocation2 + $0x28] sm:$0xf] %vm1104, %v1088
      %1111 = vst.msk [vmem:[#allocation2 + $0x30] sm:$0xf] %vm1104, %v1090
      %1112 = vst.msk [vmem:[#allocation2 + $0x38] sm:$0xf] %vm1104, %v1092
      %1113 = vst.msk [vmem:[#allocation2 + $0x40] sm:$0xf] %vm1104, %v1094
      %v1114 = vld [vmem:[%s336 + $0x4] sm:$0xe]
      %v1115 = vld [vmem:[%s336 + $0x8] sm:$0xf]
      %v1116 = vld [vmem:[%s336 + $0xc] sm:$0xf]
      %v1117 = vld [vmem:[%s336 + $0x10] sm:$0xf]
      %v1118 = vld [vmem:[%s336 + $0x14] sm:$0xf]
      %v1119 = vld [vmem:[%s336 + $0x18] sm:$0xf]
      %v1120 = vld [vmem:[%s336 + $0x1c] sm:$0xf]
      %v1121 = vld [vmem:[%s336 + $0x20] sm:$0xf]
      %v1122 = vld [vmem:[%s336 + $0x24] sm:$0xf]
      %v1123 = vld [vmem:[%s336 + $0x28] sm:$0x1]
      %vm1134 = vcmask 1042432
      %vm1135 = vcmask 1046532
      %vm1136 = vmor %vm1134, %vm1135
      %v1137 = vrot.slane %v1114, 5
      %v1138 = vrot.slane %v1137, 4
      %v1139 = vrot.slane %v1115, 5
      %v1140 = vsel %vm1136, %v1138, %v1139
      %v1141 = vrot.slane %v1139, 4
      %v1142 = vrot.slane %v1116, 5
      %v1143 = vsel %vm1136, %v1141, %v1142
      %v1144 = vrot.slane %v1142, 4
      %v1145 = vrot.slane %v1117, 5
      %v1146 = vsel %vm1136, %v1144, %v1145
      %v1147 = vrot.slane %v1145, 4
      %v1148 = vrot.slane %v1118, 5
      %v1149 = vsel %vm1136, %v1147, %v1148
      %v1150 = vrot.slane %v1148, 4
      %v1151 = vrot.slane %v1119, 5
      %v1152 = vsel %vm1136, %v1150, %v1151
      %v1153 = vrot.slane %v1151, 4
      %v1154 = vrot.slane %v1120, 5
      %v1155 = vsel %vm1136, %v1153, %v1154
      %v1156 = vrot.slane %v1154, 4
      %v1157 = vrot.slane %v1121, 5
      %v1158 = vsel %vm1136, %v1156, %v1157
      %v1159 = vrot.slane %v1157, 4
      %v1160 = vrot.slane %v1122, 5
      %v1161 = vsel %vm1136, %v1159, %v1160
      %v1162 = vrot.slane %v1160, 4
      %v1163 = vrot.slane %v1123, 5
      %v1164 = vsel %vm1136, %v1162, %v1163
      %1174 = vst.msk [vmem:[#allocation2 + $0x4] sm:$0xf] %vm372, %v1140
      %1175 = vst.msk [vmem:[#allocation2 + $0xc] sm:$0xf] %vm372, %v1143
      %1176 = vst.msk [vmem:[#allocation2 + $0x14] sm:$0xf] %vm372, %v1146
      %1177 = vst.msk [vmem:[#allocation2 + $0x1c] sm:$0xf] %vm372, %v1149
      %1178 = vst.msk [vmem:[#allocation2 + $0x24] sm:$0xf] %vm372, %v1152
      %1179 = vst.msk [vmem:[#allocation2 + $0x2c] sm:$0xf] %vm372, %v1155
      %1180 = vst.msk [vmem:[#allocation2 + $0x34] sm:$0xf] %vm372, %v1158
      %1181 = vst.msk [vmem:[#allocation2 + $0x3c] sm:$0xf] %vm372, %v1161
      %1182 = vst.msk [vmem:[#allocation2 + $0x44] sm:$0xf] %vm372, %v1164
      %v1183 = vld [vmem:[#allocation2] sm:$0xff]
      %v1184 = vld [vmem:[#allocation2 + $0x8] sm:$0xff]
      %v1185 = vld [vmem:[#allocation2 + $0x10] sm:$0xff]
      %v1186 = vld [vmem:[#allocation2 + $0x18] sm:$0xff]
      %v1187 = vld [vmem:[#allocation2 + $0x20] sm:$0xff]
      %v1188 = vld [vmem:[#allocation2 + $0x28] sm:$0xff]
      %v1189 = vld [vmem:[#allocation2 + $0x30] sm:$0xff]
      %v1190 = vld [vmem:[#allocation2 + $0x38] sm:$0xff]
      %v1191 = vld [vmem:[#allocation2 + $0x40] sm:$0xff]
      %v1192 = vld [vmem:[%s4] sm:$0xf]
      %v1193 = vld [vmem:[%s4 + $0x4] sm:$0xf]
      %v1194 = vld [vmem:[%s4 + $0x8] sm:$0xf]
      %v1195 = vld [vmem:[%s4 + $0xc] sm:$0xf]
      %v1196 = vld [vmem:[%s4 + $0x10] sm:$0xf]
      %v1197 = vld [vmem:[%s4 + $0x14] sm:$0xf]
      %v1198 = vld [vmem:[%s4 + $0x18] sm:$0xf]
      %v1199 = vld [vmem:[%s4 + $0x1c] sm:$0xf]
      %v1200 = vld [vmem:[%s4 + $0x20] sm:$0xf]
      %v1201 = vld [vmem:[%s4 + $0x24] sm:$0xf]
      %v1202 = vld [vmem:[%s4 + $0x28] sm:$0xf]
      %v1203 = vld [vmem:[%s4 + $0x2c] sm:$0xf]
      %v1204 = vld [vmem:[%s4 + $0x30] sm:$0xf]
      %v1205 = vld [vmem:[%s4 + $0x34] sm:$0xf]
      %v1206 = vld [vmem:[%s4 + $0x38] sm:$0xf]
      %v1207 = vld [vmem:[%s4 + $0x3c] sm:$0xf]
      %v1208 = vld [vmem:[%s4 + $0x40] sm:$0xf]
      %v1209 = vld [vmem:[%s4 + $0x44] sm:$0xf]
      %v1219 = vunpack.c.l.b16 %v1183
      %v1220 = vunpack.c.h.b16 %v1183
      %v1221 = vunpack.c.l.b16 %v1184
      %v1222 = vunpack.c.h.b16 %v1184
      %v1223 = vunpack.c.l.b16 %v1185
      %v1224 = vunpack.c.h.b16 %v1185
      %v1225 = vunpack.c.l.b16 %v1186
      %v1226 = vunpack.c.h.b16 %v1186
      %v1227 = vunpack.c.l.b16 %v1187
      %v1228 = vunpack.c.h.b16 %v1187
      %v1229 = vunpack.c.l.b16 %v1188
      %v1230 = vunpack.c.h.b16 %v1188
      %v1231 = vunpack.c.l.b16 %v1189
      %v1232 = vunpack.c.h.b16 %v1189
      %v1233 = vunpack.c.l.b16 %v1190
      %v1234 = vunpack.c.h.b16 %v1190
      %v1235 = vunpack.c.l.b16 %v1191
      %v1236 = vunpack.c.h.b16 %v1191
      %v1237 = vpack.c.b16 %v1221, %v1219
      %v1238 = vpack.c.b16 %v1222, %v1220
      %v1239 = vpack.c.b16 %v1225, %v1223
      %v1240 = vpack.c.b16 %v1226, %v1224
      %v1241 = vpack.c.b16 %v1229, %v1227
      %v1242 = vpack.c.b16 %v1230, %v1228
      %v1243 = vpack.c.b16 %v1233, %v1231
      %v1244 = vpack.c.b16 %v1234, %v1232
      %v1245 = vpack.c.b16 %v1235, %v1235
      %v1246 = vpack.c.b16 %v1236, %v1236
      %v1270 = vunpack.c.l.b16 %v1192
      %v1271 = vunpack.c.l.b16 %v1193
      %v1272 = vunpack.c.l.b16 %v1194
      %v1273 = vunpack.c.l.b16 %v1195
      %v1274 = vunpack.c.l.b16 %v1196
      %v1275 = vunpack.c.l.b16 %v1197
      %v1276 = vunpack.c.l.b16 %v1198
      %v1277 = vunpack.c.l.b16 %v1199
      %v1278 = vunpack.c.l.b16 %v1200
      %v1279 = vunpack.c.l.b16 %v1201
      %v1280 = vunpack.c.l.b16 %v1202
      %v1281 = vunpack.c.l.b16 %v1203
      %v1282 = vunpack.c.l.b16 %v1204
      %v1283 = vunpack.c.l.b16 %v1205
      %v1284 = vunpack.c.l.b16 %v1206
      %v1285 = vunpack.c.l.b16 %v1207
      %v1286 = vunpack.c.l.b16 %v1208
      %v1287 = vunpack.c.l.b16 %v1209
      %v1288 = vpack.c.b16 %v1271, %v1270
      %v1289 = vpack.c.b16 %v1273, %v1272
      %v1290 = vpack.c.b16 %v1275, %v1274
      %v1291 = vpack.c.b16 %v1277, %v1276
      %v1292 = vpack.c.b16 %v1279, %v1278
      %v1293 = vpack.c.b16 %v1281, %v1280
      %v1294 = vpack.c.b16 %v1283, %v1282
      %v1295 = vpack.c.b16 %v1285, %v1284
      %v1296 = vpack.c.b16 %v1287, %v1286
      %vm1306 = vcmask 130048
      %v1308 = vsel %vm1306, %v1238, 0
      %v1311 = vsel %vm1306, %v1240, 0
      %v1314 = vsel %vm1306, %v1242, 0
      %v1317 = vsel %vm1306, %v1244, 0
      %v1320 = vsel %vm1306, %v1246, 0
      %1322 = vmatpush.bf16.msra.mxu0 %v1295
      %1323 = vmatpush.bf16.msra.mxu0 %v1294
      %1324 = vmatpush.bf16.msra.mxu0 %v1293
      %1325 = vmatpush.bf16.msra.mxu0 %v1292
      %1326 = vmatpush.bf16.msra.mxu0 %v1291
      %1327 = vmatpush.bf16.msra.mxu0 %v1290
      %1328 = vmatpush.bf16.msra.mxu0 %v1289
      %1329 = vmatpush.bf16.msra.mxu0 %v1288
      %1330 = vmatmul.bf16.gmra.mxu0 %v1237
      %v1331 = vpop.f32.mrf.mxu0
      %v1332 = vadd.f32 0.0, %v1331
      %v1333 = vpop.f32.mrf.mxu0
      %v1334 = vadd.f32 0.0, %v1333
      %1335 = vmatmul.bf16.gmra.mxu0 %v1239
      %v1336 = vpop.f32.mrf.mxu0
      %v1337 = vadd.f32 0.0, %v1336
      %v1338 = vpop.f32.mrf.mxu0
      %v1339 = vadd.f32 0.0, %v1338
      %1340 = vmatmul.bf16.gmra.mxu0 %v1241
      %v1341 = vpop.f32.mrf.mxu0
      %v1342 = vadd.f32 0.0, %v1341
      %v1343 = vpop.f32.mrf.mxu0
      %v1344 = vadd.f32 0.0, %v1343
      %1345 = vmatmul.bf16.gmra.mxu0 %v1243
      %v1346 = vpop.f32.mrf.mxu0
      %v1347 = vadd.f32 0.0, %v1346
      %v1348 = vpop.f32.mrf.mxu0
      %v1349 = vadd.f32 0.0, %v1348
      %1350 = vmatmul.bf16.gmra.mxu0 %v1245
      %v1351 = vpop.f32.mrf.mxu0
      %v1352 = vadd.f32 0.0, %v1351
      %v1353 = vpop.f32.mrf.mxu0
      %1354 = vdwg.mxu0
      %1355 = vmatpush.bf16.msra.mxu0 0
      %1356 = vmatpush.bf16.msra.mxu0 0
      %1357 = vmatpush.bf16.msra.mxu0 0
      %1358 = vmatpush.bf16.msra.mxu0 0
      %1359 = vmatpush.bf16.msra.mxu0 0
      %1360 = vmatpush.bf16.msra.mxu0 0
      %1361 = vmatpush.bf16.msra.mxu0 0
      %1362 = vmatpush.bf16.msra.mxu0 %v1296
      %1363 = vmatmul.bf16.gmra.mxu0 %v1308
      %v1364 = vpop.f32.mrf.mxu0
      %v1365 = vadd.f32 %v1332, %v1364
      %v1366 = vpop.f32.mrf.mxu0
      %v1367 = vadd.f32 %v1334, %v1366
      %1368 = vmatmul.bf16.gmra.mxu0 %v1311
      %v1369 = vpop.f32.mrf.mxu0
      %v1370 = vadd.f32 %v1337, %v1369
      %v1371 = vpop.f32.mrf.mxu0
      %v1372 = vadd.f32 %v1339, %v1371
      %1373 = vmatmul.bf16.gmra.mxu0 %v1314
      %v1374 = vpop.f32.mrf.mxu0
      %v1375 = vadd.f32 %v1342, %v1374
      %v1376 = vpop.f32.mrf.mxu0
      %v1377 = vadd.f32 %v1344, %v1376
      %1378 = vmatmul.bf16.gmra.mxu0 %v1317
      %v1379 = vpop.f32.mrf.mxu0
      %v1380 = vadd.f32 %v1347, %v1379
      %v1381 = vpop.f32.mrf.mxu0
      %v1382 = vadd.f32 %v1349, %v1381
      %1383 = vmatmul.bf16.gmra.mxu0 %v1320
      %v1384 = vpop.f32.mrf.mxu0
      %v1385 = vadd.f32 %v1352, %v1384
      %v1386 = vpop.f32.mrf.mxu0
      %1387 = vdwg.mxu0
      %v1388 = vld [vmem:[%s5] sm:$0x1]
      %v1390 = vperm.slane %v1388, 0
      %v1392 = vmul.f32 %v1365, %v1390
      %v1393 = vmul.f32 %v1367, %v1390
      %v1394 = vmul.f32 %v1370, %v1390
      %v1395 = vmul.f32 %v1372, %v1390
      %v1396 = vmul.f32 %v1375, %v1390
      %v1397 = vmul.f32 %v1377, %v1390
      %v1398 = vmul.f32 %v1380, %v1390
      %v1399 = vmul.f32 %v1382, %v1390
      %v1400 = vmul.f32 %v1385, %v1390
      %v1401 = vld [vmem:[%s6] sm:$0x1]
      %v1403 = vperm.slane %v1401, 0
      %v1405 = vadd.f32 %v1392, %v1403
      %v1406 = vadd.f32 %v1393, %v1403
      %v1407 = vadd.f32 %v1394, %v1403
      %v1408 = vadd.f32 %v1395, %v1403
      %v1409 = vadd.f32 %v1396, %v1403
      %v1410 = vadd.f32 %v1397, %v1403
      %v1411 = vadd.f32 %v1398, %v1403
      %v1412 = vadd.f32 %v1399, %v1403
      %v1413 = vadd.f32 %v1400, %v1403
      %v1414 = vmax.f32 %v1405, 0.0
      %v1415 = vmax.f32 %v1406, 0.0
      %v1416 = vmax.f32 %v1407, 0.0
      %v1417 = vmax.f32 %v1408, 0.0
      %v1418 = vmax.f32 %v1409, 0.0
      %v1419 = vmax.f32 %v1410, 0.0
      %v1420 = vmax.f32 %v1411, 0.0
      %v1421 = vmax.f32 %v1412, 0.0
      %v1422 = vmax.f32 %v1413, 0.0
      %v1423 = vpack.c.bf16 %v1414, %v1414
      %v1424 = vpack.c.bf16 %v1415, %v1415
      %v1425 = vpack.c.bf16 %v1416, %v1416
      %v1426 = vpack.c.bf16 %v1417, %v1417
      %v1427 = vpack.c.bf16 %v1418, %v1418
      %v1428 = vpack.c.bf16 %v1419, %v1419
      %v1429 = vpack.c.bf16 %v1420, %v1420
      %v1430 = vpack.c.bf16 %v1421, %v1421
      %v1431 = vpack.c.bf16 %v1422, %v1422
      %1432 = vst.msk [vmem:[%s360] sm:$0xf] %vm372, %v1423
      %1433 = vst.msk [vmem:[%s360 + $0x4] sm:$0xf] %vm372, %v1424
      %1434 = vst.msk [vmem:[%s360 + $0x8] sm:$0xf] %vm372, %v1425
      %1435 = vst.msk [vmem:[%s360 + $0xc] sm:$0xf] %vm372, %v1426
      %1436 = vst.msk [vmem:[%s360 + $0x10] sm:$0xf] %vm372, %v1427
      %1437 = vst.msk [vmem:[%s360 + $0x14] sm:$0xf] %vm372, %v1428
      %1438 = vst.msk [vmem:[%s360 + $0x18] sm:$0xf] %vm372, %v1429
      %1439 = vst.msk [vmem:[%s360 + $0x1c] sm:$0xf] %vm372, %v1430
      %1440 = vst.msk [vmem:[%s360 + $0x20] sm:$0xf] %vm372, %v1431
      %s1441 = smul.u32 9, %s23
      %p1442 = scmp.lt.s32.totalorder %s22, 1
      %s1443 = scalar_select %p1442, %s22, 1
      %p1444 = scmp.lt.s32.totalorder %s1441, 8
      %s1445 = scalar_select %p1444, %s1441, 8
      %s1446 = smul.addr %s1443, 9
      %s1447 = sadd.s32 %s1445, %s1446
      %s1448 = smul.addr %s1447, 4
      %s1449 = scalar_lea.vmem %s7, %s1448
      // Predicated region
      $region49: #{basic_block_forward.3} parent=47 // pred_check
        %p1450 = pneg %p217
      $region50: #{basic_block_forward.3} parent=47 // pred_check_branch
        %1452 = sbr.rel (%p1450) target = $region52
      $region51: #{basic_block_forward.3} parent=47 // pred_region
        %s1453 = smul.u32 9, %s23
      $region52: #{basic_block_forward.3} parent=47 // pred_fallthru
        _
    $region48: #{basic_block_forward.3} parent=5 // pred_fallthru
      _
    %p1454 = scmp.le.s32.totalorder 2, %s13
    // Predicated region
    $region53: #{basic_block_forward.3} parent=5 // pred_check
      %p1455 = pneg %p1454
    $region54: #{basic_block_forward.3} parent=5 // pred_check_branch
      %1457 = sbr.rel (%p1455) target = $region56
    $region55: #{basic_block_forward.3} parent=5 // pred_region
      %s1458 = ssub.s32 %s13, 2
      // Predicated region
      $region57: #{basic_block_forward.3} parent=55 // pred_check
        %p1459 = pneg %p223
      $region58: #{basic_block_forward.3} parent=55 // pred_check_branch
        %1461 = sbr.rel (%p1459) target = $region60
      $region59: #{basic_block_forward.3} parent=55 // pred_region
        %s1462 = smul.u32 9, %s25
        %p1463 = scmp.lt.s32.totalorder %s24, 1
        %s1464 = scalar_select %p1463, %s24, 1
        %p1465 = scmp.lt.s32.totalorder %s1462, 8
        %s1466 = scalar_select %p1465, %s1462, 8
        %s1467 = smul.addr %s1464, 9
        %s1468 = sadd.s32 %s1466, %s1467
        %s1469 = smul.addr %s1468, 4
        %s1470 = scalar_lea.vmem %s7, %s1469
      $region60: #{basic_block_forward.3} parent=55 // pred_fallthru
        _
    $region56: #{basic_block_forward.3} parent=5 // pred_fallthru
      _
  $region6: #{basic_block_forward.3} parent=0 // loop_footer
    %s17 = sadd.s32 1, %s13
  $region7: #{basic_block_forward.3} parent=0 // loop_footer_branch
    %12 = sbr.rel target = $region3
  $region8: #{basic_block_forward.3} parent=0 // loop_exit
    _

// kernel: basic_block_forward.5
$region0: #{basic_block_forward.5}
  #allocation0 [shape = 'u32[]', space=smem, size = 0x4, offset = 0x4, fixed_abs, tag = 'smem constant byte address 0x4 - core index']
  #allocation1 [shape = 'u32[72,128]{1,0:T(1,128)}', space=vmem, size = 0x9000, scoped, tag = 'internal scratch']
  #allocation2 [shape = 'bf16[80,144]{1,0:T(8,128)(2,1)}', space=vmem, size = 0xa000, scoped, tag = 'scratch operand']
  %s0 = inlined_call_operand.vmem [shape: bf16[2,110,16], index: 0, kind: input, shape index: {}]
  %s1 = inlined_call_operand.vmem [shape: bf16[144,16], index: 1, kind: input, shape index: {}]
  %s2 = inlined_call_operand.vmem [shape: f32[1,16], index: 2, kind: input, shape index: {}]
  %s3 = inlined_call_operand.vmem [shape: f32[1,16], index: 3, kind: input, shape index: {}]
  %s4 = inlined_call_operand.vmem [shape: bf16[2,80,16], index: 4, kind: input, shape index: {}]
  %s5 = inlined_call_operand.vmem [shape: f32[2,80,16], index: 5, kind: output, shape index: {}]
  %s6 = sld [smem:[#allocation0]]
  $region53: #{basic_block_forward.5} parent=0
    _
  %s8 = ssub.s32 1, %s6
  %s9 = scalar_select 0, %s8, %s6
  loop: start=0, step=1, limit=4
  $region2: #{basic_block_forward.5} parent=0 // loop_pre_header
    _
  $region3: #{basic_block_forward.5} parent=0 // loop_header
    %s11 = sphi 0, %s15
    %p12 = scmp.ge.s32.totalorder %s11, 4
    %s18 = sphi 0, %s30
    %s19 = sphi 0, %s26
    %s20 = sphi 0, %s18
    %s21 = sphi 0, %s19
    %s22 = sphi 0, %s20
    %s23 = sphi 0, %s21
    %s33 = sphi 0, %s35
    %s36 = sphi 0, %s33
    %s37 = sphi 0, %s36
    %s53 = sphi 0, %s37
    %s57 = sphi 0, %s57
    %s59 = sphi 0, %s57
    %s60 = sphi 0, %s59
    %s74 = sphi 0, %s60
    %s78 = sphi 0, %s78
    %s80 = sphi 0, %s78
    %s81 = sphi 0, %s80
    %s95 = sphi 0, %s81
    %s99 = sphi 0, %s99
    %s101 = sphi 0, %s99
    %s102 = sphi 0, %s101
    %s116 = sphi 0, %s102
    %s124 = sphi 0, %s126
    %s127 = sphi 0, %s124
    %s128 = sphi 0, %s127
    %s144 = sphi 0, %s128
    %s152 = sphi 0, %s154
    %s155 = sphi 0, %s152
    %s156 = sphi 0, %s155
    %s172 = sphi 0, %s156
  $region4: #{basic_block_forward.5} parent=0 // loop_header_branch
    %14 = sbr.rel (%p12) target = $region8
  $region5: #{basic_block_forward.5} parent=0 // loop_body
    %s16 = ssub.s32 %s11, 1
    %s17 = ssub.s32 %s11, 2
    %s24 = sadd.s32 1, %s19
    %p25 = scmp.ge.s32.totalorder %s24, 1
    %s26 = scalar_select %p25, 0, %s24
    %s27 = sadd.s32 1, %s18
    %s28 = scalar_select %p25, %s27, %s18
    %p29 = scmp.ge.s32.totalorder %s28, 2
    %s30 = scalar_select %p29, 0, %s28
    %s31 = ssub.s32 %s18, %s30
    %p32 = scmp.eq.s32.totalorder %s31, 0
    %s34 = sadd.s32 %s33, 1
    %s35 = scalar_select %p32, %s33, %s34
    %p38 = pneg %p32
    %p39 = scmp.eq.s32.totalorder %s11, 1
    %p40 = por %p38, %p39
    %p41 = scmp.ne.s32.totalorder %s33, %s36
    %p42 = scmp.eq.s32.totalorder %s11, 0
    %p43 = por %p41, %p42
    %p44 = scmp.ne.s32.totalorder %s33, %s36
    %p45 = scmp.eq.s32.totalorder %s16, 1
    %p46 = por %p44, %p45
    %p47 = scmp.ne.s32.totalorder %s36, %s37
    %p48 = scmp.eq.s32.totalorder %s16, 0
    %p49 = por %p47, %p48
    %p50 = scmp.ne.s32.totalorder %s36, %s37
    %p51 = scmp.eq.s32.totalorder %s17, 1
    %p52 = por %p50, %p51
    %p54 = scmp.ne.s32.totalorder %s37, %s53
    %p55 = scmp.eq.s32.totalorder %s17, 0
    %p56 = por %p54, %p55
    %s58 = sadd.s32 %s57, 1
    %p61 = scmp.eq.s32.totalorder %s11, 1
    %p62 = scmp.ne.s32.totalorder %s57, %s59
    %p63 = scmp.eq.s32.totalorder %s11, 0
    %p64 = por %p62, %p63
    %p65 = scmp.ne.s32.totalorder %s57, %s59
    %p66 = scmp.eq.s32.totalorder %s16, 1
    %p67 = por %p65, %p66
    %p68 = scmp.ne.s32.totalorder %s59, %s60
    %p69 = scmp.eq.s32.totalorder %s16, 0
    %p70 = por %p68, %p69
    %p71 = scmp.ne.s32.totalorder %s59, %s60
    %p72 = scmp.eq.s32.totalorder %s17, 1
    %p73 = por %p71, %p72
    %p75 = scmp.ne.s32.totalorder %s60, %s74
    %p76 = scmp.eq.s32.totalorder %s17, 0
    %p77 = por %p75, %p76
    %s79 = sadd.s32 %s78, 1
    %p82 = scmp.eq.s32.totalorder %s11, 1
    %p83 = scmp.ne.s32.totalorder %s78, %s80
    %p84 = scmp.eq.s32.totalorder %s11, 0
    %p85 = por %p83, %p84
    %p86 = scmp.ne.s32.totalorder %s78, %s80
    %p87 = scmp.eq.s32.totalorder %s16, 1
    %p88 = por %p86, %p87
    %p89 = scmp.ne.s32.totalorder %s80, %s81
    %p90 = scmp.eq.s32.totalorder %s16, 0
    %p91 = por %p89, %p90
    %p92 = scmp.ne.s32.totalorder %s80, %s81
    %p93 = scmp.eq.s32.totalorder %s17, 1
    %p94 = por %p92, %p93
    %p96 = scmp.ne.s32.totalorder %s81, %s95
    %p97 = scmp.eq.s32.totalorder %s17, 0
    %p98 = por %p96, %p97
    %s100 = sadd.s32 %s99, 1
    %p103 = scmp.eq.s32.totalorder %s11, 1
    %p104 = scmp.ne.s32.totalorder %s99, %s101
    %p105 = scmp.eq.s32.totalorder %s11, 0
    %p106 = por %p104, %p105
    %p107 = scmp.ne.s32.totalorder %s99, %s101
    %p108 = scmp.eq.s32.totalorder %s16, 1
    %p109 = por %p107, %p108
    %p110 = scmp.ne.s32.totalorder %s101, %s102
    %p111 = scmp.eq.s32.totalorder %s16, 0
    %p112 = por %p110, %p111
    %p113 = scmp.ne.s32.totalorder %s101, %s102
    %p114 = scmp.eq.s32.totalorder %s17, 1
    %p115 = por %p113, %p114
    %p117 = scmp.ne.s32.totalorder %s102, %s116
    %p118 = scmp.eq.s32.totalorder %s17, 0
    %p119 = por %p117, %p118
    %s120 = ssub.s32 %s18, %s30
    %s121 = ssub.s32 %s19, %s26
    %s122 = sor.u32 %s120, %s121
    %p123 = scmp.eq.s32.totalorder %s122, 0
    %s125 = sadd.s32 %s124, 1
    %s126 = scalar_select %p123, %s124, %s125
    %p129 = pneg %p123
    %p130 = scmp.eq.s32.totalorder %s11, 1
    %p131 = por %p129, %p130
    %p132 = scmp.ne.s32.totalorder %s124, %s127
    %p133 = scmp.eq.s32.totalorder %s11, 0
    %p134 = por %p132, %p133
    %p135 = scmp.ne.s32.totalorder %s124, %s127
    %p136 = scmp.eq.s32.totalorder %s16, 1
    %p137 = por %p135, %p136
    %p138 = scmp.ne.s32.totalorder %s127, %s128
    %p139 = scmp.eq.s32.totalorder %s16, 0
    %p140 = por %p138, %p139
    %p141 = scmp.ne.s32.totalorder %s127, %s128
    %p142 = scmp.eq.s32.totalorder %s17, 1
    %p143 = por %p141, %p142
    %p145 = scmp.ne.s32.totalorder %s128, %s144
    %p146 = scmp.eq.s32.totalorder %s17, 0
    %p147 = por %p145, %p146
    %s148 = ssub.s32 %s18, %s30
    %s149 = ssub.s32 %s19, %s26
    %s150 = sor.u32 %s148, %s149
    %p151 = scmp.eq.s32.totalorder %s150, 0
    %s153 = sadd.s32 %s152, 1
    %s154 = scalar_select %p151, %s152, %s153
    %p157 = pneg %p151
    %p158 = scmp.eq.s32.totalorder %s11, 1
    %p159 = por %p157, %p158
    %p160 = scmp.ne.s32.totalorder %s152, %s155
    %p161 = scmp.eq.s32.totalorder %s11, 0
    %p162 = por %p160, %p161
    %p163 = scmp.ne.s32.totalorder %s152, %s155
    %p164 = scmp.eq.s32.totalorder %s16, 1
    %p165 = por %p163, %p164
    %p166 = scmp.ne.s32.totalorder %s155, %s156
    %p167 = scmp.eq.s32.totalorder %s16, 0
    %p168 = por %p166, %p167
    %p169 = scmp.ne.s32.totalorder %s155, %s156
    %p170 = scmp.eq.s32.totalorder %s17, 1
    %p171 = por %p169, %p170
    %p173 = scmp.ne.s32.totalorder %s156, %s172
    %p174 = scmp.eq.s32.totalorder %s17, 0
    %p175 = por %p173, %p174
    %p176 = scmp.le.s32.totalorder 1, %s11
    %p177 = scmp.lt.s32.totalorder %s11, 3
    %p178 = pnand %p176, %p177
    %p179 = pneg %p178
    // Predicated region
    $region9: #{basic_block_forward.5} parent=5 // pred_check
      _
    $region10: #{basic_block_forward.5} parent=5 // pred_check_branch
      %181 = sbr.rel (%p178) target = $region12
    $region11: #{basic_block_forward.5} parent=5 // pred_region
      %s182 = ssub.s32 %s11, 1
      // Predicated region
      $region13: #{basic_block_forward.5} parent=11 // pred_check
        %p183 = pneg %p70
      $region14: #{basic_block_forward.5} parent=11 // pred_check_branch
        %185 = sbr.rel (%p183) target = $region16
      $region15: #{basic_block_forward.5} parent=11 // pred_region
        _
      $region16: #{basic_block_forward.5} parent=11 // pred_fallthru
        _
      // Predicated region
      $region17: #{basic_block_forward.5} parent=11 // pred_check
        %p186 = pneg %p91
      $region18: #{basic_block_forward.5} parent=11 // pred_check_branch
        %188 = sbr.rel (%p186) target = $region20
      $region19: #{basic_block_forward.5} parent=11 // pred_region
        _
      $region20: #{basic_block_forward.5} parent=11 // pred_fallthru
        _
      // Predicated region
      $region21: #{basic_block_forward.5} parent=11 // pred_check
        %p189 = pneg %p112
      $region22: #{basic_block_forward.5} parent=11 // pred_check_branch
        %191 = sbr.rel (%p189) target = $region24
      $region23: #{basic_block_forward.5} parent=11 // pred_region
        _
      $region24: #{basic_block_forward.5} parent=11 // pred_fallthru
        _
    $region12: #{basic_block_forward.5} parent=5 // pred_fallthru
      _
    %p192 = scmp.lt.s32.totalorder %s11, 2
    // Predicated region
    $region25: #{basic_block_forward.5} parent=5 // pred_check
      %p193 = pneg %p192
    $region26: #{basic_block_forward.5} parent=5 // pred_check_branch
      %195 = sbr.rel (%p193) target = $region28
    $region27: #{basic_block_forward.5} parent=5 // pred_region
      // Predicated region
      $region29: #{basic_block_forward.5} parent=27 // pred_check
        %p196 = pneg %p43
      $region30: #{basic_block_forward.5} parent=27 // pred_check_branch
        %198 = sbr.rel (%p196) target = $region32
      $region31: #{basic_block_forward.5} parent=27 // pred_region
        %p199 = scmp.lt.s32.totalorder %s18, 1
        %s200 = scalar_select %p199, %s18, 1
        %s201 = smul.addr %s200, 14
        %s202 = smul.addr %s201, 4
        %s203 = scalar_lea.vmem %s0, %s202
      $region32: #{basic_block_forward.5} parent=27 // pred_fallthru
        _
      // Predicated region
      $region33: #{basic_block_forward.5} parent=27 // pred_check
        %p204 = pneg %p134
      $region34: #{basic_block_forward.5} parent=27 // pred_check_branch
        %206 = sbr.rel (%p204) target = $region36
      $region35: #{basic_block_forward.5} parent=27 // pred_region
        %s207 = smul.u32 10, %s19
        %p208 = scmp.lt.s32.totalorder %s18, 1
        %s209 = scalar_select %p208, %s18, 1
        %p210 = scmp.lt.s32.totalorder %s207, 9
        %s211 = scalar_select %p210, %s207, 9
        %s212 = smul.addr %s209, 10
        %s213 = sadd.s32 %s211, %s212
        %s214 = smul.addr %s213, 4
        %s215 = scalar_lea.vmem %s4, %s214
        %s216 = smul.u32 10, %s19
      $region36: #{basic_block_forward.5} parent=27 // pred_fallthru
        _
    $region28: #{basic_block_forward.5} parent=5 // pred_fallthru
      _
    %p217 = scmp.le.s32.totalorder 1, %s11
    %p218 = scmp.lt.s32.totalorder %s11, 3
    %p219 = pnand %p217, %p218
    %p220 = pneg %p219
    // Predicated region
    $region37: #{basic_block_forward.5} parent=5 // pred_check
      _
    $region38: #{basic_block_forward.5} parent=5 // pred_check_branch
      %222 = sbr.rel (%p219) target = $region40
    $region39: #{basic_block_forward.5} parent=5 // pred_region
      %s223 = ssub.s32 %s11, 1
      %p224 = scmp.lt.s32.totalorder %s20, 1
      %s225 = scalar_select %p224, %s20, 1
      %s226 = smul.addr %s225, 14
      %s227 = smul.addr %s226, 4
      %s228 = scalar_lea.vmem %s0, %s227
      %p229 = pneg %p49
      %p230 = pneg %p46
      %p231 = pneg %p70
      %p232 = pneg %p67
      %p233 = pneg %p91
      %p234 = pneg %p88
      %p235 = pneg %p112
      %p236 = pneg %p109
      %s237 = smul.u32 10, %s21
      %p238 = scmp.lt.s32.totalorder %s20, 1
      %s239 = scalar_select %p238, %s20, 1
      %p240 = scmp.lt.s32.totalorder %s237, 9
      %s241 = scalar_select %p240, %s237, 9
      %s242 = smul.addr %s239, 10
      %s243 = sadd.s32 %s241, %s242
      %s244 = smul.addr %s243, 4
      %s245 = scalar_lea.vmem %s4, %s244
      %p246 = pneg %p140
      %p247 = pneg %p137
      %p248 = pneg %p168
      %p249 = pneg %p165
      %s250 = smul.u32 10, %s21
      %p251 = scmp.lt.s32.totalorder %s20, 1
      %s252 = scalar_select %p251, %s20, 1
      %p253 = scmp.lt.s32.totalorder %s250, 9
      %s254 = scalar_select %p253, %s250, 9
      %s255 = smul.addr %s252, 10
      %s256 = sadd.s32 %s254, %s255
      %s257 = smul.addr %s256, 8
      %s258 = scalar_lea.vmem %s5, %s257
      %p259 = scmp.lt.s32.totalorder %s20, 1
      %s260 = scalar_select %p259, %s20, 1
      %s261 = smul.addr %s260, 14
      %s262 = smul.addr %s261, 4
      %s263 = scalar_lea.vmem %s0, %s262
      %s264 = smul.u32 10, %s21
      %p265 = scmp.lt.s32.totalorder %s20, 1
      %s266 = scalar_select %p265, %s20, 1
      %p267 = scmp.lt.s32.totalorder %s264, 9
      %s268 = scalar_select %p267, %s264, 9
      %s269 = smul.addr %s266, 10
      %s270 = sadd.s32 %s268, %s269
      %s271 = smul.addr %s270, 4
      %s272 = scalar_lea.vmem %s4, %s271
      %s273 = smul.u32 10, %s21
      %s274 = smul.u32 10, %s21
      %p275 = scmp.lt.s32.totalorder %s20, 1
      %s276 = scalar_select %p275, %s20, 1
      %p277 = scmp.lt.s32.totalorder %s274, 9
      %s278 = scalar_select %p277, %s274, 9
      %s279 = smul.addr %s276, 10
      %s280 = sadd.s32 %s278, %s279
      %s281 = smul.addr %s280, 8
      %s282 = scalar_lea.vmem %s5, %s281
      %s283 = smul.u32 10, %s21
      %v285 = vld [vmem:[%s263] sm:$0xf]
      %v286 = vld [vmem:[%s263 + $0x4] sm:$0xf]
      %v287 = vld [vmem:[%s263 + $0x8] sm:$0xf]
      %v288 = vld [vmem:[%s263 + $0xc] sm:$0xf]
      %v289 = vld [vmem:[%s263 + $0x10] sm:$0xf]
      %v290 = vld [vmem:[%s263 + $0x14] sm:$0xf]
      %v291 = vld [vmem:[%s263 + $0x18] sm:$0xf]
      %v292 = vld [vmem:[%s263 + $0x1c] sm:$0xf]
      %v293 = vld [vmem:[%s263 + $0x20] sm:$0xf]
      %v294 = vld [vmem:[%s263 + $0x24] sm:$0xf]
      %vm295 = vcmask 125952
      %296 = vst.msk [vmem:[#allocation2] sm:$0xf] %vm295, %v285
      %297 = vst.msk [vmem:[#allocation2 + $0x8] sm:$0xf] %vm295, %v286
      %298 = vst.msk [vmem:[#allocation2 + $0x10] sm:$0xf] %vm295, %v287
      %299 = vst.msk [vmem:[#allocation2 + $0x18] sm:$0xf] %vm295, %v288
      %300 = vst.msk [vmem:[#allocation2 + $0x20] sm:$0xf] %vm295, %v289
      %301 = vst.msk [vmem:[#allocation2 + $0x28] sm:$0xf] %vm295, %v290
      %302 = vst.msk [vmem:[#allocation2 + $0x30] sm:$0xf] %vm295, %v291
      %303 = vst.msk [vmem:[#allocation2 + $0x38] sm:$0xf] %vm295, %v292
      %304 = vst.msk [vmem:[#allocation2 + $0x40] sm:$0xf] %vm295, %v293
      %305 = vst.msk [vmem:[#allocation2 + $0x48] sm:$0xf] %vm295, %v294
      %v306 = vld [vmem:[%s263] sm:$0xf]
      %v307 = vld [vmem:[%s263 + $0x4] sm:$0xf]
      %v308 = vld [vmem:[%s263 + $0x8] sm:$0xf]
      %v309 = vld [vmem:[%s263 + $0xc] sm:$0xf]
      %v310 = vld [vmem:[%s263 + $0x10] sm:$0xf]
      %v311 = vld [vmem:[%s263 + $0x14] sm:$0xf]
      %v312 = vld [vmem:[%s263 + $0x18] sm:$0xf]
      %v313 = vld [vmem:[%s263 + $0x1c] sm:$0xf]
      %v314 = vld [vmem:[%s263 + $0x20] sm:$0xf]
      %v315 = vld [vmem:[%s263 + $0x24] sm:$0xf]
      %v316 = vld [vmem:[%s263 + $0x28] sm:$0x1]
      %vm317 = vsmask.f32 3328
      %vm318 = vsmask.f32 7440
      %vm319 = vmor %vm317, %vm318
      %v321 = vshrl.u32 %v306, 16
      %v323 = vrot.slane %v321, 4
      %v324 = vshll.u32 %v306, 16
      %v326 = vrot.slane %v324, 5
      %v327 = vor.u32 %v323, %v326
      %v328 = vrot.slane %v327, 4
      %v330 = vshll.u32 %v307, 16
      %v332 = vrot.slane %v330, 5
      %v333 = vsel %vm319, %v328, %v332
      %v334 = vshrl.u32 %v307, 16
      %v336 = vrot.slane %v334, 4
      %v337 = vor.u32 %v336, %v332
      %v338 = vrot.slane %v337, 4
      %v340 = vshll.u32 %v308, 16
      %v342 = vrot.slane %v340, 5
      %v343 = vsel %vm319, %v338, %v342
      %v344 = vshrl.u32 %v308, 16
      %v346 = vrot.slane %v344, 4
      %v347 = vor.u32 %v346, %v342
      %v348 = vrot.slane %v347, 4
      %v350 = vshll.u32 %v309, 16
      %v352 = vrot.slane %v350, 5
      %v353 = vsel %vm319, %v348, %v352
      %v354 = vshrl.u32 %v309, 16
      %v356 = vrot.slane %v354, 4
      %v357 = vor.u32 %v356, %v352
      %v358 = vrot.slane %v357, 4
      %v360 = vshll.u32 %v310, 16
      %v362 = vrot.slane %v360, 5
      %v363 = vsel %vm319, %v358, %v362
      %v364 = vshrl.u32 %v310, 16
      %v366 = vrot.slane %v364, 4
      %v367 = vor.u32 %v366, %v362
      %v368 = vrot.slane %v367, 4
      %v370 = vshll.u32 %v311, 16
      %v372 = vrot.slane %v370, 5
      %v373 = vsel %vm319, %v368, %v372
      %v374 = vshrl.u32 %v311, 16
      %v376 = vrot.slane %v374, 4
      %v377 = vor.u32 %v376, %v372
      %v378 = vrot.slane %v377, 4
      %v380 = vshll.u32 %v312, 16
      %v382 = vrot.slane %v380, 5
      %v383 = vsel %vm319, %v378, %v382
      %v384 = vshrl.u32 %v312, 16
      %v386 = vrot.slane %v384, 4
      %v387 = vor.u32 %v386, %v382
      %v388 = vrot.slane %v387, 4
      %v390 = vshll.u32 %v313, 16
      %v392 = vrot.slane %v390, 5
      %v393 = vsel %vm319, %v388, %v392
      %v394 = vshrl.u32 %v313, 16
      %v396 = vrot.slane %v394, 4
      %v397 = vor.u32 %v396, %v392
      %v398 = vrot.slane %v397, 4
      %v400 = vshll.u32 %v314, 16
      %v402 = vrot.slane %v400, 5
      %v403 = vsel %vm319, %v398, %v402
      %v404 = vshrl.u32 %v314, 16
      %v406 = vrot.slane %v404, 4
      %v407 = vor.u32 %v406, %v402
      %v408 = vrot.slane %v407, 4
      %v410 = vshll.u32 %v315, 16
      %v412 = vrot.slane %v410, 5
      %v413 = vsel %vm319, %v408, %v412
      %v414 = vshrl.u32 %v315, 16
      %v416 = vrot.slane %v414, 4
      %v417 = vor.u32 %v416, %v412
      %v418 = vrot.slane %v417, 4
      %v420 = vshll.u32 %v316, 16
      %v422 = vrot.slane %v420, 5
      %v423 = vsel %vm319, %v418, %v422
      %424 = vrot.lane.b32.xlu0 %v333, 16
      %v425 = vpop.permute.xlu0 %424
      %426 = vrot.lane.b32.xlu0 %v343, 16
      %v427 = vpop.permute.xlu0 %426
      %428 = vrot.lane.b32.xlu0 %v353, 16
      %v429 = vpop.permute.xlu0 %428
      %430 = vrot.lane.b32.xlu0 %v363, 16
      %v431 = vpop.permute.xlu0 %430
      %432 = vrot.lane.b32.xlu0 %v373, 16
      %v433 = vpop.permute.xlu0 %432
      %434 = vrot.lane.b32.xlu0 %v383, 16
      %v435 = vpop.permute.xlu0 %434
      %436 = vrot.lane.b32.xlu0 %v393, 16
      %v437 = vpop.permute.xlu0 %436
      %438 = vrot.lane.b32.xlu0 %v403, 16
      %v439 = vpop.permute.xlu0 %438
      %440 = vrot.lane.b32.xlu0 %v413, 16
      %v441 = vpop.permute.xlu0 %440
      %442 = vrot.lane.b32.xlu0 %v423, 16
      %v443 = vpop.permute.xlu0 %442
      %vm454 = vcmask 257152
      %455 = vst.msk [vmem:[#allocation2] sm:$0xf] %vm454, %v425
      %456 = vst.msk [vmem:[#allocation2 + $0x8] sm:$0xf] %vm454, %v427
      %457 = vst.msk [vmem:[#allocation2 + $0x10] sm:$0xf] %vm454, %v429
      %458 = vst.msk [vmem:[#allocation2 + $0x18] sm:$0xf] %vm454, %v431
      %459 = vst.msk [vmem:[#allocation2 + $0x20] sm:$0xf] %vm454, %v433
      %460 = vst.msk [vmem:[#allocation2 + $0x28] sm:$0xf] %vm454, %v435
      %461 = vst.msk [vmem:[#allocation2 + $0x30] sm:$0xf] %vm454, %v437
      %462 = vst.msk [vmem:[#allocation2 + $0x38] sm:$0xf] %vm454, %v439
      %463 = vst.msk [vmem:[#allocation2 + $0x40] sm:$0xf] %vm454, %v441
      %464 = vst.msk [vmem:[#allocation2 + $0x48] sm:$0xf] %vm454, %v443
      %v465 = vld [vmem:[%s263] sm:$0xe]
      %v466 = vld [vmem:[%s263 + $0x4] sm:$0xf]
      %v467 = vld [vmem:[%s263 + $0x8] sm:$0xf]
      %v468 = vld [vmem:[%s263 + $0xc] sm:$0xf]
      %v469 = vld [vmem:[%s263 + $0x10] sm:$0xf]
      %v470 = vld [vmem:[%s263 + $0x14] sm:$0xf]
      %v471 = vld [vmem:[%s263 + $0x18] sm:$0xf]
      %v472 = vld [vmem:[%s263 + $0x1c] sm:$0xf]
      %v473 = vld [vmem:[%s263 + $0x20] sm:$0xf]
      %v474 = vld [vmem:[%s263 + $0x24] sm:$0xf]
      %v475 = vld [vmem:[%s263 + $0x28] sm:$0x1]
      %vm487 = vcmask 1042432
      %vm488 = vcmask 1046532
      %vm489 = vmor %vm487, %vm488
      %v490 = vrot.slane %v465, 5
      %v491 = vrot.slane %v490, 4
      %v492 = vrot.slane %v466, 5
      %v493 = vsel %vm489, %v491, %v492
      %v494 = vrot.slane %v492, 4
      %v495 = vrot.slane %v467, 5
      %v496 = vsel %vm489, %v494, %v495
      %v497 = vrot.slane %v495, 4
      %v498 = vrot.slane %v468, 5
      %v499 = vsel %vm489, %v497, %v498
      %v500 = vrot.slane %v498, 4
      %v501 = vrot.slane %v469, 5
      %v502 = vsel %vm489, %v500, %v501
      %v503 = vrot.slane %v501, 4
      %v504 = vrot.slane %v470, 5
      %v505 = vsel %vm489, %v503, %v504
      %v506 = vrot.slane %v504, 4
      %v507 = vrot.slane %v471, 5
      %v508 = vsel %vm489, %v506, %v507
      %v509 = vrot.slane %v507, 4
      %v510 = vrot.slane %v472, 5
      %v511 = vsel %vm489, %v509, %v510
      %v512 = vrot.slane %v510, 4
      %v513 = vrot.slane %v473, 5
      %v514 = vsel %vm489, %v512, %v513
      %v515 = vrot.slane %v513, 4
      %v516 = vrot.slane %v474, 5
      %v517 = vsel %vm489, %v515, %v516
      %v518 = vrot.slane %v516, 4
      %v519 = vrot.slane %v475, 5
      %v520 = vsel %vm489, %v518, %v519
      %521 = vrot.lane.b32.xlu0 %v493, 32
      %v522 = vpop.permute.xlu0 %521
      %523 = vrot.lane.b32.xlu0 %v496, 32
      %v524 = vpop.permute.xlu0 %523
      %525 = vrot.lane.b32.xlu0 %v499, 32
      %v526 = vpop.permute.xlu0 %525
      %527 = vrot.lane.b32.xlu0 %v502, 32
      %v528 = vpop.permute.xlu0 %527
      %529 = vrot.lane.b32.xlu0 %v505, 32
      %v530 = vpop.permute.xlu0 %529
      %531 = vrot.lane.b32.xlu0 %v508, 32
      %v532 = vpop.permute.xlu0 %531
      %533 = vrot.lane.b32.xlu0 %v511, 32
      %v534 = vpop.permute.xlu0 %533
      %535 = vrot.lane.b32.xlu0 %v514, 32
      %v536 = vpop.permute.xlu0 %535
      %537 = vrot.lane.b32.xlu0 %v517, 32
      %v538 = vpop.permute.xlu0 %537
      %539 = vrot.lane.b32.xlu0 %v520, 32
      %v540 = vpop.permute.xlu0 %539
      %vm551 = vcmask 388352
      %552 = vst.msk [vmem:[#allocation2] sm:$0xf] %vm551, %v522
      %553 = vst.msk [vmem:[#allocation2 + $0x8] sm:$0xf] %vm551, %v524
      %554 = vst.msk [vmem:[#allocation2 + $0x10] sm:$0xf] %vm551, %v526
      %555 = vst.msk [vmem:[#allocation2 + $0x18] sm:$0xf] %vm551, %v528
      %556 = vst.msk [vmem:[#allocation2 + $0x20] sm:$0xf] %vm551, %v530
      %557 = vst.msk [vmem:[#allocation2 + $0x28] sm:$0xf] %vm551, %v532
      %558 = vst.msk [vmem:[#allocation2 + $0x30] sm:$0xf] %vm551, %v534
      %559 = vst.msk [vmem:[#allocation2 + $0x38] sm:$0xf] %vm551, %v536
      %560 = vst.msk [vmem:[#allocation2 + $0x40] sm:$0xf] %vm551, %v538
      %561 = vst.msk [vmem:[#allocation2 + $0x48] sm:$0xf] %vm551, %v540
      %v562 = vld [vmem:[%s263 + $0x4] sm:$0xe]
      %v563 = vld [vmem:[%s263 + $0x8] sm:$0xf]
      %v564 = vld [vmem:[%s263 + $0xc] sm:$0xf]
      %v565 = vld [vmem:[%s263 + $0x10] sm:$0xf]
      %v566 = vld [vmem:[%s263 + $0x14] sm:$0xf]
      %v567 = vld [vmem:[%s263 + $0x18] sm:$0xf]
      %v568 = vld [vmem:[%s263 + $0x1c] sm:$0xf]
      %v569 = vld [vmem:[%s263 + $0x20] sm:$0xf]
      %v570 = vld [vmem:[%s263 + $0x24] sm:$0xf]
      %v571 = vld [vmem:[%s263 + $0x28] sm:$0xf]
      %v572 = vld [vmem:[%s263 + $0x2c] sm:$0x1]
      %v584 = vrot.slane %v562, 5
      %v585 = vrot.slane %v584, 4
      %v586 = vrot.slane %v563, 5
      %v587 = vsel %vm489, %v585, %v586
      %v588 = vrot.slane %v586, 4
      %v589 = vrot.slane %v564, 5
      %v590 = vsel %vm489, %v588, %v589
      %v591 = vrot.slane %v589, 4
      %v592 = vrot.slane %v565, 5
      %v593 = vsel %vm489, %v591, %v592
      %v594 = vrot.slane %v592, 4
      %v595 = vrot.slane %v566, 5
      %v596 = vsel %vm489, %v594, %v595
      %v597 = vrot.slane %v595, 4
      %v598 = vrot.slane %v567, 5
      %v599 = vsel %vm489, %v597, %v598
      %v600 = vrot.slane %v598, 4
      %v601 = vrot.slane %v568, 5
      %v602 = vsel %vm489, %v600, %v601
      %v603 = vrot.slane %v601, 4
      %v604 = vrot.slane %v569, 5
      %v605 = vsel %vm489, %v603, %v604
      %v606 = vrot.slane %v604, 4
      %v607 = vrot.slane %v570, 5
      %v608 = vsel %vm489, %v606, %v607
      %v609 = vrot.slane %v607, 4
      %v610 = vrot.slane %v571, 5
      %v611 = vsel %vm489, %v609, %v610
      %v612 = vrot.slane %v610, 4
      %v613 = vrot.slane %v572, 5
      %v614 = vsel %vm489, %v612, %v613
      %615 = vrot.lane.b32.xlu0 %v587, 48
      %v616 = vpop.permute.xlu0 %615
      %617 = vrot.lane.b32.xlu0 %v590, 48
      %v618 = vpop.permute.xlu0 %617
      %619 = vrot.lane.b32.xlu0 %v593, 48
      %v620 = vpop.permute.xlu0 %619
      %621 = vrot.lane.b32.xlu0 %v596, 48
      %v622 = vpop.permute.xlu0 %621
      %623 = vrot.lane.b32.xlu0 %v599, 48
      %v624 = vpop.permute.xlu0 %623
      %625 = vrot.lane.b32.xlu0 %v602, 48
      %v626 = vpop.permute.xlu0 %625
      %627 = vrot.lane.b32.xlu0 %v605, 48
      %v628 = vpop.permute.xlu0 %627
      %629 = vrot.lane.b32.xlu0 %v608, 48
      %v630 = vpop.permute.xlu0 %629
      %631 = vrot.lane.b32.xlu0 %v611, 48
      %v632 = vpop.permute.xlu0 %631
      %633 = vrot.lane.b32.xlu0 %v614, 48
      %v634 = vpop.permute.xlu0 %633
      %vm645 = vcmask 519552
      %646 = vst.msk [vmem:[#allocation2] sm:$0xf] %vm645, %v616
      %647 = vst.msk [vmem:[#allocation2 + $0x8] sm:$0xf] %vm645, %v618
      %648 = vst.msk [vmem:[#allocation2 + $0x10] sm:$0xf] %vm645, %v620
      %649 = vst.msk [vmem:[#allocation2 + $0x18] sm:$0xf] %vm645, %v622
      %650 = vst.msk [vmem:[#allocation2 + $0x20] sm:$0xf] %vm645, %v624
      %651 = vst.msk [vmem:[#allocation2 + $0x28] sm:$0xf] %vm645, %v626
      %652 = vst.msk [vmem:[#allocation2 + $0x30] sm:$0xf] %vm645, %v628
      %653 = vst.msk [vmem:[#allocation2 + $0x38] sm:$0xf] %vm645, %v630
      %654 = vst.msk [vmem:[#allocation2 + $0x40] sm:$0xf] %vm645, %v632
      %655 = vst.msk [vmem:[#allocation2 + $0x48] sm:$0xf] %vm645, %v634
      %v656 = vld [vmem:[%s263 + $0x4] sm:$0xe]
      %v657 = vld [vmem:[%s263 + $0x8] sm:$0xf]
      %v658 = vld [vmem:[%s263 + $0xc] sm:$0xf]
      %v659 = vld [vmem:[%s263 + $0x10] sm:$0xf]
      %v660 = vld [vmem:[%s263 + $0x14] sm:$0xf]
      %v661 = vld [vmem:[%s263 + $0x18] sm:$0xf]
      %v662 = vld [vmem:[%s263 + $0x1c] sm:$0xf]
      %v663 = vld [vmem:[%s263 + $0x20] sm:$0xf]
      %v664 = vld [vmem:[%s263 + $0x24] sm:$0xf]
      %v665 = vld [vmem:[%s263 + $0x28] sm:$0xf]
      %v666 = vld [vmem:[%s263 + $0x2c] sm:$0x3]
      %vm667 = vsmask.f32 2304
      %vm668 = vsmask.f32 6416
      %vm669 = vmor %vm667, %vm668
      %v671 = vshrl.u32 %v656, 16
      %v673 = vrot.slane %v671, 5
      %v674 = vshll.u32 %v656, 16
      %v676 = vrot.slane %v674, 6
      %v677 = vor.u32 %v673, %v676
      %v678 = vrot.slane %v677, 4
      %v680 = vshrl.u32 %v657, 16
      %v682 = vrot.slane %v680, 5
      %v683 = vshll.u32 %v657, 16
      %v685 = vrot.slane %v683, 6
      %v686 = vor.u32 %v682, %v685
      %v687 = vsel %vm669, %v678, %v686
      %v688 = vrot.slane %v686, 4
      %v690 = vshrl.u32 %v658, 16
      %v692 = vrot.slane %v690, 5
      %v693 = vshll.u32 %v658, 16
      %v695 = vrot.slane %v693, 6
      %v696 = vor.u32 %v692, %v695
      %v697 = vsel %vm669, %v688, %v696
      %v698 = vrot.slane %v696, 4
      %v700 = vshrl.u32 %v659, 16
      %v702 = vrot.slane %v700, 5
      %v703 = vshll.u32 %v659, 16
      %v705 = vrot.slane %v703, 6
      %v706 = vor.u32 %v702, %v705
      %v707 = vsel %vm669, %v698, %v706
      %v708 = vrot.slane %v706, 4
      %v710 = vshrl.u32 %v660, 16
      %v712 = vrot.slane %v710, 5
      %v713 = vshll.u32 %v660, 16
      %v715 = vrot.slane %v713, 6
      %v716 = vor.u32 %v712, %v715
      %v717 = vsel %vm669, %v708, %v716
      %v718 = vrot.slane %v716, 4
      %v720 = vshrl.u32 %v661, 16
      %v722 = vrot.slane %v720, 5
      %v723 = vshll.u32 %v661, 16
      %v725 = vrot.slane %v723, 6
      %v726 = vor.u32 %v722, %v725
      %v727 = vsel %vm669, %v718, %v726
      %v728 = vrot.slane %v726, 4
      %v730 = vshrl.u32 %v662, 16
      %v732 = vrot.slane %v730, 5
      %v733 = vshll.u32 %v662, 16
      %v735 = vrot.slane %v733, 6
      %v736 = vor.u32 %v732, %v735
      %v737 = vsel %vm669, %v728, %v736
      %v738 = vrot.slane %v736, 4
      %v740 = vshrl.u32 %v663, 16
      %v742 = vrot.slane %v740, 5
      %v743 = vshll.u32 %v663, 16
      %v745 = vrot.slane %v743, 6
      %v746 = vor.u32 %v742, %v745
      %v747 = vsel %vm669, %v738, %v746
      %v748 = vrot.slane %v746, 4
      %v750 = vshrl.u32 %v664, 16
      %v752 = vrot.slane %v750, 5
      %v753 = vshll.u32 %v664, 16
      %v755 = vrot.slane %v753, 6
      %v756 = vor.u32 %v752, %v755
      %v757 = vsel %vm669, %v748, %v756
      %v758 = vrot.slane %v756, 4
      %v760 = vshrl.u32 %v665, 16
      %v762 = vrot.slane %v760, 5
      %v763 = vshll.u32 %v665, 16
      %v765 = vrot.slane %v763, 6
      %v766 = vor.u32 %v762, %v765
      %v767 = vsel %vm669, %v758, %v766
      %v768 = vrot.slane %v766, 4
      %v770 = vshrl.u32 %v666, 16
      %v772 = vrot.slane %v770, 5
      %v773 = vshll.u32 %v666, 16
      %v775 = vrot.slane %v773, 6
      %v776 = vor.u32 %v772, %v775
      %v777 = vsel %vm669, %v768, %v776
      %778 = vrot.lane.b32.xlu0 %v687, 64
      %v779 = vpop.permute.xlu0 %778
      %780 = vrot.lane.b32.xlu0 %v697, 64
      %v781 = vpop.permute.xlu0 %780
      %782 = vrot.lane.b32.xlu0 %v707, 64
      %v783 = vpop.permute.xlu0 %782
      %784 = vrot.lane.b32.xlu0 %v717, 64
      %v785 = vpop.permute.xlu0 %784
      %786 = vrot.lane.b32.xlu0 %v727, 64
      %v787 = vpop.permute.xlu0 %786
      %788 = vrot.lane.b32.xlu0 %v737, 64
      %v789 = vpop.permute.xlu0 %788
      %790 = vrot.lane.b32.xlu0 %v747, 64
      %v791 = vpop.permute.xlu0 %790
      %792 = vrot.lane.b32.xlu0 %v757, 64
      %v793 = vpop.permute.xlu0 %792
      %794 = vrot.lane.b32.xlu0 %v767, 64
      %v795 = vpop.permute.xlu0 %794
      %796 = vrot.lane.b32.xlu0 %v777, 64
      %v797 = vpop.permute.xlu0 %796
      %vm808 = vcmask 650752
      %809 = vst.msk [vmem:[#allocation2] sm:$0xf] %vm808, %v779
      %810 = vst.msk [vmem:[#allocation2 + $0x8] sm:$0xf] %vm808, %v781
      %811 = vst.msk [vmem:[#allocation2 + $0x10] sm:$0xf] %vm808, %v783
      %812 = vst.msk [vmem:[#allocation2 + $0x18] sm:$0xf] %vm808, %v785
      %813 = vst.msk [vmem:[#allocation2 + $0x20] sm:$0xf] %vm808, %v787
      %814 = vst.msk [vmem:[#allocation2 + $0x28] sm:$0xf] %vm808, %v789
      %815 = vst.msk [vmem:[#allocation2 + $0x30] sm:$0xf] %vm808, %v791
      %816 = vst.msk [vmem:[#allocation2 + $0x38] sm:$0xf] %vm808, %v793
      %817 = vst.msk [vmem:[#allocation2 + $0x40] sm:$0xf] %vm808, %v795
      %818 = vst.msk [vmem:[#allocation2 + $0x48] sm:$0xf] %vm808, %v797
      %v819 = vld [vmem:[%s263 + $0x4] sm:$0xc]
      %v820 = vld [vmem:[%s263 + $0x8] sm:$0xf]
      %v821 = vld [vmem:[%s263 + $0xc] sm:$0xf]
      %v822 = vld [vmem:[%s263 + $0x10] sm:$0xf]
      %v823 = vld [vmem:[%s263 + $0x14] sm:$0xf]
      %v824 = vld [vmem:[%s263 + $0x18] sm:$0xf]
      %v825 = vld [vmem:[%s263 + $0x1c] sm:$0xf]
      %v826 = vld [vmem:[%s263 + $0x20] sm:$0xf]
      %v827 = vld [vmem:[%s263 + $0x24] sm:$0xf]
      %v828 = vld [vmem:[%s263 + $0x28] sm:$0xf]
      %v829 = vld [vmem:[%s263 + $0x2c] sm:$0x3]
      %vm841 = vcmask 1041408
      %vm842 = vcmask 1045508
      %vm843 = vmor %vm841, %vm842
      %v844 = vrot.slane %v819, 6
      %v845 = vrot.slane %v844, 4
      %v846 = vrot.slane %v820, 6
      %v847 = vsel %vm843, %v845, %v846
      %v848 = vrot.slane %v846, 4
      %v849 = vrot.slane %v821, 6
      %v850 = vsel %vm843, %v848, %v849
      %v851 = vrot.slane %v849, 4
      %v852 = vrot.slane %v822, 6
      %v853 = vsel %vm843, %v851, %v852
      %v854 = vrot.slane %v852, 4
      %v855 = vrot.slane %v823, 6
      %v856 = vsel %vm843, %v854, %v855
      %v857 = vrot.slane %v855, 4
      %v858 = vrot.slane %v824, 6
      %v859 = vsel %vm843, %v857, %v858
      %v860 = vrot.slane %v858, 4
      %v861 = vrot.slane %v825, 6
      %v862 = vsel %vm843, %v860, %v861
      %v863 = vrot.slane %v861, 4
      %v864 = vrot.slane %v826, 6
      %v865 = vsel %vm843, %v863, %v864
      %v866 = vrot.slane %v864, 4
      %v867 = vrot.slane %v827, 6
      %v868 = vsel %vm843, %v866, %v867
      %v869 = vrot.slane %v867, 4
      %v870 = vrot.slane %v828, 6
      %v871 = vsel %vm843, %v869, %v870
      %v872 = vrot.slane %v870, 4
      %v873 = vrot.slane %v829, 6
      %v874 = vsel %vm843, %v872, %v873
      %875 = vrot.lane.b32.xlu0 %v847, 80
      %v876 = vpop.permute.xlu0 %875
      %877 = vrot.lane.b32.xlu0 %v850, 80
      %v878 = vpop.permute.xlu0 %877
      %879 = vrot.lane.b32.xlu0 %v853, 80
      %v880 = vpop.permute.xlu0 %879
      %881 = vrot.lane.b32.xlu0 %v856, 80
      %v882 = vpop.permute.xlu0 %881
      %883 = vrot.lane.b32.xlu0 %v859, 80
      %v884 = vpop.permute.xlu0 %883
      %885 = vrot.lane.b32.xlu0 %v862, 80
      %v886 = vpop.permute.xlu0 %885
      %887 = vrot.lane.b32.xlu0 %v865, 80
      %v888 = vpop.permute.xlu0 %887
      %889 = vrot.lane.b32.xlu0 %v868, 80
      %v890 = vpop.permute.xlu0 %889
      %891 = vrot.lane.b32.xlu0 %v871, 80
      %v892 = vpop.permute.xlu0 %891
      %893 = vrot.lane.b32.xlu0 %v874, 80
      %v894 = vpop.permute.xlu0 %893
      %vm905 = vcmask 781952
      %906 = vst.msk [vmem:[#allocation2] sm:$0xf] %vm905, %v876
      %907 = vst.msk [vmem:[#allocation2 + $0x8] sm:$0xf] %vm905, %v878
      %908 = vst.msk [vmem:[#allocation2 + $0x10] sm:$0xf] %vm905, %v880
      %909 = vst.msk [vmem:[#allocation2 + $0x18] sm:$0xf] %vm905, %v882
      %910 = vst.msk [vmem:[#allocation2 + $0x20] sm:$0xf] %vm905, %v884
      %911 = vst.msk [vmem:[#allocation2 + $0x28] sm:$0xf] %vm905, %v886
      %912 = vst.msk [vmem:[#allocation2 + $0x30] sm:$0xf] %vm905, %v888
      %913 = vst.msk [vmem:[#allocation2 + $0x38] sm:$0xf] %vm905, %v890
      %914 = vst.msk [vmem:[#allocation2 + $0x40] sm:$0xf] %vm905, %v892
      %915 = vst.msk [vmem:[#allocation2 + $0x48] sm:$0xf] %vm905, %v894
      %v916 = vld [vmem:[%s263 + $0x8] sm:$0xc]
      %v917 = vld [vmem:[%s263 + $0xc] sm:$0xf]
      %v918 = vld [vmem:[%s263 + $0x10] sm:$0xf]
      %v919 = vld [vmem:[%s263 + $0x14] sm:$0xf]
      %v920 = vld [vmem:[%s263 + $0x18] sm:$0xf]
      %v921 = vld [vmem:[%s263 + $0x1c] sm:$0xf]
      %v922 = vld [vmem:[%s263 + $0x20] sm:$0xf]
      %v923 = vld [vmem:[%s263 + $0x24] sm:$0xf]
      %v924 = vld [vmem:[%s263 + $0x28] sm:$0xf]
      %v925 = vld [vmem:[%s263 + $0x2c] sm:$0xf]
      %v926 = vld [vmem:[%s263 + $0x30] sm:$0x3]
      %v938 = vrot.slane %v916, 6
      %v939 = vrot.slane %v938, 4
      %v940 = vrot.slane %v917, 6
      %v941 = vsel %vm843, %v939, %v940
      %v942 = vrot.slane %v940, 4
      %v943 = vrot.slane %v918, 6
      %v944 = vsel %vm843, %v942, %v943
      %v945 = vrot.slane %v943, 4
      %v946 = vrot.slane %v919, 6
      %v947 = vsel %vm843, %v945, %v946
      %v948 = vrot.slane %v946, 4
      %v949 = vrot.slane %v920, 6
      %v950 = vsel %vm843, %v948, %v949
      %v951 = vrot.slane %v949, 4
      %v952 = vrot.slane %v921, 6
      %v953 = vsel %vm843, %v951, %v952
      %v954 = vrot.slane %v952, 4
      %v955 = vrot.slane %v922, 6
      %v956 = vsel %vm843, %v954, %v955
      %v957 = vrot.slane %v955, 4
      %v958 = vrot.slane %v923, 6
      %v959 = vsel %vm843, %v957, %v958
      %v960 = vrot.slane %v958, 4
      %v961 = vrot.slane %v924, 6
      %v962 = vsel %vm843, %v960, %v961
      %v963 = vrot.slane %v961, 4
      %v964 = vrot.slane %v925, 6
      %v965 = vsel %vm843, %v963, %v964
      %v966 = vrot.slane %v964, 4
      %v967 = vrot.slane %v926, 6
      %v968 = vsel %vm843, %v966, %v967
      %969 = vrot.lane.b32.xlu0 %v941, 96
      %v970 = vpop.permute.xlu0 %969
      %971 = vrot.lane.b32.xlu0 %v944, 96
      %v972 = vpop.permute.xlu0 %971
      %973 = vrot.lane.b32.xlu0 %v947, 96
      %v974 = vpop.permute.xlu0 %973
      %975 = vrot.lane.b32.xlu0 %v950, 96
      %v976 = vpop.permute.xlu0 %975
      %977 = vrot.lane.b32.xlu0 %v953, 96
      %v978 = vpop.permute.xlu0 %977
      %979 = vrot.lane.b32.xlu0 %v956, 96
      %v980 = vpop.permute.xlu0 %979
      %981 = vrot.lane.b32.xlu0 %v959, 96
      %v982 = vpop.permute.xlu0 %981
      %983 = vrot.lane.b32.xlu0 %v962, 96
      %v984 = vpop.permute.xlu0 %983
      %985 = vrot.lane.b32.xlu0 %v965, 96
      %v986 = vpop.permute.xlu0 %985
      %987 = vrot.lane.b32.xlu0 %v968, 96
      %v988 = vpop.permute.xlu0 %987
      %vm999 = vcmask 913152
      %1000 = vst.msk [vmem:[#allocation2] sm:$0xf] %vm999, %v970
      %1001 = vst.msk [vmem:[#allocation2 + $0x8] sm:$0xf] %vm999, %v972
      %1002 = vst.msk [vmem:[#allocation2 + $0x10] sm:$0xf] %vm999, %v974
      %1003 = vst.msk [vmem:[#allocation2 + $0x18] sm:$0xf] %vm999, %v976
      %1004 = vst.msk [vmem:[#allocation2 + $0x20] sm:$0xf] %vm999, %v978
      %1005 = vst.msk [vmem:[#allocation2 + $0x28] sm:$0xf] %vm999, %v980
      %1006 = vst.msk [vmem:[#allocation2 + $0x30] sm:$0xf] %vm999, %v982
      %1007 = vst.msk [vmem:[#allocation2 + $0x38] sm:$0xf] %vm999, %v984
      %1008 = vst.msk [vmem:[#allocation2 + $0x40] sm:$0xf] %vm999, %v986
      %1009 = vst.msk [vmem:[#allocation2 + $0x48] sm:$0xf] %vm999, %v988
      %v1010 = vld [vmem:[%s263 + $0x8] sm:$0xc]
      %v1011 = vld [vmem:[%s263 + $0xc] sm:$0xf]
      %v1012 = vld [vmem:[%s263 + $0x10] sm:$0xf]
      %v1013 = vld [vmem:[%s263 + $0x14] sm:$0xf]
      %v1014 = vld [vmem:[%s263 + $0x18] sm:$0xf]
      %v1015 = vld [vmem:[%s263 + $0x1c] sm:$0xf]
      %v1016 = vld [vmem:[%s263 + $0x20] sm:$0xf]
      %v1017 = vld [vmem:[%s263 + $0x24] sm:$0xf]
      %v1018 = vld [vmem:[%s263 + $0x28] sm:$0xf]
      %v1019 = vld [vmem:[%s263 + $0x2c] sm:$0xf]
      %v1020 = vld [vmem:[%s263 + $0x30] sm:$0x7]
      %vm1021 = vsmask.f32 1280
      %vm1022 = vsmask.f32 5392
      %vm1023 = vmor %vm1021, %vm1022
      %v1025 = vshrl.u32 %v1010, 16
      %v1027 = vrot.slane %v1025, 6
      %v1028 = vshll.u32 %v1010, 16
      %v1030 = vrot.slane %v1028, 7
      %v1031 = vor.u32 %v1027, %v1030
      %v1032 = vrot.slane %v1031, 4
      %v1034 = vshrl.u32 %v1011, 16
      %v1036 = vrot.slane %v1034, 6
      %v1037 = vshll.u32 %v1011, 16
      %v1039 = vrot.slane %v1037, 7
      %v1040 = vor.u32 %v1036, %v1039
      %v1041 = vsel %vm1023, %v1032, %v1040
      %v1042 = vrot.slane %v1040, 4
      %v1044 = vshrl.u32 %v1012, 16
      %v1046 = vrot.slane %v1044, 6
      %v1047 = vshll.u32 %v1012, 16
      %v1049 = vrot.slane %v1047, 7
      %v1050 = vor.u32 %v1046, %v1049
      %v1051 = vsel %vm1023, %v1042, %v1050
      %v1052 = vrot.slane %v1050, 4
      %v1054 = vshrl.u32 %v1013, 16
      %v1056 = vrot.slane %v1054, 6
      %v1057 = vshll.u32 %v1013, 16
      %v1059 = vrot.slane %v1057, 7
      %v1060 = vor.u32 %v1056, %v1059
      %v1061 = vsel %vm1023, %v1052, %v1060
      %v1062 = vrot.slane %v1060, 4
      %v1064 = vshrl.u32 %v1014, 16
      %v1066 = vrot.slane %v1064, 6
      %v1067 = vshll.u32 %v1014, 16
      %v1069 = vrot.slane %v1067, 7
      %v1070 = vor.u32 %v1066, %v1069
      %v1071 = vsel %vm1023, %v1062, %v1070
      %v1072 = vrot.slane %v1070, 4
      %v1074 = vshrl.u32 %v1015, 16
      %v1076 = vrot.slane %v1074, 6
      %v1077 = vshll.u32 %v1015, 16
      %v1079 = vrot.slane %v1077, 7
      %v1080 = vor.u32 %v1076, %v1079
      %v1081 = vsel %vm1023, %v1072, %v1080
      %v1082 = vrot.slane %v1080, 4
      %v1084 = vshrl.u32 %v1016, 16
      %v1086 = vrot.slane %v1084, 6
      %v1087 = vshll.u32 %v1016, 16
      %v1089 = vrot.slane %v1087, 7
      %v1090 = vor.u32 %v1086, %v1089
      %v1091 = vsel %vm1023, %v1082, %v1090
      %v1092 = vrot.slane %v1090, 4
      %v1094 = vshrl.u32 %v1017, 16
      %v1096 = vrot.slane %v1094, 6
      %v1097 = vshll.u32 %v1017, 16
      %v1099 = vrot.slane %v1097, 7
      %v1100 = vor.u32 %v1096, %v1099
      %v1101 = vsel %vm1023, %v1092, %v1100
      %v1102 = vrot.slane %v1100, 4
      %v1104 = vshrl.u32 %v1018, 16
      %v1106 = vrot.slane %v1104, 6
      %v1107 = vshll.u32 %v1018, 16
      %v1109 = vrot.slane %v1107, 7
      %v1110 = vor.u32 %v1106, %v1109
      %v1111 = vsel %vm1023, %v1102, %v1110
      %v1112 = vrot.slane %v1110, 4
      %v1114 = vshrl.u32 %v1019, 16
      %v1116 = vrot.slane %v1114, 6
      %v1117 = vshll.u32 %v1019, 16
      %v1119 = vrot.slane %v1117, 7
      %v1120 = vor.u32 %v1116, %v1119
      %v1121 = vsel %vm1023, %v1112, %v1120
      %v1122 = vrot.slane %v1120, 4
      %v1124 = vshrl.u32 %v1020, 16
      %v1126 = vrot.slane %v1124, 6
      %v1127 = vshll.u32 %v1020, 16
      %v1129 = vrot.slane %v1127, 7
      %v1130 = vor.u32 %v1126, %v1129
      %v1131 = vsel %vm1023, %v1122, %v1130
      %1132 = vrot.lane.b32.xlu0 %v1041, 112
      %v1133 = vpop.permute.xlu0 %1132
      %1134 = vrot.lane.b32.xlu0 %v1051, 112
      %v1135 = vpop.permute.xlu0 %1134
      %1136 = vrot.lane.b32.xlu0 %v1061, 112
      %v1137 = vpop.permute.xlu0 %1136
      %1138 = vrot.lane.b32.xlu0 %v1071, 112
      %v1139 = vpop.permute.xlu0 %1138
      %1140 = vrot.lane.b32.xlu0 %v1081, 112
      %v1141 = vpop.permute.xlu0 %1140
      %1142 = vrot.lane.b32.xlu0 %v1091, 112
      %v1143 = vpop.permute.xlu0 %1142
      %1144 = vrot.lane.b32.xlu0 %v1101, 112
      %v1145 = vpop.permute.xlu0 %1144
      %1146 = vrot.lane.b32.xlu0 %v1111, 112
      %v1147 = vpop.permute.xlu0 %1146
      %1148 = vrot.lane.b32.xlu0 %v1121, 112
      %v1149 = vpop.permute.xlu0 %1148
      %1150 = vrot.lane.b32.xlu0 %v1131, 112
      %v1151 = vpop.permute.xlu0 %1150
      %vm1162 = vcmask 1044352
      %1163 = vst.msk [vmem:[#allocation2] sm:$0xf] %vm1162, %v1133
      %1164 = vst.msk [vmem:[#allocation2 + $0x8] sm:$0xf] %vm1162, %v1135
      %1165 = vst.msk [vmem:[#allocation2 + $0x10] sm:$0xf] %vm1162, %v1137
      %1166 = vst.msk [vmem:[#allocation2 + $0x18] sm:$0xf] %vm1162, %v1139
      %1167 = vst.msk [vmem:[#allocation2 + $0x20] sm:$0xf] %vm1162, %v1141
      %1168 = vst.msk [vmem:[#allocation2 + $0x28] sm:$0xf] %vm1162, %v1143
      %1169 = vst.msk [vmem:[#allocation2 + $0x30] sm:$0xf] %vm1162, %v1145
      %1170 = vst.msk [vmem:[#allocation2 + $0x38] sm:$0xf] %vm1162, %v1147
      %1171 = vst.msk [vmem:[#allocation2 + $0x40] sm:$0xf] %vm1162, %v1149
      %1172 = vst.msk [vmem:[#allocation2 + $0x48] sm:$0xf] %vm1162, %v1151
      %v1173 = vld [vmem:[%s263 + $0x8] sm:$0x8]
      %v1174 = vld [vmem:[%s263 + $0xc] sm:$0xf]
      %v1175 = vld [vmem:[%s263 + $0x10] sm:$0xf]
      %v1176 = vld [vmem:[%s263 + $0x14] sm:$0xf]
      %v1177 = vld [vmem:[%s263 + $0x18] sm:$0xf]
      %v1178 = vld [vmem:[%s263 + $0x1c] sm:$0xf]
      %v1179 = vld [vmem:[%s263 + $0x20] sm:$0xf]
      %v1180 = vld [vmem:[%s263 + $0x24] sm:$0xf]
      %v1181 = vld [vmem:[%s263 + $0x28] sm:$0xf]
      %v1182 = vld [vmem:[%s263 + $0x2c] sm:$0xf]
      %v1183 = vld [vmem:[%s263 + $0x30] sm:$0x7]
      %vm1195 = vcmask 1040384
      %vm1196 = vcmask 1044484
      %vm1197 = vmor %vm1195, %vm1196
      %v1198 = vrot.slane %v1173, 7
      %v1199 = vrot.slane %v1198, 4
      %v1200 = vrot.slane %v1174, 7
      %v1201 = vsel %vm1197, %v1199, %v1200
      %v1202 = vrot.slane %v1200, 4
      %v1203 = vrot.slane %v1175, 7
      %v1204 = vsel %vm1197, %v1202, %v1203
      %v1205 = vrot.slane %v1203, 4
      %v1206 = vrot.slane %v1176, 7
      %v1207 = vsel %vm1197, %v1205, %v1206
      %v1208 = vrot.slane %v1206, 4
      %v1209 = vrot.slane %v1177, 7
      %v1210 = vsel %vm1197, %v1208, %v1209
      %v1211 = vrot.slane %v1209, 4
      %v1212 = vrot.slane %v1178, 7
      %v1213 = vsel %vm1197, %v1211, %v1212
      %v1214 = vrot.slane %v1212, 4
      %v1215 = vrot.slane %v1179, 7
      %v1216 = vsel %vm1197, %v1214, %v1215
      %v1217 = vrot.slane %v1215, 4
      %v1218 = vrot.slane %v1180, 7
      %v1219 = vsel %vm1197, %v1217, %v1218
      %v1220 = vrot.slane %v1218, 4
      %v1221 = vrot.slane %v1181, 7
      %v1222 = vsel %vm1197, %v1220, %v1221
      %v1223 = vrot.slane %v1221, 4
      %v1224 = vrot.slane %v1182, 7
      %v1225 = vsel %vm1197, %v1223, %v1224
      %v1226 = vrot.slane %v1224, 4
      %v1227 = vrot.slane %v1183, 7
      %v1228 = vsel %vm1197, %v1226, %v1227
      %1239 = vst.msk [vmem:[#allocation2 + $0x4] sm:$0xf] %vm295, %v1201
      %1240 = vst.msk [vmem:[#allocation2 + $0xc] sm:$0xf] %vm295, %v1204
      %1241 = vst.msk [vmem:[#allocation2 + $0x14] sm:$0xf] %vm295, %v1207
      %1242 = vst.msk [vmem:[#allocation2 + $0x1c] sm:$0xf] %vm295, %v1210
      %1243 = vst.msk [vmem:[#allocation2 + $0x24] sm:$0xf] %vm295, %v1213
      %1244 = vst.msk [vmem:[#allocation2 + $0x2c] sm:$0xf] %vm295, %v1216
      %1245 = vst.msk [vmem:[#allocation2 + $0x34] sm:$0xf] %vm295, %v1219
      %1246 = vst.msk [vmem:[#allocation2 + $0x3c] sm:$0xf] %vm295, %v1222
      %1247 = vst.msk [vmem:[#allocation2 + $0x44] sm:$0xf] %vm295, %v1225
      %1248 = vst.msk [vmem:[#allocation2 + $0x4c] sm:$0xf] %vm295, %v1228
      %v1249 = vld [vmem:[#allocation2] sm:$0xff]
      %v1250 = vld [vmem:[#allocation2 + $0x8] sm:$0xff]
      %v1251 = vld [vmem:[#allocation2 + $0x10] sm:$0xff]
      %v1252 = vld [vmem:[#allocation2 + $0x18] sm:$0xff]
      %v1253 = vld [vmem:[#allocation2 + $0x20] sm:$0xff]
      %v1254 = vld [vmem:[#allocation2 + $0x28] sm:$0xff]
      %v1255 = vld [vmem:[#allocation2 + $0x30] sm:$0xff]
      %v1256 = vld [vmem:[#allocation2 + $0x38] sm:$0xff]
      %v1257 = vld [vmem:[#allocation2 + $0x40] sm:$0xff]
      %v1258 = vld [vmem:[#allocation2 + $0x48] sm:$0xff]
      %v1259 = vld [vmem:[%s1] sm:$0xf]
      %v1260 = vld [vmem:[%s1 + $0x4] sm:$0xf]
      %v1261 = vld [vmem:[%s1 + $0x8] sm:$0xf]
      %v1262 = vld [vmem:[%s1 + $0xc] sm:$0xf]
      %v1263 = vld [vmem:[%s1 + $0x10] sm:$0xf]
      %v1264 = vld [vmem:[%s1 + $0x14] sm:$0xf]
      %v1265 = vld [vmem:[%s1 + $0x18] sm:$0xf]
      %v1266 = vld [vmem:[%s1 + $0x1c] sm:$0xf]
      %v1267 = vld [vmem:[%s1 + $0x20] sm:$0xf]
      %v1268 = vld [vmem:[%s1 + $0x24] sm:$0xf]
      %v1269 = vld [vmem:[%s1 + $0x28] sm:$0xf]
      %v1270 = vld [vmem:[%s1 + $0x2c] sm:$0xf]
      %v1271 = vld [vmem:[%s1 + $0x30] sm:$0xf]
      %v1272 = vld [vmem:[%s1 + $0x34] sm:$0xf]
      %v1273 = vld [vmem:[%s1 + $0x38] sm:$0xf]
      %v1274 = vld [vmem:[%s1 + $0x3c] sm:$0xf]
      %v1275 = vld [vmem:[%s1 + $0x40] sm:$0xf]
      %v1276 = vld [vmem:[%s1 + $0x44] sm:$0xf]
      %v1287 = vunpack.c.l.b16 %v1249
      %v1288 = vunpack.c.h.b16 %v1249
      %v1289 = vunpack.c.l.b16 %v1250
      %v1290 = vunpack.c.h.b16 %v1250
      %v1291 = vunpack.c.l.b16 %v1251
      %v1292 = vunpack.c.h.b16 %v1251
      %v1293 = vunpack.c.l.b16 %v1252
      %v1294 = vunpack.c.h.b16 %v1252
      %v1295 = vunpack.c.l.b16 %v1253
      %v1296 = vunpack.c.h.b16 %v1253
      %v1297 = vunpack.c.l.b16 %v1254
      %v1298 = vunpack.c.h.b16 %v1254
      %v1299 = vunpack.c.l.b16 %v1255
      %v1300 = vunpack.c.h.b16 %v1255
      %v1301 = vunpack.c.l.b16 %v1256
      %v1302 = vunpack.c.h.b16 %v1256
      %v1303 = vunpack.c.l.b16 %v1257
      %v1304 = vunpack.c.h.b16 %v1257
      %v1305 = vunpack.c.l.b16 %v1258
      %v1306 = vunpack.c.h.b16 %v1258
      %v1307 = vpack.c.b16 %v1289, %v1287
      %v1308 = vpack.c.b16 %v1290, %v1288
      %v1309 = vpack.c.b16 %v1293, %v1291
      %v1310 = vpack.c.b16 %v1294, %v1292
      %v1311 = vpack.c.b16 %v1297, %v1295
      %v1312 = vpack.c.b16 %v1298, %v1296
      %v1313 = vpack.c.b16 %v1301, %v1299
      %v1314 = vpack.c.b16 %v1302, %v1300
      %v1315 = vpack.c.b16 %v1305, %v1303
      %v1316 = vpack.c.b16 %v1306, %v1304
      %v1340 = vunpack.c.l.b16 %v1259
      %v1341 = vunpack.c.l.b16 %v1260
      %v1342 = vunpack.c.l.b16 %v1261
      %v1343 = vunpack.c.l.b16 %v1262
      %v1344 = vunpack.c.l.b16 %v1263
      %v1345 = vunpack.c.l.b16 %v1264
      %v1346 = vunpack.c.l.b16 %v1265
      %v1347 = vunpack.c.l.b16 %v1266
      %v1348 = vunpack.c.l.b16 %v1267
      %v1349 = vunpack.c.l.b16 %v1268
      %v1350 = vunpack.c.l.b16 %v1269
      %v1351 = vunpack.c.l.b16 %v1270
      %v1352 = vunpack.c.l.b16 %v1271
      %v1353 = vunpack.c.l.b16 %v1272
      %v1354 = vunpack.c.l.b16 %v1273
      %v1355 = vunpack.c.l.b16 %v1274
      %v1356 = vunpack.c.l.b16 %v1275
      %v1357 = vunpack.c.l.b16 %v1276
      %v1358 = vpack.c.b16 %v1341, %v1340
      %v1359 = vpack.c.b16 %v1343, %v1342
      %v1360 = vpack.c.b16 %v1345, %v1344
      %v1361 = vpack.c.b16 %v1347, %v1346
      %v1362 = vpack.c.b16 %v1349, %v1348
      %v1363 = vpack.c.b16 %v1351, %v1350
      %v1364 = vpack.c.b16 %v1353, %v1352
      %v1365 = vpack.c.b16 %v1355, %v1354
      %v1366 = vpack.c.b16 %v1357, %v1356
      %vm1376 = vcmask 130048
      %v1378 = vsel %vm1376, %v1308, 0
      %v1381 = vsel %vm1376, %v1310, 0
      %v1384 = vsel %vm1376, %v1312, 0
      %v1387 = vsel %vm1376, %v1314, 0
      %v1390 = vsel %vm1376, %v1316, 0
      %1392 = vmatpush.bf16.msra.mxu0 %v1365
      %1393 = vmatpush.bf16.msra.mxu0 %v1364
      %1394 = vmatpush.bf16.msra.mxu0 %v1363
      %1395 = vmatpush.bf16.msra.mxu0 %v1362
      %1396 = vmatpush.bf16.msra.mxu0 %v1361
      %1397 = vmatpush.bf16.msra.mxu0 %v1360
      %1398 = vmatpush.bf16.msra.mxu0 %v1359
      %1399 = vmatpush.bf16.msra.mxu0 %v1358
      %1400 = vmatmul.bf16.gmra.mxu0 %v1307
      %v1401 = vpop.f32.mrf.mxu0
      %v1402 = vadd.f32 0.0, %v1401
      %v1403 = vpop.f32.mrf.mxu0
      %v1404 = vadd.f32 0.0, %v1403
      %1405 = vmatmul.bf16.gmra.mxu0 %v1309
      %v1406 = vpop.f32.mrf.mxu0
      %v1407 = vadd.f32 0.0, %v1406
      %v1408 = vpop.f32.mrf.mxu0
      %v1409 = vadd.f32 0.0, %v1408
      %1410 = vmatmul.bf16.gmra.mxu0 %v1311
      %v1411 = vpop.f32.mrf.mxu0
      %v1412 = vadd.f32 0.0, %v1411
      %v1413 = vpop.f32.mrf.mxu0
      %v1414 = vadd.f32 0.0, %v1413
      %1415 = vmatmul.bf16.gmra.mxu0 %v1313
      %v1416 = vpop.f32.mrf.mxu0
      %v1417 = vadd.f32 0.0, %v1416
      %v1418 = vpop.f32.mrf.mxu0
      %v1419 = vadd.f32 0.0, %v1418
      %1420 = vmatmul.bf16.gmra.mxu0 %v1315
      %v1421 = vpop.f32.mrf.mxu0
      %v1422 = vadd.f32 0.0, %v1421
      %v1423 = vpop.f32.mrf.mxu0
      %v1424 = vadd.f32 0.0, %v1423
      %1425 = vdwg.mxu0
      %1426 = vmatpush.bf16.msra.mxu0 0
      %1427 = vmatpush.bf16.msra.mxu0 0
      %1428 = vmatpush.bf16.msra.mxu0 0
      %1429 = vmatpush.bf16.msra.mxu0 0
      %1430 = vmatpush.bf16.msra.mxu0 0
      %1431 = vmatpush.bf16.msra.mxu0 0
      %1432 = vmatpush.bf16.msra.mxu0 0
      %1433 = vmatpush.bf16.msra.mxu0 %v1366
      %1434 = vmatmul.bf16.gmra.mxu0 %v1378
      %v1435 = vpop.f32.mrf.mxu0
      %v1436 = vadd.f32 %v1402, %v1435
      %v1437 = vpop.f32.mrf.mxu0
      %v1438 = vadd.f32 %v1404, %v1437
      %1439 = vmatmul.bf16.gmra.mxu0 %v1381
      %v1440 = vpop.f32.mrf.mxu0
      %v1441 = vadd.f32 %v1407, %v1440
      %v1442 = vpop.f32.mrf.mxu0
      %v1443 = vadd.f32 %v1409, %v1442
      %1444 = vmatmul.bf16.gmra.mxu0 %v1384
      %v1445 = vpop.f32.mrf.mxu0
      %v1446 = vadd.f32 %v1412, %v1445
      %v1447 = vpop.f32.mrf.mxu0
      %v1448 = vadd.f32 %v1414, %v1447
      %1449 = vmatmul.bf16.gmra.mxu0 %v1387
      %v1450 = vpop.f32.mrf.mxu0
      %v1451 = vadd.f32 %v1417, %v1450
      %v1452 = vpop.f32.mrf.mxu0
      %v1453 = vadd.f32 %v1419, %v1452
      %1454 = vmatmul.bf16.gmra.mxu0 %v1390
      %v1455 = vpop.f32.mrf.mxu0
      %v1456 = vadd.f32 %v1422, %v1455
      %v1457 = vpop.f32.mrf.mxu0
      %v1458 = vadd.f32 %v1424, %v1457
      %1459 = vdwg.mxu0
      %v1460 = vld [vmem:[%s2] sm:$0x1]
      %v1462 = vperm.slane %v1460, 0
      %v1464 = vmul.f32 %v1436, %v1462
      %v1465 = vmul.f32 %v1438, %v1462
      %v1466 = vmul.f32 %v1441, %v1462
      %v1467 = vmul.f32 %v1443, %v1462
      %v1468 = vmul.f32 %v1446, %v1462
      %v1469 = vmul.f32 %v1448, %v1462
      %v1470 = vmul.f32 %v1451, %v1462
      %v1471 = vmul.f32 %v1453, %v1462
      %v1472 = vmul.f32 %v1456, %v1462
      %v1473 = vmul.f32 %v1458, %v1462
      %v1474 = vld [vmem:[%s3] sm:$0x1]
      %v1476 = vperm.slane %v1474, 0
      %v1478 = vadd.f32 %v1464, %v1476
      %v1479 = vadd.f32 %v1465, %v1476
      %v1480 = vadd.f32 %v1466, %v1476
      %v1481 = vadd.f32 %v1467, %v1476
      %v1482 = vadd.f32 %v1468, %v1476
      %v1483 = vadd.f32 %v1469, %v1476
      %v1484 = vadd.f32 %v1470, %v1476
      %v1485 = vadd.f32 %v1471, %v1476
      %v1486 = vadd.f32 %v1472, %v1476
      %v1487 = vadd.f32 %v1473, %v1476
      %v1488 = vld [vmem:[%s272] sm:$0xf]
      %v1489 = vld [vmem:[%s272 + $0x4] sm:$0xf]
      %v1490 = vld [vmem:[%s272 + $0x8] sm:$0xf]
      %v1491 = vld [vmem:[%s272 + $0xc] sm:$0xf]
      %v1492 = vld [vmem:[%s272 + $0x10] sm:$0xf]
      %v1493 = vld [vmem:[%s272 + $0x14] sm:$0xf]
      %v1494 = vld [vmem:[%s272 + $0x18] sm:$0xf]
      %v1495 = vld [vmem:[%s272 + $0x1c] sm:$0xf]
      %v1496 = vld [vmem:[%s272 + $0x20] sm:$0xf]
      %v1497 = vld [vmem:[%s272 + $0x24] sm:$0xf]
      %v1498 = vunpack.c.l.bf16 %v1488
      %v1499 = vunpack.c.l.bf16 %v1489
      %v1500 = vunpack.c.l.bf16 %v1490
      %v1501 = vunpack.c.l.bf16 %v1491
      %v1502 = vunpack.c.l.bf16 %v1492
      %v1503 = vunpack.c.l.bf16 %v1493
      %v1504 = vunpack.c.l.bf16 %v1494
      %v1505 = vunpack.c.l.bf16 %v1495
      %v1506 = vunpack.c.l.bf16 %v1496
      %v1507 = vunpack.c.l.bf16 %v1497
      %v1508 = vadd.f32 %v1478, %v1498
      %v1509 = vadd.f32 %v1479, %v1499
      %v1510 = vadd.f32 %v1480, %v1500
      %v1511 = vadd.f32 %v1481, %v1501
      %v1512 = vadd.f32 %v1482, %v1502
      %v1513 = vadd.f32 %v1483, %v1503
      %v1514 = vadd.f32 %v1484, %v1504
      %v1515 = vadd.f32 %v1485, %v1505
      %v1516 = vadd.f32 %v1486, %v1506
      %v1517 = vadd.f32 %v1487, %v1507
      %v1518 = vmax.f32 %v1508, 0.0
      %v1519 = vmax.f32 %v1509, 0.0
      %v1520 = vmax.f32 %v1510, 0.0
      %v1521 = vmax.f32 %v1511, 0.0
      %v1522 = vmax.f32 %v1512, 0.0
      %v1523 = vmax.f32 %v1513, 0.0
      %v1524 = vmax.f32 %v1514, 0.0
      %v1525 = vmax.f32 %v1515, 0.0
      %v1526 = vmax.f32 %v1516, 0.0
      %v1527 = vmax.f32 %v1517, 0.0
      %1528 = vst.msk [vmem:[%s282] sm:$0xff] %vm1376, %v1518
      %1529 = vst.msk [vmem:[%s282 + $0x8] sm:$0xff] %vm1376, %v1519
      %1530 = vst.msk [vmem:[%s282 + $0x10] sm:$0xff] %vm1376, %v1520
      %1531 = vst.msk [vmem:[%s282 + $0x18] sm:$0xff] %vm1376, %v1521
      %1532 = vst.msk [vmem:[%s282 + $0x20] sm:$0xff] %vm1376, %v1522
      %1533 = vst.msk [vmem:[%s282 + $0x28] sm:$0xff] %vm1376, %v1523
      %1534 = vst.msk [vmem:[%s282 + $0x30] sm:$0xff] %vm1376, %v1524
      %1535 = vst.msk [vmem:[%s282 + $0x38] sm:$0xff] %vm1376, %v1525
      %1536 = vst.msk [vmem:[%s282 + $0x40] sm:$0xff] %vm1376, %v1526
      %1537 = vst.msk [vmem:[%s282 + $0x48] sm:$0xff] %vm1376, %v1527
      %s1538 = smul.u32 10, %s21
      %p1539 = scmp.lt.s32.totalorder %s20, 1
      %s1540 = scalar_select %p1539, %s20, 1
      %p1541 = scmp.lt.s32.totalorder %s1538, 9
      %s1542 = scalar_select %p1541, %s1538, 9
      %s1543 = smul.addr %s1540, 10
      %s1544 = sadd.s32 %s1542, %s1543
      %s1545 = smul.addr %s1544, 8
      %s1546 = scalar_lea.vmem %s5, %s1545
      // Predicated region
      $region41: #{basic_block_forward.5} parent=39 // pred_check
        %p1547 = pneg %p165
      $region42: #{basic_block_forward.5} parent=39 // pred_check_branch
        %1549 = sbr.rel (%p1547) target = $region44
      $region43: #{basic_block_forward.5} parent=39 // pred_region
        %s1550 = smul.u32 10, %s21
      $region44: #{basic_block_forward.5} parent=39 // pred_fallthru
        _
    $region40: #{basic_block_forward.5} parent=5 // pred_fallthru
      _
    %p1551 = scmp.le.s32.totalorder 2, %s11
    // Predicated region
    $region45: #{basic_block_forward.5} parent=5 // pred_check
      %p1552 = pneg %p1551
    $region46: #{basic_block_forward.5} parent=5 // pred_check_branch
      %1554 = sbr.rel (%p1552) target = $region48
    $region47: #{basic_block_forward.5} parent=5 // pred_region
      %s1555 = ssub.s32 %s11, 2
      // Predicated region
      $region49: #{basic_block_forward.5} parent=47 // pred_check
        %p1556 = pneg %p171
      $region50: #{basic_block_forward.5} parent=47 // pred_check_branch
        %1558 = sbr.rel (%p1556) target = $region52
      $region51: #{basic_block_forward.5} parent=47 // pred_region
        %s1559 = smul.u32 10, %s23
        %p1560 = scmp.lt.s32.totalorder %s22, 1
        %s1561 = scalar_select %p1560, %s22, 1
        %p1562 = scmp.lt.s32.totalorder %s1559, 9
        %s1563 = scalar_select %p1562, %s1559, 9
        %s1564 = smul.addr %s1561, 10
        %s1565 = sadd.s32 %s1563, %s1564
        %s1566 = smul.addr %s1565, 8
        %s1567 = scalar_lea.vmem %s5, %s1566
      $region52: #{basic_block_forward.5} parent=47 // pred_fallthru
        _
    $region48: #{basic_block_forward.5} parent=5 // pred_fallthru
      _
  $region6: #{basic_block_forward.5} parent=0 // loop_footer
    %s15 = sadd.s32 1, %s11
  $region7: #{basic_block_forward.5} parent=0 // loop_footer_branch
    %10 = sbr.rel target = $region3
  $region8: #{basic_block_forward.5} parent=0 // loop_exit
    _

</llo_original>
